<compile_context>
chip_gen: v7x
topology: tpu7x:2x2x1
jax: 0.10.0
libtpu: 0.0.40
codegen_flags: <defaults>
</compile_context>

<pallas_src>
import numpy as np
import jax
import jax.numpy as jnp
from jax import lax
from jax.experimental import pallas as pl
from jax.experimental.pallas import tpu as pltpu

BP = 8          # padded batch (sublane multiple)


def _softplus(x):
    # numerically stable softplus (matches torch.nn.Softplus)
    return jnp.maximum(x, 0.0) + jnp.log1p(jnp.exp(-jnp.abs(x)))


# ----------------------------------------------------------------------------
# Fused Pallas kernel: conv1+pool -> conv2+pool -> d1 -> d2 -> d3
# ----------------------------------------------------------------------------
def bbp_lenet_kernel(lhs1_ref, t1_ref, t2_ref, vec_ref,
                     w3mu_ref, w3rho_ref, e3w_ref,
                     w1mu_hbm, w1rho_hbm, e1w_hbm,
                     w2mu_hbm, w2rho_hbm, e2w_hbm,
                     o_ref,
                     w1mu_v, w1rho_v, e1w_v, w2mu_v, w2rho_v, e2w_v,
                     dma_sem):
    f32 = jnp.float32
    Bp = o_ref.shape[0]                       # 8 (padded batch)

    # ---- kick off HBM->VMEM prefetch of the d1 / d2 weight triplets ---------
    # (overlaps ~1 MB of dense-weight DMA with the conv compute below)
    copies = []
    for i, (src, dst) in enumerate([(w1mu_hbm, w1mu_v), (w1rho_hbm, w1rho_v),
                                    (e1w_hbm, e1w_v),   (w2mu_hbm, w2mu_v),
                                    (w2rho_hbm, w2rho_v), (e2w_hbm, e2w_v)]):
        cp = pltpu.make_async_copy(src, dst, dma_sem.at[i])
        cp.start()
        copies.append(cp)

    # ---- conv1 + relu + 2x2 maxpool : ONE matmul + two aligned maxes --------
    # lhs1: [28*Bp, 160], rows=(hpar, hopar, ho_half, b), lanes=(kh, w_src).
    # t1:   [160, 256],   cols=(wpar half of 128; lanes 0..83 = (wo, ci), rest 0).
    y1 = jnp.dot(lhs1_ref[...], t1_ref[...], preferred_element_type=f32)
    y1 = jnp.maximum(y1 + vec_ref[0:1, :], 0.0)            # [28Bp, 256]
    y1 = jnp.maximum(y1[:, :128], y1[:, 128:])             # pool over w parity
    c1 = jnp.maximum(y1[:14 * Bp], y1[14 * Bp:])           # pool over h parity
    # c1: [14*Bp, 128]; rows=(ho%2, ho//2, b); lanes 0..83 = (wo*6+ci), 84.. = 0.

    # ---- conv2 + relu + 2x2 maxpool : ONE matmul, 128-aligned lane concats --
    row_blocks = []
    for hp2 in range(2):                      # pooling parity along H of conv2
        lane_blocks = []
        for kh in range(5):
            tt = hp2 + kh
            p2, q2 = tt % 2, tt // 2
            s = p2 * 7 * Bp + q2 * Bp         # 8-aligned row start
            lane_blocks.append(c1[s:s + 5 * Bp, :])        # [5Bp, 128]
        row_blocks.append(jnp.concatenate(lane_blocks, axis=1))   # [5Bp, 640]
    lhs2 = jnp.concatenate(row_blocks, axis=0)             # [10Bp, 640]
    y2 = jnp.dot(lhs2, t2_ref[...], preferred_element_type=f32)
    y2 = jnp.maximum(y2 + vec_ref[1:2, :], 0.0)            # [10Bp, 256]
    y2 = jnp.maximum(y2[:, :128], y2[:, 128:])             # pool over w parity
    c2 = jnp.maximum(y2[:5 * Bp], y2[5 * Bp:])             # pool over h parity
    # c2: [5*Bp, 128]; rows=(m, b); lanes 0..79 = (n*16+co), 80.. = 0.

    # dense input [Bp, 640], lane = m*128 + n*16 + co (pad lanes are exact 0);
    # the NCHW flatten-order permutation is folded into the d1 weight rows.
    d_in = jnp.concatenate([c2[m * Bp:(m + 1) * Bp, :] for m in range(5)],
                           axis=1)

    # ---- three Bayes-by-Backprop dense layers --------------------------------
    def bbp(x, wmu, wrho, ew, bmu, brho, eb, relu):
        w = wmu + _softplus(wrho) * ew
        b = bmu + _softplus(brho) * eb
        y = jnp.dot(x, w, preferred_element_type=f32) + b
        return jnp.maximum(y, 0.0) if relu else y

    copies[0].wait(); copies[1].wait(); copies[2].wait()   # d1 weights landed
    h = bbp(d_in, w1mu_v[...], w1rho_v[...], e1w_v[...],
            vec_ref[2:3, :120], vec_ref[3:4, :120], vec_ref[4:5, :120], True)

    copies[3].wait(); copies[4].wait(); copies[5].wait()   # d2 weights landed
    h = bbp(h, w2mu_v[...], w2rho_v[...], e2w_v[...],
            vec_ref[5:6, :84], vec_ref[6:7, :84], vec_ref[7:8, :84], True)

    o_ref[...] = bbp(h, w3mu_ref[...], w3rho_ref[...], e3w_ref[...],
                     vec_ref[8:9, :128], vec_ref[9:10, :128],
                     vec_ref[10:11, :128], False)          # [Bp, 128] lane-dense


# ----------------------------------------------------------------------------
# Wrapper glue: Toeplitz conv matrices (lane-padded halves), packed bias rows,
# padded/permuted d1 rows, conv1 im2col LHS, batch padding.
# ----------------------------------------------------------------------------
def _conv1_toeplitz(w1):
    """w1 [6,1,5,5] -> T1 [160,256]; rows=(kh,w_src), cols=(wpar*128 + wo*6+co)."""
    w1_t = jnp.transpose(w1[:, 0], (1, 2, 0))                    # [kh, kw, co]
    KH, WS, WP, WO = np.meshgrid(np.arange(5), np.arange(32),
                                 np.arange(2), np.arange(14), indexing="ij")
    KW = WS - 2 * WO - WP
    valid = ((KW >= 0) & (KW < 5)).astype(np.float32)
    T = w1_t[KH, np.clip(KW, 0, 4), :] * valid[..., None]        # [5,32,2,14,6]
    T = T.reshape(5 * 32, 2, 14 * 6)                             # [160, 2, 84]
    T = jnp.pad(T, ((0, 0), (0, 0), (0, 128 - 84)))              # [160, 2, 128]
    return T.reshape(160, 256)


def _conv2_toeplitz(w2):
    """w2 [16,6,5,5] -> T2 [640,256]; rows=(kh*128 + wo*6+ci, pad rows zero),
    cols=(wp2*128 + n*16+co, pad cols zero)."""
    w2_t = jnp.transpose(w2, (2, 3, 1, 0))                       # [kh, kw, ci, co]
    KH, WO, CI, WP, N = np.meshgrid(np.arange(5), np.arange(14), np.arange(6),
                                    np.arange(2), np.arange(5), indexing="ij")
    KW = WO - 2 * N - WP
    valid = ((KW >= 0) & (KW < 5)).astype(np.float32)
    T = w2_t[KH, np.clip(KW, 0, 4), CI, :] * valid[..., None]    # [5,14,6,2,5,16]
    T = T.reshape(5, 14 * 6, 2, 5 * 16)                          # [5, 84, 2, 80]
    T = jnp.pad(T, ((0, 0), (0, 128 - 84), (0, 0), (0, 128 - 80)))
    return T.reshape(5 * 128, 2 * 128)                           # [640, 256]


# d_in lane = m*128 + n*16 + co  <->  PyTorch flatten row = co*25 + m*5 + n
_IDX = np.zeros(640, np.int32)
_MSK = np.zeros((640, 1), np.float32)
for _m in range(5):
    for _n in range(5):
        for _co in range(16):
            _IDX[_m * 128 + _n * 16 + _co] = _co * 25 + _m * 5 + _n
            _MSK[_m * 128 + _n * 16 + _co] = 1.0


def _conv1_lhs(x2):
    """x2 [Bp,32,32] -> lhs1 [28*Bp,160]; rows=(hpar,hopar,l,b), lanes=(kh,w)."""
    Bp = x2.shape[0]
    row_blocks = []
    for hpar in range(2):
        for hopar in range(2):
            taps = []
            for kh in range(5):
                base = 2 * hopar + hpar + kh
                taps.append(x2[:, base:base + 25:4, :])          # [Bp, 7, 32]
            blk = jnp.concatenate(taps, axis=-1)                 # [Bp, 7, 160]
            row_blocks.append(blk.transpose(1, 0, 2).reshape(7 * Bp, 160))
    return jnp.concatenate(row_blocks, axis=0)                   # [28*Bp, 160]


def _pad_to(v, n):
    return jnp.pad(v, (0, n - v.shape[0]))


def bbp_mnist_forward(x, params, eps):
    B = x.shape[0]
    assert B <= BP
    xp = jnp.pad(x, ((0, BP - B), (0, 0), (0, 0), (0, 0))) if B < BP else x
    lhs1 = _conv1_lhs(xp[:, 0])                                  # [224, 160]

    t1 = _conv1_toeplitz(params["conv1_w"])                      # [160, 256]
    t2 = _conv2_toeplitz(params["conv2_w"])                      # [640, 256]

    w1mu, w1rho, b1mu, b1rho = params["d1"]
    w2mu, w2rho, b2mu, b2rho = params["d2"]
    w3mu, w3rho, b3mu, b3rho = params["d3"]

    # d1: fold flatten-order permutation + 400->640 zero-row padding
    w1mu_p = w1mu[_IDX] * _MSK
    w1rho_p = w1rho[_IDX]                   # pad rows killed by masked mu/eps
    e1w_p = eps["d1_w"][_IDX] * _MSK
    # d3: pad output columns 10 -> 128 (lane-dense store)
    w3mu_p = jnp.pad(w3mu, ((0, 0), (0, 118)))
    w3rho_p = jnp.pad(w3rho, ((0, 0), (0, 118)))
    e3w_p = jnp.pad(eps["d3_w"], ((0, 0), (0, 118)))

    # packed bias / eps row vectors: one [16, 256] array, zero-padded lanes
    cb1h = _pad_to(jnp.tile(params["conv1_b"], 14), 128)
    cb2h = _pad_to(jnp.tile(params["conv2_b"], 5), 128)
    rows = [jnp.concatenate([cb1h, cb1h]),                       # 0: cb1
            jnp.concatenate([cb2h, cb2h]),                       # 1: cb2
            _pad_to(b1mu, 256), _pad_to(b1rho, 256), _pad_to(eps["d1_b"], 256),
            _pad_to(b2mu, 256), _pad_to(b2rho, 256), _pad_to(eps["d2_b"], 256),
            _pad_to(b3mu, 256), _pad_to(b3rho, 256), _pad_to(eps["d3_b"], 256)]
    vec = jnp.pad(jnp.stack(rows, axis=0), ((0, 5), (0, 0)))     # [16, 256]

    vmem = pl.BlockSpec(memory_space=pltpu.MemorySpace.VMEM)
    anymem = pl.BlockSpec(memory_space=pl.ANY)
    f32 = jnp.float32

    out = pl.pallas_call(
        bbp_lenet_kernel,
        out_shape=jax.ShapeDtypeStruct((BP, 128), f32),
        in_specs=[vmem] * 7 + [anymem] * 6,
        out_specs=vmem,
        scratch_shapes=[
            pltpu.VMEM((640, 120), f32), pltpu.VMEM((640, 120), f32),
            pltpu.VMEM((640, 120), f32),
            pltpu.VMEM((120, 84), f32), pltpu.VMEM((120, 84), f32),
            pltpu.VMEM((120, 84), f32),
            pltpu.SemaphoreType.DMA((6,)),
        ],
    )(lhs1, t1, t2, vec, w3mu_p, w3rho_p, e3w_p,
      w1mu_p, w1rho_p, e1w_p, w2mu, w2rho, eps["d2_w"])

    return out[:B, :10]


# ----------------------------------------------------------------------------
# Pure-JAX reference (for correctness check)
# ----------------------------------------------------------------------------
def reference_forward(x, params, eps):
    hp = lax.Precision.HIGHEST

    def conv(h, w, b):
        y = lax.conv_general_dilated(h, w, (1, 1), "VALID",
                                     dimension_numbers=("NCHW", "OIHW", "NCHW"),
                                     precision=hp)
        return y + b[None, :, None, None]

    def relu(v):
        return jnp.maximum(v, 0.0)

    def pool(v):
        return lax.reduce_window(v, -jnp.inf, lax.max,
                                 (1, 1, 2, 2), (1, 1, 2, 2), "VALID")

    def dense(h, p, ew, eb):
        wmu, wrho, bmu, brho = p
        w = wmu + _softplus(wrho) * ew
        b = bmu + _softplus(brho) * eb
        return jnp.dot(h, w, precision=hp) + b

    h = pool(relu(conv(x, params["conv1_w"], params["conv1_b"])))
    h = pool(relu(conv(h, params["conv2_w"], params["conv2_b"])))
    h = h.reshape(h.shape[0], -1)
    h = relu(dense(h, params["d1"], eps["d1_w"], eps["d1_b"]))
    h = relu(dense(h, params["d2"], eps["d2_w"], eps["d2_b"]))
    return dense(h, params["d3"], eps["d3_w"], eps["d3_b"])


# ----------------------------------------------------------------------------
# Deterministic parameter / input construction and driver
# ----------------------------------------------------------------------------
def make_params_and_eps(key):
    ks = jax.random.split(key, 16)
    f32 = jnp.float32

    def dense_params(kw, kb, n_in, n_out, init_var=-1.7):
        return (0.1 * jax.random.normal(kw, (n_in, n_out), f32),
                jnp.full((n_in, n_out), init_var, f32),
                0.1 * jax.random.normal(kb, (n_out,), f32),
                jnp.full((n_out,), init_var, f32))

    params = {
        "conv1_w": 0.1 * jax.random.normal(ks[0], (6, 1, 5, 5), f32),
        "conv1_b": 0.1 * jax.random.normal(ks[1], (6,), f32),
        "conv2_w": 0.1 * jax.random.normal(ks[2], (16, 6, 5, 5), f32),
        "conv2_b": 0.1 * jax.random.normal(ks[3], (16,), f32),
        "d1": dense_params(ks[4], ks[5], 400, 120),
        "d2": dense_params(ks[6], ks[7], 120, 84),
        "d3": dense_params(ks[8], ks[9], 84, 10),
    }
    # epsilon ~ N(0, 1) (PyTorch get_random(1)); sampled once, deterministically.
    eps = {
        "d1_w": jax.random.normal(ks[10], (400, 120), f32),
        "d1_b": jax.random.normal(ks[11], (120,), f32),
        "d2_w": jax.random.normal(ks[12], (120, 84), f32),
        "d2_b": jax.random.normal(ks[13], (84,), f32),
        "d3_w": jax.random.normal(ks[14], (84, 10), f32),
        "d3_b": jax.random.normal(ks[15], (10,), f32),
    }
    return params, eps


if __name__ == "__main__":
    key = jax.random.PRNGKey(0)
    k_in, k_params = jax.random.split(key)
    params, eps = make_params_and_eps(k_params)

    # Input: batch=2, 1 channel, 32x32 (so conv2 output flattens to 400).
    x = jax.random.normal(k_in, (2, 1, 32, 32), jnp.float32)

    out = jax.jit(bbp_mnist_forward)(x, params, eps)
    out = jax.block_until_ready(out)

    ref = jax.jit(reference_forward)(x, params, eps)
    ref = jax.block_until_ready(ref)

    assert out.shape == (2, 10), out.shape
    np.testing.assert_allclose(np.asarray(out), np.asarray(ref),
                               rtol=1e-3, atol=1e-3)
    print("KERNEL_OK")
</pallas_src>

<mosaic_0001>
module attributes {stable_mosaic.version = 11 : i64} {
  func.func @bbp_lenet_kernel(%arg0: memref<224x160xf32, #tpu.memory_space<vmem>>, %arg1: memref<160x256xf32, #tpu.memory_space<vmem>>, %arg2: memref<640x256xf32, #tpu.memory_space<vmem>>, %arg3: memref<16x256xf32, #tpu.memory_space<vmem>>, %arg4: memref<84x128xf32, #tpu.memory_space<vmem>>, %arg5: memref<84x128xf32, #tpu.memory_space<vmem>>, %arg6: memref<84x128xf32, #tpu.memory_space<vmem>>, %arg7: memref<640x120xf32, #tpu.memory_space<any>>, %arg8: memref<640x120xf32, #tpu.memory_space<any>>, %arg9: memref<640x120xf32, #tpu.memory_space<any>>, %arg10: memref<120x84xf32, #tpu.memory_space<any>>, %arg11: memref<120x84xf32, #tpu.memory_space<any>>, %arg12: memref<120x84xf32, #tpu.memory_space<any>>, %arg13: memref<8x128xf32, #tpu.memory_space<vmem>>, %arg14: memref<640x120xf32, #tpu.memory_space<vmem>>, %arg15: memref<640x120xf32, #tpu.memory_space<vmem>>, %arg16: memref<640x120xf32, #tpu.memory_space<vmem>>, %arg17: memref<120x84xf32, #tpu.memory_space<vmem>>, %arg18: memref<120x84xf32, #tpu.memory_space<vmem>>, %arg19: memref<120x84xf32, #tpu.memory_space<vmem>>, %arg20: memref<6x!tpu.dma_semaphore, #tpu.memory_space<semaphore_mem>>) attributes {dimension_semantics = [], scalar_prefetch = 0 : i64, scratch_operands = 7 : i64, tpu.core_type = #tpu.core_type<tc>} {
    %c0_i32 = arith.constant 0 : i32
    %0 = tpu.memref_slice %arg20[%c0_i32] : memref<6x!tpu.dma_semaphore, #tpu.memory_space<semaphore_mem>> -> memref<1x!tpu.dma_semaphore, #tpu.memory_space<semaphore_mem>>
    %1 = tpu.memref_squeeze %0 : memref<1x!tpu.dma_semaphore, #tpu.memory_space<semaphore_mem>> -> memref<!tpu.dma_semaphore, #tpu.memory_space<semaphore_mem>>
    tpu.enqueue_dma source(%arg7 : memref<640x120xf32, #tpu.memory_space<any>>) target(%arg14 : memref<640x120xf32, #tpu.memory_space<vmem>>) target_semaphore(%1 : memref<!tpu.dma_semaphore, #tpu.memory_space<semaphore_mem>>)
    %c1_i32 = arith.constant 1 : i32
    %2 = tpu.memref_slice %arg20[%c1_i32] : memref<6x!tpu.dma_semaphore, #tpu.memory_space<semaphore_mem>> -> memref<1x!tpu.dma_semaphore, #tpu.memory_space<semaphore_mem>>
    %3 = tpu.memref_squeeze %2 : memref<1x!tpu.dma_semaphore, #tpu.memory_space<semaphore_mem>> -> memref<!tpu.dma_semaphore, #tpu.memory_space<semaphore_mem>>
    tpu.enqueue_dma source(%arg8 : memref<640x120xf32, #tpu.memory_space<any>>) target(%arg15 : memref<640x120xf32, #tpu.memory_space<vmem>>) target_semaphore(%3 : memref<!tpu.dma_semaphore, #tpu.memory_space<semaphore_mem>>)
    %c2_i32 = arith.constant 2 : i32
    %4 = tpu.memref_slice %arg20[%c2_i32] : memref<6x!tpu.dma_semaphore, #tpu.memory_space<semaphore_mem>> -> memref<1x!tpu.dma_semaphore, #tpu.memory_space<semaphore_mem>>
    %5 = tpu.memref_squeeze %4 : memref<1x!tpu.dma_semaphore, #tpu.memory_space<semaphore_mem>> -> memref<!tpu.dma_semaphore, #tpu.memory_space<semaphore_mem>>
    tpu.enqueue_dma source(%arg9 : memref<640x120xf32, #tpu.memory_space<any>>) target(%arg16 : memref<640x120xf32, #tpu.memory_space<vmem>>) target_semaphore(%5 : memref<!tpu.dma_semaphore, #tpu.memory_space<semaphore_mem>>)
    %c3_i32 = arith.constant 3 : i32
    %6 = tpu.memref_slice %arg20[%c3_i32] : memref<6x!tpu.dma_semaphore, #tpu.memory_space<semaphore_mem>> -> memref<1x!tpu.dma_semaphore, #tpu.memory_space<semaphore_mem>>
    %7 = tpu.memref_squeeze %6 : memref<1x!tpu.dma_semaphore, #tpu.memory_space<semaphore_mem>> -> memref<!tpu.dma_semaphore, #tpu.memory_space<semaphore_mem>>
    tpu.enqueue_dma source(%arg10 : memref<120x84xf32, #tpu.memory_space<any>>) target(%arg17 : memref<120x84xf32, #tpu.memory_space<vmem>>) target_semaphore(%7 : memref<!tpu.dma_semaphore, #tpu.memory_space<semaphore_mem>>)
    %c4_i32 = arith.constant 4 : i32
    %8 = tpu.memref_slice %arg20[%c4_i32] : memref<6x!tpu.dma_semaphore, #tpu.memory_space<semaphore_mem>> -> memref<1x!tpu.dma_semaphore, #tpu.memory_space<semaphore_mem>>
    %9 = tpu.memref_squeeze %8 : memref<1x!tpu.dma_semaphore, #tpu.memory_space<semaphore_mem>> -> memref<!tpu.dma_semaphore, #tpu.memory_space<semaphore_mem>>
    tpu.enqueue_dma source(%arg11 : memref<120x84xf32, #tpu.memory_space<any>>) target(%arg18 : memref<120x84xf32, #tpu.memory_space<vmem>>) target_semaphore(%9 : memref<!tpu.dma_semaphore, #tpu.memory_space<semaphore_mem>>)
    %c5_i32 = arith.constant 5 : i32
    %10 = tpu.memref_slice %arg20[%c5_i32] : memref<6x!tpu.dma_semaphore, #tpu.memory_space<semaphore_mem>> -> memref<1x!tpu.dma_semaphore, #tpu.memory_space<semaphore_mem>>
    %11 = tpu.memref_squeeze %10 : memref<1x!tpu.dma_semaphore, #tpu.memory_space<semaphore_mem>> -> memref<!tpu.dma_semaphore, #tpu.memory_space<semaphore_mem>>
    tpu.enqueue_dma source(%arg12 : memref<120x84xf32, #tpu.memory_space<any>>) target(%arg19 : memref<120x84xf32, #tpu.memory_space<vmem>>) target_semaphore(%11 : memref<!tpu.dma_semaphore, #tpu.memory_space<semaphore_mem>>)
    %c0 = arith.constant 0 : index
    %c0_0 = arith.constant 0 : index
    %12 = vector.load %arg0[%c0, %c0_0] : memref<224x160xf32, #tpu.memory_space<vmem>>, vector<224x160xf32>
    %c0_1 = arith.constant 0 : index
    %c0_2 = arith.constant 0 : index
    %13 = vector.load %arg1[%c0_1, %c0_2] : memref<160x256xf32, #tpu.memory_space<vmem>>, vector<160x256xf32>
    %cst = arith.constant dense<0.000000e+00> : vector<224x256xf32>
    %14 = tpu.matmul %12, %13, %cst {dimension_numbers = #tpu.dot_dimension_numbers<[1], [0], [0], [1], [0, 0, 1, 1], [], []>} : vector<224x160xf32>, vector<160x256xf32>, vector<224x256xf32> -> vector<224x256xf32>
    %c0_3 = arith.constant 0 : index
    %c0_4 = arith.constant 0 : index
    %15 = vector.load %arg3[%c0_3, %c0_4] : memref<16x256xf32, #tpu.memory_space<vmem>>, vector<1x256xf32>
    %16 = vector.broadcast %15 : vector<1x256xf32> to vector<224x256xf32>
    %17 = arith.addf %14, %16 : vector<224x256xf32>
    %cst_5 = arith.constant 0.000000e+00 : f32
    %18 = vector.broadcast %cst_5 : f32 to vector<224x256xf32>
    %19 = arith.maximumf %17, %18 : vector<224x256xf32>
    %20 = vector.extract_strided_slice %19 {offsets = [0, 0], sizes = [224, 128], strides = [1, 1]} : vector<224x256xf32> to vector<224x128xf32>
    %21 = vector.extract_strided_slice %19 {offsets = [0, 128], sizes = [224, 128], strides = [1, 1]} : vector<224x256xf32> to vector<224x128xf32>
    %22 = arith.maximumf %20, %21 : vector<224x128xf32>
    %23 = vector.extract_strided_slice %22 {offsets = [0, 0], sizes = [112, 128], strides = [1, 1]} : vector<224x128xf32> to vector<112x128xf32>
    %24 = vector.extract_strided_slice %22 {offsets = [112, 0], sizes = [112, 128], strides = [1, 1]} : vector<224x128xf32> to vector<112x128xf32>
    %25 = arith.maximumf %23, %24 : vector<112x128xf32>
    %26 = vector.extract_strided_slice %25 {offsets = [0, 0], sizes = [40, 128], strides = [1, 1]} : vector<112x128xf32> to vector<40x128xf32>
    %27 = vector.extract_strided_slice %25 {offsets = [56, 0], sizes = [40, 128], strides = [1, 1]} : vector<112x128xf32> to vector<40x128xf32>
    %28 = vector.extract_strided_slice %25 {offsets = [8, 0], sizes = [40, 128], strides = [1, 1]} : vector<112x128xf32> to vector<40x128xf32>
    %29 = vector.extract_strided_slice %25 {offsets = [64, 0], sizes = [40, 128], strides = [1, 1]} : vector<112x128xf32> to vector<40x128xf32>
    %30 = vector.extract_strided_slice %25 {offsets = [16, 0], sizes = [40, 128], strides = [1, 1]} : vector<112x128xf32> to vector<40x128xf32>
    %31 = tpu.concatenate %26, %27, %28, %29, %30 in 1 : vector<40x128xf32>, vector<40x128xf32>, vector<40x128xf32>, vector<40x128xf32>, vector<40x128xf32> -> vector<40x640xf32>
    %32 = vector.extract_strided_slice %25 {offsets = [56, 0], sizes = [40, 128], strides = [1, 1]} : vector<112x128xf32> to vector<40x128xf32>
    %33 = vector.extract_strided_slice %25 {offsets = [8, 0], sizes = [40, 128], strides = [1, 1]} : vector<112x128xf32> to vector<40x128xf32>
    %34 = vector.extract_strided_slice %25 {offsets = [64, 0], sizes = [40, 128], strides = [1, 1]} : vector<112x128xf32> to vector<40x128xf32>
    %35 = vector.extract_strided_slice %25 {offsets = [16, 0], sizes = [40, 128], strides = [1, 1]} : vector<112x128xf32> to vector<40x128xf32>
    %36 = vector.extract_strided_slice %25 {offsets = [72, 0], sizes = [40, 128], strides = [1, 1]} : vector<112x128xf32> to vector<40x128xf32>
    %37 = tpu.concatenate %32, %33, %34, %35, %36 in 1 : vector<40x128xf32>, vector<40x128xf32>, vector<40x128xf32>, vector<40x128xf32>, vector<40x128xf32> -> vector<40x640xf32>
    %38 = tpu.concatenate %31, %37 in 0 : vector<40x640xf32>, vector<40x640xf32> -> vector<80x640xf32>
    %c0_6 = arith.constant 0 : index
    %c0_7 = arith.constant 0 : index
    %39 = vector.load %arg2[%c0_6, %c0_7] : memref<640x256xf32, #tpu.memory_space<vmem>>, vector<640x256xf32>
    %cst_8 = arith.constant dense<0.000000e+00> : vector<80x256xf32>
    %40 = tpu.matmul %38, %39, %cst_8 {dimension_numbers = #tpu.dot_dimension_numbers<[1], [0], [0], [1], [0, 0, 1, 1], [], []>} : vector<80x640xf32>, vector<640x256xf32>, vector<80x256xf32> -> vector<80x256xf32>
    %c1 = arith.constant 1 : index
    %c0_9 = arith.constant 0 : index
    %41 = vector.load %arg3[%c1, %c0_9] : memref<16x256xf32, #tpu.memory_space<vmem>>, vector<1x256xf32>
    %42 = vector.broadcast %41 : vector<1x256xf32> to vector<80x256xf32>
    %43 = arith.addf %40, %42 : vector<80x256xf32>
    %cst_10 = arith.constant 0.000000e+00 : f32
    %44 = vector.broadcast %cst_10 : f32 to vector<80x256xf32>
    %45 = arith.maximumf %43, %44 : vector<80x256xf32>
    %46 = vector.extract_strided_slice %45 {offsets = [0, 0], sizes = [80, 128], strides = [1, 1]} : vector<80x256xf32> to vector<80x128xf32>
    %47 = vector.extract_strided_slice %45 {offsets = [0, 128], sizes = [80, 128], strides = [1, 1]} : vector<80x256xf32> to vector<80x128xf32>
    %48 = arith.maximumf %46, %47 : vector<80x128xf32>
    %49 = vector.extract_strided_slice %48 {offsets = [0, 0], sizes = [40, 128], strides = [1, 1]} : vector<80x128xf32> to vector<40x128xf32>
    %50 = vector.extract_strided_slice %48 {offsets = [40, 0], sizes = [40, 128], strides = [1, 1]} : vector<80x128xf32> to vector<40x128xf32>
    %51 = arith.maximumf %49, %50 : vector<40x128xf32>
    %52 = vector.extract_strided_slice %51 {offsets = [0, 0], sizes = [8, 128], strides = [1, 1]} : vector<40x128xf32> to vector<8x128xf32>
    %53 = vector.extract_strided_slice %51 {offsets = [8, 0], sizes = [8, 128], strides = [1, 1]} : vector<40x128xf32> to vector<8x128xf32>
    %54 = vector.extract_strided_slice %51 {offsets = [16, 0], sizes = [8, 128], strides = [1, 1]} : vector<40x128xf32> to vector<8x128xf32>
    %55 = vector.extract_strided_slice %51 {offsets = [24, 0], sizes = [8, 128], strides = [1, 1]} : vector<40x128xf32> to vector<8x128xf32>
    %56 = vector.extract_strided_slice %51 {offsets = [32, 0], sizes = [8, 128], strides = [1, 1]} : vector<40x128xf32> to vector<8x128xf32>
    %57 = tpu.concatenate %52, %53, %54, %55, %56 in 1 : vector<8x128xf32>, vector<8x128xf32>, vector<8x128xf32>, vector<8x128xf32>, vector<8x128xf32> -> vector<8x640xf32>
    %c0_i32_11 = arith.constant 0 : i32
    %58 = tpu.memref_slice %arg20[%c0_i32_11] : memref<6x!tpu.dma_semaphore, #tpu.memory_space<semaphore_mem>> -> memref<1x!tpu.dma_semaphore, #tpu.memory_space<semaphore_mem>>
    %59 = tpu.memref_squeeze %58 : memref<1x!tpu.dma_semaphore, #tpu.memory_space<semaphore_mem>> -> memref<!tpu.dma_semaphore, #tpu.memory_space<semaphore_mem>>
    tpu.wait_dma2 semaphore(%59 : memref<!tpu.dma_semaphore, #tpu.memory_space<semaphore_mem>>) src(%arg7 : memref<640x120xf32, #tpu.memory_space<any>>) dst(%arg14 : memref<640x120xf32, #tpu.memory_space<vmem>>)
    %c1_i32_12 = arith.constant 1 : i32
    %60 = tpu.memref_slice %arg20[%c1_i32_12] : memref<6x!tpu.dma_semaphore, #tpu.memory_space<semaphore_mem>> -> memref<1x!tpu.dma_semaphore, #tpu.memory_space<semaphore_mem>>
    %61 = tpu.memref_squeeze %60 : memref<1x!tpu.dma_semaphore, #tpu.memory_space<semaphore_mem>> -> memref<!tpu.dma_semaphore, #tpu.memory_space<semaphore_mem>>
    tpu.wait_dma2 semaphore(%61 : memref<!tpu.dma_semaphore, #tpu.memory_space<semaphore_mem>>) src(%arg8 : memref<640x120xf32, #tpu.memory_space<any>>) dst(%arg15 : memref<640x120xf32, #tpu.memory_space<vmem>>)
    %c2_i32_13 = arith.constant 2 : i32
    %62 = tpu.memref_slice %arg20[%c2_i32_13] : memref<6x!tpu.dma_semaphore, #tpu.memory_space<semaphore_mem>> -> memref<1x!tpu.dma_semaphore, #tpu.memory_space<semaphore_mem>>
    %63 = tpu.memref_squeeze %62 : memref<1x!tpu.dma_semaphore, #tpu.memory_space<semaphore_mem>> -> memref<!tpu.dma_semaphore, #tpu.memory_space<semaphore_mem>>
    tpu.wait_dma2 semaphore(%63 : memref<!tpu.dma_semaphore, #tpu.memory_space<semaphore_mem>>) src(%arg9 : memref<640x120xf32, #tpu.memory_space<any>>) dst(%arg16 : memref<640x120xf32, #tpu.memory_space<vmem>>)
    %c0_14 = arith.constant 0 : index
    %c0_15 = arith.constant 0 : index
    %64 = vector.load %arg14[%c0_14, %c0_15] : memref<640x120xf32, #tpu.memory_space<vmem>>, vector<640x120xf32>
    %c0_16 = arith.constant 0 : index
    %c0_17 = arith.constant 0 : index
    %65 = vector.load %arg15[%c0_16, %c0_17] : memref<640x120xf32, #tpu.memory_space<vmem>>, vector<640x120xf32>
    %c0_18 = arith.constant 0 : index
    %c0_19 = arith.constant 0 : index
    %66 = vector.load %arg16[%c0_18, %c0_19] : memref<640x120xf32, #tpu.memory_space<vmem>>, vector<640x120xf32>
    %c2 = arith.constant 2 : index
    %c0_20 = arith.constant 0 : index
    %67 = vector.load %arg3[%c2, %c0_20] : memref<16x256xf32, #tpu.memory_space<vmem>>, vector<1x120xf32>
    %c3 = arith.constant 3 : index
    %c0_21 = arith.constant 0 : index
    %68 = vector.load %arg3[%c3, %c0_21] : memref<16x256xf32, #tpu.memory_space<vmem>>, vector<1x120xf32>
    %c4 = arith.constant 4 : index
    %c0_22 = arith.constant 0 : index
    %69 = vector.load %arg3[%c4, %c0_22] : memref<16x256xf32, #tpu.memory_space<vmem>>, vector<1x120xf32>
    %cst_23 = arith.constant 0.000000e+00 : f32
    %70 = vector.broadcast %cst_23 : f32 to vector<640x120xf32>
    %71 = arith.maximumf %65, %70 : vector<640x120xf32>
    %72 = math.absf %65 : vector<640x120xf32>
    %cst_24 = arith.constant 0.000000e+00 : f32
    %73 = vector.broadcast %cst_24 : f32 to vector<640x120xf32>
    %74 = arith.subf %73, %72 : vector<640x120xf32>
    %75 = math.exp %74 : vector<640x120xf32>
    %76 = math.log1p %75 : vector<640x120xf32>
    %77 = arith.addf %71, %76 : vector<640x120xf32>
    %78 = arith.mulf %77, %66 : vector<640x120xf32>
    %79 = arith.addf %64, %78 : vector<640x120xf32>
    %cst_25 = arith.constant 0.000000e+00 : f32
    %80 = vector.broadcast %cst_25 : f32 to vector<1x120xf32>
    %81 = arith.maximumf %68, %80 : vector<1x120xf32>
    %82 = math.absf %68 : vector<1x120xf32>
    %cst_26 = arith.constant 0.000000e+00 : f32
    %83 = vector.broadcast %cst_26 : f32 to vector<1x120xf32>
    %84 = arith.subf %83, %82 : vector<1x120xf32>
    %85 = math.exp %84 : vector<1x120xf32>
    %86 = math.log1p %85 : vector<1x120xf32>
    %87 = arith.addf %81, %86 : vector<1x120xf32>
    %88 = arith.mulf %87, %69 : vector<1x120xf32>
    %89 = arith.addf %67, %88 : vector<1x120xf32>
    %cst_27 = arith.constant dense<0.000000e+00> : vector<8x120xf32>
    %90 = tpu.matmul %57, %79, %cst_27 {dimension_numbers = #tpu.dot_dimension_numbers<[1], [0], [0], [1], [0, 0, 1, 1], [], []>} : vector<8x640xf32>, vector<640x120xf32>, vector<8x120xf32> -> vector<8x120xf32>
    %91 = vector.broadcast %89 : vector<1x120xf32> to vector<8x120xf32>
    %92 = arith.addf %90, %91 : vector<8x120xf32>
    %cst_28 = arith.constant 0.000000e+00 : f32
    %93 = vector.broadcast %cst_28 : f32 to vector<8x120xf32>
    %94 = arith.maximumf %92, %93 : vector<8x120xf32>
    %c3_i32_29 = arith.constant 3 : i32
    %95 = tpu.memref_slice %arg20[%c3_i32_29] : memref<6x!tpu.dma_semaphore, #tpu.memory_space<semaphore_mem>> -> memref<1x!tpu.dma_semaphore, #tpu.memory_space<semaphore_mem>>
    %96 = tpu.memref_squeeze %95 : memref<1x!tpu.dma_semaphore, #tpu.memory_space<semaphore_mem>> -> memref<!tpu.dma_semaphore, #tpu.memory_space<semaphore_mem>>
    tpu.wait_dma2 semaphore(%96 : memref<!tpu.dma_semaphore, #tpu.memory_space<semaphore_mem>>) src(%arg10 : memref<120x84xf32, #tpu.memory_space<any>>) dst(%arg17 : memref<120x84xf32, #tpu.memory_space<vmem>>)
    %c4_i32_30 = arith.constant 4 : i32
    %97 = tpu.memref_slice %arg20[%c4_i32_30] : memref<6x!tpu.dma_semaphore, #tpu.memory_space<semaphore_mem>> -> memref<1x!tpu.dma_semaphore, #tpu.memory_space<semaphore_mem>>
    %98 = tpu.memref_squeeze %97 : memref<1x!tpu.dma_semaphore, #tpu.memory_space<semaphore_mem>> -> memref<!tpu.dma_semaphore, #tpu.memory_space<semaphore_mem>>
    tpu.wait_dma2 semaphore(%98 : memref<!tpu.dma_semaphore, #tpu.memory_space<semaphore_mem>>) src(%arg11 : memref<120x84xf32, #tpu.memory_space<any>>) dst(%arg18 : memref<120x84xf32, #tpu.memory_space<vmem>>)
    %c5_i32_31 = arith.constant 5 : i32
    %99 = tpu.memref_slice %arg20[%c5_i32_31] : memref<6x!tpu.dma_semaphore, #tpu.memory_space<semaphore_mem>> -> memref<1x!tpu.dma_semaphore, #tpu.memory_space<semaphore_mem>>
    %100 = tpu.memref_squeeze %99 : memref<1x!tpu.dma_semaphore, #tpu.memory_space<semaphore_mem>> -> memref<!tpu.dma_semaphore, #tpu.memory_space<semaphore_mem>>
    tpu.wait_dma2 semaphore(%100 : memref<!tpu.dma_semaphore, #tpu.memory_space<semaphore_mem>>) src(%arg12 : memref<120x84xf32, #tpu.memory_space<any>>) dst(%arg19 : memref<120x84xf32, #tpu.memory_space<vmem>>)
    %c0_32 = arith.constant 0 : index
    %c0_33 = arith.constant 0 : index
    %101 = vector.load %arg17[%c0_32, %c0_33] : memref<120x84xf32, #tpu.memory_space<vmem>>, vector<120x84xf32>
    %c0_34 = arith.constant 0 : index
    %c0_35 = arith.constant 0 : index
    %102 = vector.load %arg18[%c0_34, %c0_35] : memref<120x84xf32, #tpu.memory_space<vmem>>, vector<120x84xf32>
    %c0_36 = arith.constant 0 : index
    %c0_37 = arith.constant 0 : index
    %103 = vector.load %arg19[%c0_36, %c0_37] : memref<120x84xf32, #tpu.memory_space<vmem>>, vector<120x84xf32>
    %c5 = arith.constant 5 : index
    %c0_38 = arith.constant 0 : index
    %104 = vector.load %arg3[%c5, %c0_38] : memref<16x256xf32, #tpu.memory_space<vmem>>, vector<1x84xf32>
    %c6 = arith.constant 6 : index
    %c0_39 = arith.constant 0 : index
    %105 = vector.load %arg3[%c6, %c0_39] : memref<16x256xf32, #tpu.memory_space<vmem>>, vector<1x84xf32>
    %c7 = arith.constant 7 : index
    %c0_40 = arith.constant 0 : index
    %106 = vector.load %arg3[%c7, %c0_40] : memref<16x256xf32, #tpu.memory_space<vmem>>, vector<1x84xf32>
    %cst_41 = arith.constant 0.000000e+00 : f32
    %107 = vector.broadcast %cst_41 : f32 to vector<120x84xf32>
    %108 = arith.maximumf %102, %107 : vector<120x84xf32>
    %109 = math.absf %102 : vector<120x84xf32>
    %cst_42 = arith.constant 0.000000e+00 : f32
    %110 = vector.broadcast %cst_42 : f32 to vector<120x84xf32>
    %111 = arith.subf %110, %109 : vector<120x84xf32>
    %112 = math.exp %111 : vector<120x84xf32>
    %113 = math.log1p %112 : vector<120x84xf32>
    %114 = arith.addf %108, %113 : vector<120x84xf32>
    %115 = arith.mulf %114, %103 : vector<120x84xf32>
    %116 = arith.addf %101, %115 : vector<120x84xf32>
    %cst_43 = arith.constant 0.000000e+00 : f32
    %117 = vector.broadcast %cst_43 : f32 to vector<1x84xf32>
    %118 = arith.maximumf %105, %117 : vector<1x84xf32>
    %119 = math.absf %105 : vector<1x84xf32>
    %cst_44 = arith.constant 0.000000e+00 : f32
    %120 = vector.broadcast %cst_44 : f32 to vector<1x84xf32>
    %121 = arith.subf %120, %119 : vector<1x84xf32>
    %122 = math.exp %121 : vector<1x84xf32>
    %123 = math.log1p %122 : vector<1x84xf32>
    %124 = arith.addf %118, %123 : vector<1x84xf32>
    %125 = arith.mulf %124, %106 : vector<1x84xf32>
    %126 = arith.addf %104, %125 : vector<1x84xf32>
    %cst_45 = arith.constant dense<0.000000e+00> : vector<8x84xf32>
    %127 = tpu.matmul %94, %116, %cst_45 {dimension_numbers = #tpu.dot_dimension_numbers<[1], [0], [0], [1], [0, 0, 1, 1], [], []>} : vector<8x120xf32>, vector<120x84xf32>, vector<8x84xf32> -> vector<8x84xf32>
    %128 = vector.broadcast %126 : vector<1x84xf32> to vector<8x84xf32>
    %129 = arith.addf %127, %128 : vector<8x84xf32>
    %cst_46 = arith.constant 0.000000e+00 : f32
    %130 = vector.broadcast %cst_46 : f32 to vector<8x84xf32>
    %131 = arith.maximumf %129, %130 : vector<8x84xf32>
    %c0_47 = arith.constant 0 : index
    %c0_48 = arith.constant 0 : index
    %132 = vector.load %arg4[%c0_47, %c0_48] : memref<84x128xf32, #tpu.memory_space<vmem>>, vector<84x128xf32>
    %c0_49 = arith.constant 0 : index
    %c0_50 = arith.constant 0 : index
    %133 = vector.load %arg5[%c0_49, %c0_50] : memref<84x128xf32, #tpu.memory_space<vmem>>, vector<84x128xf32>
    %c0_51 = arith.constant 0 : index
    %c0_52 = arith.constant 0 : index
    %134 = vector.load %arg6[%c0_51, %c0_52] : memref<84x128xf32, #tpu.memory_space<vmem>>, vector<84x128xf32>
    %c8 = arith.constant 8 : index
    %c0_53 = arith.constant 0 : index
    %135 = vector.load %arg3[%c8, %c0_53] : memref<16x256xf32, #tpu.memory_space<vmem>>, vector<1x128xf32>
    %c9 = arith.constant 9 : index
    %c0_54 = arith.constant 0 : index
    %136 = vector.load %arg3[%c9, %c0_54] : memref<16x256xf32, #tpu.memory_space<vmem>>, vector<1x128xf32>
    %c10 = arith.constant 10 : index
    %c0_55 = arith.constant 0 : index
    %137 = vector.load %arg3[%c10, %c0_55] : memref<16x256xf32, #tpu.memory_space<vmem>>, vector<1x128xf32>
    %cst_56 = arith.constant 0.000000e+00 : f32
    %138 = vector.broadcast %cst_56 : f32 to vector<84x128xf32>
    %139 = arith.maximumf %133, %138 : vector<84x128xf32>
    %140 = math.absf %133 : vector<84x128xf32>
    %cst_57 = arith.constant 0.000000e+00 : f32
    %141 = vector.broadcast %cst_57 : f32 to vector<84x128xf32>
    %142 = arith.subf %141, %140 : vector<84x128xf32>
    %143 = math.exp %142 : vector<84x128xf32>
    %144 = math.log1p %143 : vector<84x128xf32>
    %145 = arith.addf %139, %144 : vector<84x128xf32>
    %146 = arith.mulf %145, %134 : vector<84x128xf32>
    %147 = arith.addf %132, %146 : vector<84x128xf32>
    %cst_58 = arith.constant 0.000000e+00 : f32
    %148 = vector.broadcast %cst_58 : f32 to vector<1x128xf32>
    %149 = arith.maximumf %136, %148 : vector<1x128xf32>
    %150 = math.absf %136 : vector<1x128xf32>
    %cst_59 = arith.constant 0.000000e+00 : f32
    %151 = vector.broadcast %cst_59 : f32 to vector<1x128xf32>
    %152 = arith.subf %151, %150 : vector<1x128xf32>
    %153 = math.exp %152 : vector<1x128xf32>
    %154 = math.log1p %153 : vector<1x128xf32>
    %155 = arith.addf %149, %154 : vector<1x128xf32>
    %156 = arith.mulf %155, %137 : vector<1x128xf32>
    %157 = arith.addf %135, %156 : vector<1x128xf32>
    %cst_60 = arith.constant dense<0.000000e+00> : vector<8x128xf32>
    %158 = tpu.matmul %131, %147, %cst_60 {dimension_numbers = #tpu.dot_dimension_numbers<[1], [0], [0], [1], [0, 0, 1, 1], [], []>} : vector<8x84xf32>, vector<84x128xf32>, vector<8x128xf32> -> vector<8x128xf32>
    %159 = vector.broadcast %157 : vector<1x128xf32> to vector<8x128xf32>
    %160 = arith.addf %158, %159 : vector<8x128xf32>
    %c0_61 = arith.constant 0 : index
    %c0_62 = arith.constant 0 : index
    %161 = vector.load %arg13[%c0_61, %c0_62] : memref<8x128xf32, #tpu.memory_space<vmem>>, vector<8x128xf32>
    tpu.vector_store %arg13[%c0_61, %c0_62], %160 {strides = array<i32>} : memref<8x128xf32, #tpu.memory_space<vmem>>, vector<8x128xf32>,
    return
  }
}

</mosaic_0001>

<llo_original>
// kernel: tile.13
$region0: #{tile.13}
  #allocation0 [shape = 's32[1]{0}', space=sflag, size = 0x4, scoped, tag = 'scoped memory for tile.13']
  %s0 = inlined_call_operand.vmem [shape: f32[6], index: 0, kind: input, shape index: {}]
  %s1 = inlined_call_operand.vmem [shape: f32[14,6], index: 1, kind: output, shape index: {}]
  // Predicated region
  $region2: #{tile.13} parent=0 // pred_check
    _
  $region3: #{tile.13} parent=0 // pred_check_branch
    %3 = sbr.rel (0) target = $region5
  $region4: #{tile.13} parent=0 // pred_region
    _
  $region5: #{tile.13} parent=0 // pred_fallthru
    _
  %v4 = vld [vmem:[%s0] ss:$0 sm:$0xff]
  %5 = vst [vmem:[%s1] sm:$0xff] %v4
  %s6 = scalar_lea.vmem %s1, 8
  %7 = vst [vmem:[%s6] sm:$0xff] %v4

// kernel: tile.14
$region0: #{tile.14}
  %s0 = inlined_call_operand.vmem [shape: f32[14,6], index: 0, kind: input, shape index: {}]
  %s1 = inlined_call_operand.vmem [shape: f32[84], index: 1, kind: output, shape index: {}]
  $region1: #{tile.14} parent=0
    #allocation0 [shape = 'u8[4096]{0}', space=vmem, size = 0x1000, scoped, tag = 'scoped mem for output reshape']
    %v2 = vld [vmem:[%s0] sm:$0x1]
    %vm3 = vcmask 48128
    %4 = vst.msk [vmem:[#allocation0] sm:$0x1] %vm3, %v2
    %s5 = scalar_lea.vmem %s0, 13
    %v6 = vld [vmem:[%s5] sm:$0x1]
    %7 = vrot.lane.b32.xlu0 %v6, 78
    %v8 = vpop.permute.xlu0 %7
    %vm9 = vcmask 687728
    %10 = vst.msk [vmem:[#allocation0] sm:$0x1] %vm9, %v8
    %s11 = scalar_lea.vmem %s0, 12
    %v12 = vld [vmem:[%s11] sm:$0x1]
    %13 = vrot.lane.b32.xlu0 %v12, 72
    %v14 = vpop.permute.xlu0 %13
    %vm15 = vcmask 638528
    %16 = vst.msk [vmem:[#allocation0] sm:$0x1] %vm15, %v14
    %s17 = scalar_lea.vmem %s0, 11
    %v18 = vld [vmem:[%s17] sm:$0x1]
    %19 = vrot.lane.b32.xlu0 %v18, 66
    %v20 = vpop.permute.xlu0 %19
    %vm21 = vcmask 589328
    %22 = vst.msk [vmem:[#allocation0] sm:$0x1] %vm21, %v20
    %s23 = scalar_lea.vmem %s0, 10
    %v24 = vld [vmem:[%s23] sm:$0x1]
    %25 = vrot.lane.b32.xlu0 %v24, 60
    %v26 = vpop.permute.xlu0 %25
    %vm27 = vcmask 540128
    %28 = vst.msk [vmem:[#allocation0] sm:$0x1] %vm27, %v26
    %s29 = scalar_lea.vmem %s0, 9
    %v30 = vld [vmem:[%s29] sm:$0x1]
    %31 = vrot.lane.b32.xlu0 %v30, 54
    %v32 = vpop.permute.xlu0 %31
    %vm33 = vcmask 490928
    %34 = vst.msk [vmem:[#allocation0] sm:$0x1] %vm33, %v32
    %s35 = scalar_lea.vmem %s0, 8
    %v36 = vld [vmem:[%s35] sm:$0x1]
    %37 = vrot.lane.b32.xlu0 %v36, 48
    %v38 = vpop.permute.xlu0 %37
    %vm39 = vcmask 441728
    %40 = vst.msk [vmem:[#allocation0] sm:$0x1] %vm39, %v38
    %s41 = scalar_lea.vmem %s0, 7
    %v42 = vld [vmem:[%s41] sm:$0x1]
    %43 = vrot.lane.b32.xlu0 %v42, 42
    %v44 = vpop.permute.xlu0 %43
    %vm45 = vcmask 392528
    %46 = vst.msk [vmem:[#allocation0] sm:$0x1] %vm45, %v44
    %s47 = scalar_lea.vmem %s0, 6
    %v48 = vld [vmem:[%s47] sm:$0x1]
    %49 = vrot.lane.b32.xlu0 %v48, 36
    %v50 = vpop.permute.xlu0 %49
    %vm51 = vcmask 343328
    %52 = vst.msk [vmem:[#allocation0] sm:$0x1] %vm51, %v50
    %s53 = scalar_lea.vmem %s0, 5
    %v54 = vld [vmem:[%s53] sm:$0x1]
    %55 = vrot.lane.b32.xlu0 %v54, 30
    %v56 = vpop.permute.xlu0 %55
    %vm57 = vcmask 294128
    %58 = vst.msk [vmem:[#allocation0] sm:$0x1] %vm57, %v56
    %s59 = scalar_lea.vmem %s0, 4
    %v60 = vld [vmem:[%s59] sm:$0x1]
    %61 = vrot.lane.b32.xlu0 %v60, 24
    %v62 = vpop.permute.xlu0 %61
    %vm63 = vcmask 244928
    %64 = vst.msk [vmem:[#allocation0] sm:$0x1] %vm63, %v62
    %s65 = scalar_lea.vmem %s0, 3
    %v66 = vld [vmem:[%s65] sm:$0x1]
    %67 = vrot.lane.b32.xlu0 %v66, 18
    %v68 = vpop.permute.xlu0 %67
    %vm69 = vcmask 195728
    %70 = vst.msk [vmem:[#allocation0] sm:$0x1] %vm69, %v68
    %s71 = scalar_lea.vmem %s0, 2
    %v72 = vld [vmem:[%s71] sm:$0x1]
    %73 = vrot.lane.b32.xlu0 %v72, 12
    %v74 = vpop.permute.xlu0 %73
    %vm75 = vcmask 146528
    %76 = vst.msk [vmem:[#allocation0] sm:$0x1] %vm75, %v74
    %s77 = scalar_lea.vmem %s0, 1
    %v78 = vld [vmem:[%s77] sm:$0x1]
    %79 = vrot.lane.b32.xlu0 %v78, 6
    %v80 = vpop.permute.xlu0 %79
    %vm81 = vcmask 97328
    %82 = vst.msk [vmem:[#allocation0] sm:$0x1] %vm81, %v80
    %s84 = sshllo.u32 0, 1
    %v86 = vld [vmem:[#allocation0] sm:%s84]
    %s87 = sshllo.u32 0, 1
    %88 = vst [vmem:[%s1] sm:%s87] %v86

// kernel: tile.18
$region0: #{tile.18}
  #allocation0 [shape = 's32[1]{0}', space=sflag, size = 0x4, scoped, tag = 'scoped memory for tile.18']
  %s0 = inlined_call_operand.vmem [shape: f32[16], index: 0, kind: input, shape index: {}]
  %s1 = inlined_call_operand.vmem [shape: f32[5,16], index: 1, kind: output, shape index: {}]
  // Predicated region
  $region2: #{tile.18} parent=0 // pred_check
    _
  $region3: #{tile.18} parent=0 // pred_check_branch
    %3 = sbr.rel (0) target = $region5
  $region4: #{tile.18} parent=0 // pred_region
    _
  $region5: #{tile.18} parent=0 // pred_fallthru
    _
  %v4 = vld [vmem:[%s0] ss:$0 sm:$0xff]
  %5 = vst [vmem:[%s1] sm:$0xff] %v4

// kernel: tile.19
$region0: #{tile.19}
  %s0 = inlined_call_operand.vmem [shape: f32[5,16], index: 0, kind: input, shape index: {}]
  %s1 = inlined_call_operand.vmem [shape: f32[80], index: 1, kind: output, shape index: {}]
  $region1: #{tile.19} parent=0
    #allocation0 [shape = 'u8[4096]{0}', space=vmem, size = 0x1000, scoped, tag = 'scoped mem for output reshape']
    %v2 = vld [vmem:[%s0] sm:$0x1]
    %vm3 = vcmask 130048
    %4 = vst.msk [vmem:[#allocation0] sm:$0x1] %vm3, %v2
    %s5 = scalar_lea.vmem %s0, 4
    %v6 = vld [vmem:[%s5] sm:$0x1]
    %7 = vrot.lane.b32.xlu0 %v6, 64
    %v8 = vpop.permute.xlu0 %7
    %vm9 = vcmask 654848
    %10 = vst.msk [vmem:[#allocation0] sm:$0x1] %vm9, %v8
    %s11 = scalar_lea.vmem %s0, 3
    %v12 = vld [vmem:[%s11] sm:$0x1]
    %13 = vrot.lane.b32.xlu0 %v12, 48
    %v14 = vpop.permute.xlu0 %13
    %vm15 = vcmask 523648
    %16 = vst.msk [vmem:[#allocation0] sm:$0x1] %vm15, %v14
    %s17 = scalar_lea.vmem %s0, 2
    %v18 = vld [vmem:[%s17] sm:$0x1]
    %19 = vrot.lane.b32.xlu0 %v18, 32
    %v20 = vpop.permute.xlu0 %19
    %vm21 = vcmask 392448
    %22 = vst.msk [vmem:[#allocation0] sm:$0x1] %vm21, %v20
    %s23 = scalar_lea.vmem %s0, 1
    %v24 = vld [vmem:[%s23] sm:$0x1]
    %25 = vrot.lane.b32.xlu0 %v24, 16
    %v26 = vpop.permute.xlu0 %25
    %vm27 = vcmask 261248
    %28 = vst.msk [vmem:[#allocation0] sm:$0x1] %vm27, %v26
    %s30 = sshllo.u32 0, 1
    %v32 = vld [vmem:[#allocation0] sm:%s30]
    %s33 = sshllo.u32 0, 1
    %34 = vst [vmem:[%s1] sm:%s33] %v32

// kernel: bbp_mnist_forward.1
$region0: #{bbp_mnist_forward.1}
  #allocation0 [shape = 'u32[]', space=smem, size = 0x4, offset = 0x4, fixed_abs, tag = 'smem constant byte address 0x4 - core index']
  #allocation1 [shape = 'u32[144,128]{1,0:T(1,128)}', space=vmem, size = 0x12000, scoped, tag = 'internal scratch']
  #allocation2 [shape = 'f32[640,120]{1,0:T(8,128)}', space=vmem, size = 0x50000, scoped, tag = 'scratch operand']
  #allocation3 [shape = 'f32[640,120]{1,0:T(8,128)}', space=vmem, size = 0x50000, scoped, tag = 'scratch operand']
  #allocation4 [shape = 'f32[640,120]{1,0:T(8,128)}', space=vmem, size = 0x50000, scoped, tag = 'scratch operand']
  #allocation5 [shape = 'f32[120,84]{1,0:T(8,128)}', space=vmem, size = 0xf000, scoped, tag = 'scratch operand']
  #allocation6 [shape = 'f32[120,84]{1,0:T(8,128)}', space=vmem, size = 0xf000, scoped, tag = 'scratch operand']
  #allocation7 [shape = 'f32[120,84]{1,0:T(8,128)}', space=vmem, size = 0xf000, scoped, tag = 'scratch operand']
  #allocation8 [shape = 's32[6]{0}', space=sflag, size = 0x18, scoped, tag = 'scratch operand']
  #allocation9 [shape = 's32[]', space=sflag, size = 0x4, offset = 0, fixed_abs, tag = 'sflag constant byte address 0x0 - dummy sync flag']
  #allocation10 [shape = 's32[]', space=sflag, size = 0x4, offset = 0, fixed_abs, tag = 'sflag constant byte address 0x0 - dummy sync flag']
  #allocation11 [shape = 's32[]', space=sflag, size = 0x4, offset = 0, fixed_abs, tag = 'sflag constant byte address 0x0 - dummy sync flag']
  #allocation12 [shape = 's32[]', space=sflag, size = 0x4, offset = 0, fixed_abs, tag = 'sflag constant byte address 0x0 - dummy sync flag']
  #allocation13 [shape = 's32[]', space=sflag, size = 0x4, offset = 0, fixed_abs, tag = 'sflag constant byte address 0x0 - dummy sync flag']
  #allocation14 [shape = 's32[]', space=sflag, size = 0x4, offset = 0, fixed_abs, tag = 'sflag constant byte address 0x0 - dummy sync flag']
  %s0 = inlined_call_operand.vmem [shape: f32[224,160], index: 0, kind: input, shape index: {}]
  %s1 = inlined_call_operand.vmem [shape: f32[160,256], index: 1, kind: input, shape index: {}]
  %s2 = inlined_call_operand.vmem [shape: f32[640,256], index: 2, kind: input, shape index: {}]
  %s3 = inlined_call_operand.vmem [shape: f32[16,256], index: 3, kind: input, shape index: {}]
  %s4 = inlined_call_operand.vmem [shape: f32[84,128], index: 4, kind: input, shape index: {}]
  %s5 = inlined_call_operand.vmem [shape: f32[84,128], index: 5, kind: input, shape index: {}]
  %s6 = inlined_call_operand.vmem [shape: f32[84,128], index: 6, kind: input, shape index: {}]
  %s7 = inlined_call_operand.vmem [shape: f32[640,120], index: 7, kind: input, shape index: {}]
  %s8 = inlined_call_operand.vmem [shape: f32[640,120], index: 8, kind: input, shape index: {}]
  %s9 = inlined_call_operand.vmem [shape: f32[640,120], index: 9, kind: input, shape index: {}]
  %s10 = inlined_call_operand.vmem [shape: f32[120,84], index: 10, kind: input, shape index: {}]
  %s11 = inlined_call_operand.vmem [shape: f32[120,84], index: 11, kind: input, shape index: {}]
  %s12 = inlined_call_operand.vmem [shape: f32[120,84], index: 12, kind: input, shape index: {}]
  %s13 = inlined_call_operand.vmem [shape: f32[8,128], index: 13, kind: output, shape index: {}]
  %s14 = sld [smem:[#allocation0]]
  $region242: #{bbp_mnist_forward.1} parent=0
    _
  %s16 = ssub.s32 1, %s14
  %s17 = scalar_select 0, %s16, %s14
  // Predicated region
  $region2: #{bbp_mnist_forward.1} parent=0 // pred_check
    _
  $region3: #{bbp_mnist_forward.1} parent=0 // pred_check_branch
    %19 = sbr.rel (0) target = $region5
  $region4: #{bbp_mnist_forward.1} parent=0 // pred_region
    _
  $region5: #{bbp_mnist_forward.1} parent=0 // pred_fallthru
    _
  // Predicated region
  $region6: #{bbp_mnist_forward.1} parent=0 // pred_check
    _
  $region7: #{bbp_mnist_forward.1} parent=0 // pred_check_branch
    %21 = sbr.rel (0) target = $region9
  $region8: #{bbp_mnist_forward.1} parent=0 // pred_region
    _
  $region9: #{bbp_mnist_forward.1} parent=0 // pred_fallthru
    _
  // Predicated region
  $region10: #{bbp_mnist_forward.1} parent=0 // pred_check
    _
  $region11: #{bbp_mnist_forward.1} parent=0 // pred_check_branch
    %23 = sbr.rel (0) target = $region13
  $region12: #{bbp_mnist_forward.1} parent=0 // pred_region
    _
  $region13: #{bbp_mnist_forward.1} parent=0 // pred_fallthru
    _
  // Predicated region
  $region14: #{bbp_mnist_forward.1} parent=0 // pred_check
    _
  $region15: #{bbp_mnist_forward.1} parent=0 // pred_check_branch
    %25 = sbr.rel (0) target = $region17
  $region16: #{bbp_mnist_forward.1} parent=0 // pred_region
    _
  $region17: #{bbp_mnist_forward.1} parent=0 // pred_fallthru
    _
  // Predicated region
  $region18: #{bbp_mnist_forward.1} parent=0 // pred_check
    _
  $region19: #{bbp_mnist_forward.1} parent=0 // pred_check_branch
    %27 = sbr.rel (0) target = $region21
  $region20: #{bbp_mnist_forward.1} parent=0 // pred_region
    _
  $region21: #{bbp_mnist_forward.1} parent=0 // pred_fallthru
    _
  // Predicated region
  $region22: #{bbp_mnist_forward.1} parent=0 // pred_check
    _
  $region23: #{bbp_mnist_forward.1} parent=0 // pred_check_branch
    %29 = sbr.rel (0) target = $region25
  $region24: #{bbp_mnist_forward.1} parent=0 // pred_region
    _
  $region25: #{bbp_mnist_forward.1} parent=0 // pred_fallthru
    _
  // Predicated region
  $region26: #{bbp_mnist_forward.1} parent=0 // pred_check
    _
  $region27: #{bbp_mnist_forward.1} parent=0 // pred_check_branch
    %31 = sbr.rel (0) target = $region29
  $region28: #{bbp_mnist_forward.1} parent=0 // pred_region
    _
  $region29: #{bbp_mnist_forward.1} parent=0 // pred_fallthru
    _
  %p33 = scmp.lt.u32.totalorder 640, 8
  %p34 = pneg %p33
  // Predicated region
  $region30: #{bbp_mnist_forward.1} parent=0 // pred_check
    _
  $region31: #{bbp_mnist_forward.1} parent=0 // pred_check_branch
    %36 = sbr.rel (%p33) target = $region33
  $region32: #{bbp_mnist_forward.1} parent=0 // pred_region
    %s51 = sand.u32 640, 7
    %p52 = scmp.eq.s32.totalorder %s51, 0
    // Predicated region
    $region45: #{bbp_mnist_forward.1} parent=32 // pred_check
      %p53 = pneg %p52
    $region46: #{bbp_mnist_forward.1} parent=32 // pred_check_branch
      %55 = sbr.rel (%p53) target = $region48
    $region47: #{bbp_mnist_forward.1} parent=32 // pred_region
      loop: start=0, step=1, limit=1
      $region49: #{bbp_mnist_forward.1} parent=47 // loop_pre_header
        _
      $region50: #{bbp_mnist_forward.1} parent=47 // loop_header
        %s57 = sphi 0, %s61
        %p58 = scmp.ge.s32.totalorder %s57, 1
        %s62 = sphi %s7, %s7
        %s63 = sphi [#allocation2], [#allocation2]
      $region51: #{bbp_mnist_forward.1} parent=47 // loop_header_branch
        %60 = sbr.rel (%p58) target = $region55
      $region52: #{bbp_mnist_forward.1} parent=47 // loop_body
        %v64 = vld [vmem:[%s62] sm:$0xff]
        %65 = vst [vmem:[%s63] sm:$0xff] %v64
        %v66 = vld [vmem:[%s62 + $0x8] sm:$0xff]
        %67 = vst [vmem:[%s63 + $0x8] sm:$0xff] %v66
        %v68 = vld [vmem:[%s62 + $0x10] sm:$0xff]
        %69 = vst [vmem:[%s63 + $0x10] sm:$0xff] %v68
        %v70 = vld [vmem:[%s62 + $0x18] sm:$0xff]
        %71 = vst [vmem:[%s63 + $0x18] sm:$0xff] %v70
        %v72 = vld [vmem:[%s62 + $0x20] sm:$0xff]
        %73 = vst [vmem:[%s63 + $0x20] sm:$0xff] %v72
        %v74 = vld [vmem:[%s62 + $0x28] sm:$0xff]
        %75 = vst [vmem:[%s63 + $0x28] sm:$0xff] %v74
        %v76 = vld [vmem:[%s62 + $0x30] sm:$0xff]
        %77 = vst [vmem:[%s63 + $0x30] sm:$0xff] %v76
        %v78 = vld [vmem:[%s62 + $0x38] sm:$0xff]
        %79 = vst [vmem:[%s63 + $0x38] sm:$0xff] %v78
        %v80 = vld [vmem:[%s62 + $0x40] sm:$0xff]
        %81 = vst [vmem:[%s63 + $0x40] sm:$0xff] %v80
        %v82 = vld [vmem:[%s62 + $0x48] sm:$0xff]
        %83 = vst [vmem:[%s63 + $0x48] sm:$0xff] %v82
        %v84 = vld [vmem:[%s62 + $0x50] sm:$0xff]
        %85 = vst [vmem:[%s63 + $0x50] sm:$0xff] %v84
        %v86 = vld [vmem:[%s62 + $0x58] sm:$0xff]
        %87 = vst [vmem:[%s63 + $0x58] sm:$0xff] %v86
        %v88 = vld [vmem:[%s62 + $0x60] sm:$0xff]
        %89 = vst [vmem:[%s63 + $0x60] sm:$0xff] %v88
        %v90 = vld [vmem:[%s62 + $0x68] sm:$0xff]
        %91 = vst [vmem:[%s63 + $0x68] sm:$0xff] %v90
        %v92 = vld [vmem:[%s62 + $0x70] sm:$0xff]
        %93 = vst [vmem:[%s63 + $0x70] sm:$0xff] %v92
        %v94 = vld [vmem:[%s62 + $0x78] sm:$0xff]
        %95 = vst [vmem:[%s63 + $0x78] sm:$0xff] %v94
        %v96 = vld [vmem:[%s62 + $0x80] sm:$0xff]
        %97 = vst [vmem:[%s63 + $0x80] sm:$0xff] %v96
        %v98 = vld [vmem:[%s62 + $0x88] sm:$0xff]
        %99 = vst [vmem:[%s63 + $0x88] sm:$0xff] %v98
        %v100 = vld [vmem:[%s62 + $0x90] sm:$0xff]
        %101 = vst [vmem:[%s63 + $0x90] sm:$0xff] %v100
        %v102 = vld [vmem:[%s62 + $0x98] sm:$0xff]
        %103 = vst [vmem:[%s63 + $0x98] sm:$0xff] %v102
        %v104 = vld [vmem:[%s62 + $0xa0] sm:$0xff]
        %105 = vst [vmem:[%s63 + $0xa0] sm:$0xff] %v104
        %v106 = vld [vmem:[%s62 + $0xa8] sm:$0xff]
        %107 = vst [vmem:[%s63 + $0xa8] sm:$0xff] %v106
        %v108 = vld [vmem:[%s62 + $0xb0] sm:$0xff]
        %109 = vst [vmem:[%s63 + $0xb0] sm:$0xff] %v108
        %v110 = vld [vmem:[%s62 + $0xb8] sm:$0xff]
        %111 = vst [vmem:[%s63 + $0xb8] sm:$0xff] %v110
        %v112 = vld [vmem:[%s62 + $0xc0] sm:$0xff]
        %113 = vst [vmem:[%s63 + $0xc0] sm:$0xff] %v112
        %v114 = vld [vmem:[%s62 + $0xc8] sm:$0xff]
        %115 = vst [vmem:[%s63 + $0xc8] sm:$0xff] %v114
        %v116 = vld [vmem:[%s62 + $0xd0] sm:$0xff]
        %117 = vst [vmem:[%s63 + $0xd0] sm:$0xff] %v116
        %v118 = vld [vmem:[%s62 + $0xd8] sm:$0xff]
        %119 = vst [vmem:[%s63 + $0xd8] sm:$0xff] %v118
        %v120 = vld [vmem:[%s62 + $0xe0] sm:$0xff]
        %121 = vst [vmem:[%s63 + $0xe0] sm:$0xff] %v120
        %v122 = vld [vmem:[%s62 + $0xe8] sm:$0xff]
        %123 = vst [vmem:[%s63 + $0xe8] sm:$0xff] %v122
        %v124 = vld [vmem:[%s62 + $0xf0] sm:$0xff]
        %125 = vst [vmem:[%s63 + $0xf0] sm:$0xff] %v124
        %v126 = vld [vmem:[%s62 + $0xf8] sm:$0xff]
        %127 = vst [vmem:[%s63 + $0xf8] sm:$0xff] %v126
        %v128 = vld [vmem:[%s62 + $0x100] sm:$0xff]
        %129 = vst [vmem:[%s63 + $0x100] sm:$0xff] %v128
        %v130 = vld [vmem:[%s62 + $0x108] sm:$0xff]
        %131 = vst [vmem:[%s63 + $0x108] sm:$0xff] %v130
        %v132 = vld [vmem:[%s62 + $0x110] sm:$0xff]
        %133 = vst [vmem:[%s63 + $0x110] sm:$0xff] %v132
        %v134 = vld [vmem:[%s62 + $0x118] sm:$0xff]
        %135 = vst [vmem:[%s63 + $0x118] sm:$0xff] %v134
        %v136 = vld [vmem:[%s62 + $0x120] sm:$0xff]
        %137 = vst [vmem:[%s63 + $0x120] sm:$0xff] %v136
        %v138 = vld [vmem:[%s62 + $0x128] sm:$0xff]
        %139 = vst [vmem:[%s63 + $0x128] sm:$0xff] %v138
        %v140 = vld [vmem:[%s62 + $0x130] sm:$0xff]
        %141 = vst [vmem:[%s63 + $0x130] sm:$0xff] %v140
        %v142 = vld [vmem:[%s62 + $0x138] sm:$0xff]
        %143 = vst [vmem:[%s63 + $0x138] sm:$0xff] %v142
        %v144 = vld [vmem:[%s62 + $0x140] sm:$0xff]
        %145 = vst [vmem:[%s63 + $0x140] sm:$0xff] %v144
        %v146 = vld [vmem:[%s62 + $0x148] sm:$0xff]
        %147 = vst [vmem:[%s63 + $0x148] sm:$0xff] %v146
        %v148 = vld [vmem:[%s62 + $0x150] sm:$0xff]
        %149 = vst [vmem:[%s63 + $0x150] sm:$0xff] %v148
        %v150 = vld [vmem:[%s62 + $0x158] sm:$0xff]
        %151 = vst [vmem:[%s63 + $0x158] sm:$0xff] %v150
        %v152 = vld [vmem:[%s62 + $0x160] sm:$0xff]
        %153 = vst [vmem:[%s63 + $0x160] sm:$0xff] %v152
        %v154 = vld [vmem:[%s62 + $0x168] sm:$0xff]
        %155 = vst [vmem:[%s63 + $0x168] sm:$0xff] %v154
        %v156 = vld [vmem:[%s62 + $0x170] sm:$0xff]
        %157 = vst [vmem:[%s63 + $0x170] sm:$0xff] %v156
        %v158 = vld [vmem:[%s62 + $0x178] sm:$0xff]
        %159 = vst [vmem:[%s63 + $0x178] sm:$0xff] %v158
        %v160 = vld [vmem:[%s62 + $0x180] sm:$0xff]
        %161 = vst [vmem:[%s63 + $0x180] sm:$0xff] %v160
        %v162 = vld [vmem:[%s62 + $0x188] sm:$0xff]
        %163 = vst [vmem:[%s63 + $0x188] sm:$0xff] %v162
        %v164 = vld [vmem:[%s62 + $0x190] sm:$0xff]
        %165 = vst [vmem:[%s63 + $0x190] sm:$0xff] %v164
        %v166 = vld [vmem:[%s62 + $0x198] sm:$0xff]
        %167 = vst [vmem:[%s63 + $0x198] sm:$0xff] %v166
        %v168 = vld [vmem:[%s62 + $0x1a0] sm:$0xff]
        %169 = vst [vmem:[%s63 + $0x1a0] sm:$0xff] %v168
        %v170 = vld [vmem:[%s62 + $0x1a8] sm:$0xff]
        %171 = vst [vmem:[%s63 + $0x1a8] sm:$0xff] %v170
        %v172 = vld [vmem:[%s62 + $0x1b0] sm:$0xff]
        %173 = vst [vmem:[%s63 + $0x1b0] sm:$0xff] %v172
        %v174 = vld [vmem:[%s62 + $0x1b8] sm:$0xff]
        %175 = vst [vmem:[%s63 + $0x1b8] sm:$0xff] %v174
        %v176 = vld [vmem:[%s62 + $0x1c0] sm:$0xff]
        %177 = vst [vmem:[%s63 + $0x1c0] sm:$0xff] %v176
        %v178 = vld [vmem:[%s62 + $0x1c8] sm:$0xff]
        %179 = vst [vmem:[%s63 + $0x1c8] sm:$0xff] %v178
        %v180 = vld [vmem:[%s62 + $0x1d0] sm:$0xff]
        %181 = vst [vmem:[%s63 + $0x1d0] sm:$0xff] %v180
        %v182 = vld [vmem:[%s62 + $0x1d8] sm:$0xff]
        %183 = vst [vmem:[%s63 + $0x1d8] sm:$0xff] %v182
        %v184 = vld [vmem:[%s62 + $0x1e0] sm:$0xff]
        %185 = vst [vmem:[%s63 + $0x1e0] sm:$0xff] %v184
        %v186 = vld [vmem:[%s62 + $0x1e8] sm:$0xff]
        %187 = vst [vmem:[%s63 + $0x1e8] sm:$0xff] %v186
        %v188 = vld [vmem:[%s62 + $0x1f0] sm:$0xff]
        %189 = vst [vmem:[%s63 + $0x1f0] sm:$0xff] %v188
        %v190 = vld [vmem:[%s62 + $0x1f8] sm:$0xff]
        %191 = vst [vmem:[%s63 + $0x1f8] sm:$0xff] %v190
        %v192 = vld [vmem:[%s62 + $0x200] sm:$0xff]
        %193 = vst [vmem:[%s63 + $0x200] sm:$0xff] %v192
        %v194 = vld [vmem:[%s62 + $0x208] sm:$0xff]
        %195 = vst [vmem:[%s63 + $0x208] sm:$0xff] %v194
        %v196 = vld [vmem:[%s62 + $0x210] sm:$0xff]
        %197 = vst [vmem:[%s63 + $0x210] sm:$0xff] %v196
        %v198 = vld [vmem:[%s62 + $0x218] sm:$0xff]
        %199 = vst [vmem:[%s63 + $0x218] sm:$0xff] %v198
        %v200 = vld [vmem:[%s62 + $0x220] sm:$0xff]
        %201 = vst [vmem:[%s63 + $0x220] sm:$0xff] %v200
        %v202 = vld [vmem:[%s62 + $0x228] sm:$0xff]
        %203 = vst [vmem:[%s63 + $0x228] sm:$0xff] %v202
        %v204 = vld [vmem:[%s62 + $0x230] sm:$0xff]
        %205 = vst [vmem:[%s63 + $0x230] sm:$0xff] %v204
        %v206 = vld [vmem:[%s62 + $0x238] sm:$0xff]
        %207 = vst [vmem:[%s63 + $0x238] sm:$0xff] %v206
        %v208 = vld [vmem:[%s62 + $0x240] sm:$0xff]
        %209 = vst [vmem:[%s63 + $0x240] sm:$0xff] %v208
        %v210 = vld [vmem:[%s62 + $0x248] sm:$0xff]
        %211 = vst [vmem:[%s63 + $0x248] sm:$0xff] %v210
        %v212 = vld [vmem:[%s62 + $0x250] sm:$0xff]
        %213 = vst [vmem:[%s63 + $0x250] sm:$0xff] %v212
        %v214 = vld [vmem:[%s62 + $0x258] sm:$0xff]
        %215 = vst [vmem:[%s63 + $0x258] sm:$0xff] %v214
        %v216 = vld [vmem:[%s62 + $0x260] sm:$0xff]
        %217 = vst [vmem:[%s63 + $0x260] sm:$0xff] %v216
        %v218 = vld [vmem:[%s62 + $0x268] sm:$0xff]
        %219 = vst [vmem:[%s63 + $0x268] sm:$0xff] %v218
        %v220 = vld [vmem:[%s62 + $0x270] sm:$0xff]
        %221 = vst [vmem:[%s63 + $0x270] sm:$0xff] %v220
        %v222 = vld [vmem:[%s62 + $0x278] sm:$0xff]
        %223 = vst [vmem:[%s63 + $0x278] sm:$0xff] %v222
      $region53: #{bbp_mnist_forward.1} parent=47 // loop_footer
        %s61 = sadd.s32 1, %s57
      $region54: #{bbp_mnist_forward.1} parent=47 // loop_footer_branch
        %56 = sbr.rel target = $region50
      $region55: #{bbp_mnist_forward.1} parent=47 // loop_exit
        _
    $region48: #{bbp_mnist_forward.1} parent=32 // pred_fallthru
      _
    %p224 = pneg %p52
    // Predicated region
    $region56: #{bbp_mnist_forward.1} parent=32 // pred_check
      _
    $region57: #{bbp_mnist_forward.1} parent=32 // pred_check_branch
      %226 = sbr.rel (%p52) target = $region59
    $region58: #{bbp_mnist_forward.1} parent=32 // pred_region
      %s227 = sand.u32 640, 7
    $region59: #{bbp_mnist_forward.1} parent=32 // pred_fallthru
      _
  $region33: #{bbp_mnist_forward.1} parent=0 // pred_fallthru
    _
  // Predicated region
  $region34: #{bbp_mnist_forward.1} parent=0 // pred_check
    %p37 = pneg %p33
  $region35: #{bbp_mnist_forward.1} parent=0 // pred_check_branch
    %39 = sbr.rel (%p37) target = $region37
  $region36: #{bbp_mnist_forward.1} parent=0 // pred_region
    %s40 = sshllo.u32 0, 640
    loop: start=0, step=1, limit=1
    $region38: #{bbp_mnist_forward.1} parent=36 // loop_pre_header
      _
    $region39: #{bbp_mnist_forward.1} parent=36 // loop_header
      %s42 = sphi 0, %s46
      %p43 = scmp.ge.s32.totalorder %s42, 1
      %s47 = sphi %s7, %s7
      %s48 = sphi [#allocation2], [#allocation2]
    $region40: #{bbp_mnist_forward.1} parent=36 // loop_header_branch
      %45 = sbr.rel (%p43) target = $region44
    $region41: #{bbp_mnist_forward.1} parent=36 // loop_body
      %v49 = vld [vmem:[%s47] sm:%s40]
      %50 = vst [vmem:[%s48] sm:%s40] %v49
    $region42: #{bbp_mnist_forward.1} parent=36 // loop_footer
      %s46 = sadd.s32 1, %s42
    $region43: #{bbp_mnist_forward.1} parent=36 // loop_footer_branch
      %41 = sbr.rel target = $region39
    $region44: #{bbp_mnist_forward.1} parent=36 // loop_exit
      _
  $region37: #{bbp_mnist_forward.1} parent=0 // pred_fallthru
    _
  // Predicated region
  $region60: #{bbp_mnist_forward.1} parent=0 // pred_check
    _
  $region61: #{bbp_mnist_forward.1} parent=0 // pred_check_branch
    %230 = sbr.rel (0) target = $region63
  $region62: #{bbp_mnist_forward.1} parent=0 // pred_region
    %231 = vsyncadd [#allocation8], 10240
  $region63: #{bbp_mnist_forward.1} parent=0 // pred_fallthru
    _
  %s232 = scalar_lea.sflag [#allocation8], 1
  %p234 = scmp.lt.u32.totalorder 640, 8
  %p235 = pneg %p234
  // Predicated region
  $region64: #{bbp_mnist_forward.1} parent=0 // pred_check
    _
  $region65: #{bbp_mnist_forward.1} parent=0 // pred_check_branch
    %237 = sbr.rel (%p234) target = $region67
  $region66: #{bbp_mnist_forward.1} parent=0 // pred_region
    %s252 = sand.u32 640, 7
    %p253 = scmp.eq.s32.totalorder %s252, 0
    // Predicated region
    $region79: #{bbp_mnist_forward.1} parent=66 // pred_check
      %p254 = pneg %p253
    $region80: #{bbp_mnist_forward.1} parent=66 // pred_check_branch
      %256 = sbr.rel (%p254) target = $region82
    $region81: #{bbp_mnist_forward.1} parent=66 // pred_region
      loop: start=0, step=1, limit=1
      $region83: #{bbp_mnist_forward.1} parent=81 // loop_pre_header
        _
      $region84: #{bbp_mnist_forward.1} parent=81 // loop_header
        %s258 = sphi 0, %s262
        %p259 = scmp.ge.s32.totalorder %s258, 1
        %s263 = sphi %s8, %s8
        %s264 = sphi [#allocation3], [#allocation3]
      $region85: #{bbp_mnist_forward.1} parent=81 // loop_header_branch
        %261 = sbr.rel (%p259) target = $region89
      $region86: #{bbp_mnist_forward.1} parent=81 // loop_body
        %v265 = vld [vmem:[%s263] sm:$0xff]
        %266 = vst [vmem:[%s264] sm:$0xff] %v265
        %v267 = vld [vmem:[%s263 + $0x8] sm:$0xff]
        %268 = vst [vmem:[%s264 + $0x8] sm:$0xff] %v267
        %v269 = vld [vmem:[%s263 + $0x10] sm:$0xff]
        %270 = vst [vmem:[%s264 + $0x10] sm:$0xff] %v269
        %v271 = vld [vmem:[%s263 + $0x18] sm:$0xff]
        %272 = vst [vmem:[%s264 + $0x18] sm:$0xff] %v271
        %v273 = vld [vmem:[%s263 + $0x20] sm:$0xff]
        %274 = vst [vmem:[%s264 + $0x20] sm:$0xff] %v273
        %v275 = vld [vmem:[%s263 + $0x28] sm:$0xff]
        %276 = vst [vmem:[%s264 + $0x28] sm:$0xff] %v275
        %v277 = vld [vmem:[%s263 + $0x30] sm:$0xff]
        %278 = vst [vmem:[%s264 + $0x30] sm:$0xff] %v277
        %v279 = vld [vmem:[%s263 + $0x38] sm:$0xff]
        %280 = vst [vmem:[%s264 + $0x38] sm:$0xff] %v279
        %v281 = vld [vmem:[%s263 + $0x40] sm:$0xff]
        %282 = vst [vmem:[%s264 + $0x40] sm:$0xff] %v281
        %v283 = vld [vmem:[%s263 + $0x48] sm:$0xff]
        %284 = vst [vmem:[%s264 + $0x48] sm:$0xff] %v283
        %v285 = vld [vmem:[%s263 + $0x50] sm:$0xff]
        %286 = vst [vmem:[%s264 + $0x50] sm:$0xff] %v285
        %v287 = vld [vmem:[%s263 + $0x58] sm:$0xff]
        %288 = vst [vmem:[%s264 + $0x58] sm:$0xff] %v287
        %v289 = vld [vmem:[%s263 + $0x60] sm:$0xff]
        %290 = vst [vmem:[%s264 + $0x60] sm:$0xff] %v289
        %v291 = vld [vmem:[%s263 + $0x68] sm:$0xff]
        %292 = vst [vmem:[%s264 + $0x68] sm:$0xff] %v291
        %v293 = vld [vmem:[%s263 + $0x70] sm:$0xff]
        %294 = vst [vmem:[%s264 + $0x70] sm:$0xff] %v293
        %v295 = vld [vmem:[%s263 + $0x78] sm:$0xff]
        %296 = vst [vmem:[%s264 + $0x78] sm:$0xff] %v295
        %v297 = vld [vmem:[%s263 + $0x80] sm:$0xff]
        %298 = vst [vmem:[%s264 + $0x80] sm:$0xff] %v297
        %v299 = vld [vmem:[%s263 + $0x88] sm:$0xff]
        %300 = vst [vmem:[%s264 + $0x88] sm:$0xff] %v299
        %v301 = vld [vmem:[%s263 + $0x90] sm:$0xff]
        %302 = vst [vmem:[%s264 + $0x90] sm:$0xff] %v301
        %v303 = vld [vmem:[%s263 + $0x98] sm:$0xff]
        %304 = vst [vmem:[%s264 + $0x98] sm:$0xff] %v303
        %v305 = vld [vmem:[%s263 + $0xa0] sm:$0xff]
        %306 = vst [vmem:[%s264 + $0xa0] sm:$0xff] %v305
        %v307 = vld [vmem:[%s263 + $0xa8] sm:$0xff]
        %308 = vst [vmem:[%s264 + $0xa8] sm:$0xff] %v307
        %v309 = vld [vmem:[%s263 + $0xb0] sm:$0xff]
        %310 = vst [vmem:[%s264 + $0xb0] sm:$0xff] %v309
        %v311 = vld [vmem:[%s263 + $0xb8] sm:$0xff]
        %312 = vst [vmem:[%s264 + $0xb8] sm:$0xff] %v311
        %v313 = vld [vmem:[%s263 + $0xc0] sm:$0xff]
        %314 = vst [vmem:[%s264 + $0xc0] sm:$0xff] %v313
        %v315 = vld [vmem:[%s263 + $0xc8] sm:$0xff]
        %316 = vst [vmem:[%s264 + $0xc8] sm:$0xff] %v315
        %v317 = vld [vmem:[%s263 + $0xd0] sm:$0xff]
        %318 = vst [vmem:[%s264 + $0xd0] sm:$0xff] %v317
        %v319 = vld [vmem:[%s263 + $0xd8] sm:$0xff]
        %320 = vst [vmem:[%s264 + $0xd8] sm:$0xff] %v319
        %v321 = vld [vmem:[%s263 + $0xe0] sm:$0xff]
        %322 = vst [vmem:[%s264 + $0xe0] sm:$0xff] %v321
        %v323 = vld [vmem:[%s263 + $0xe8] sm:$0xff]
        %324 = vst [vmem:[%s264 + $0xe8] sm:$0xff] %v323
        %v325 = vld [vmem:[%s263 + $0xf0] sm:$0xff]
        %326 = vst [vmem:[%s264 + $0xf0] sm:$0xff] %v325
        %v327 = vld [vmem:[%s263 + $0xf8] sm:$0xff]
        %328 = vst [vmem:[%s264 + $0xf8] sm:$0xff] %v327
        %v329 = vld [vmem:[%s263 + $0x100] sm:$0xff]
        %330 = vst [vmem:[%s264 + $0x100] sm:$0xff] %v329
        %v331 = vld [vmem:[%s263 + $0x108] sm:$0xff]
        %332 = vst [vmem:[%s264 + $0x108] sm:$0xff] %v331
        %v333 = vld [vmem:[%s263 + $0x110] sm:$0xff]
        %334 = vst [vmem:[%s264 + $0x110] sm:$0xff] %v333
        %v335 = vld [vmem:[%s263 + $0x118] sm:$0xff]
        %336 = vst [vmem:[%s264 + $0x118] sm:$0xff] %v335
        %v337 = vld [vmem:[%s263 + $0x120] sm:$0xff]
        %338 = vst [vmem:[%s264 + $0x120] sm:$0xff] %v337
        %v339 = vld [vmem:[%s263 + $0x128] sm:$0xff]
        %340 = vst [vmem:[%s264 + $0x128] sm:$0xff] %v339
        %v341 = vld [vmem:[%s263 + $0x130] sm:$0xff]
        %342 = vst [vmem:[%s264 + $0x130] sm:$0xff] %v341
        %v343 = vld [vmem:[%s263 + $0x138] sm:$0xff]
        %344 = vst [vmem:[%s264 + $0x138] sm:$0xff] %v343
        %v345 = vld [vmem:[%s263 + $0x140] sm:$0xff]
        %346 = vst [vmem:[%s264 + $0x140] sm:$0xff] %v345
        %v347 = vld [vmem:[%s263 + $0x148] sm:$0xff]
        %348 = vst [vmem:[%s264 + $0x148] sm:$0xff] %v347
        %v349 = vld [vmem:[%s263 + $0x150] sm:$0xff]
        %350 = vst [vmem:[%s264 + $0x150] sm:$0xff] %v349
        %v351 = vld [vmem:[%s263 + $0x158] sm:$0xff]
        %352 = vst [vmem:[%s264 + $0x158] sm:$0xff] %v351
        %v353 = vld [vmem:[%s263 + $0x160] sm:$0xff]
        %354 = vst [vmem:[%s264 + $0x160] sm:$0xff] %v353
        %v355 = vld [vmem:[%s263 + $0x168] sm:$0xff]
        %356 = vst [vmem:[%s264 + $0x168] sm:$0xff] %v355
        %v357 = vld [vmem:[%s263 + $0x170] sm:$0xff]
        %358 = vst [vmem:[%s264 + $0x170] sm:$0xff] %v357
        %v359 = vld [vmem:[%s263 + $0x178] sm:$0xff]
        %360 = vst [vmem:[%s264 + $0x178] sm:$0xff] %v359
        %v361 = vld [vmem:[%s263 + $0x180] sm:$0xff]
        %362 = vst [vmem:[%s264 + $0x180] sm:$0xff] %v361
        %v363 = vld [vmem:[%s263 + $0x188] sm:$0xff]
        %364 = vst [vmem:[%s264 + $0x188] sm:$0xff] %v363
        %v365 = vld [vmem:[%s263 + $0x190] sm:$0xff]
        %366 = vst [vmem:[%s264 + $0x190] sm:$0xff] %v365
        %v367 = vld [vmem:[%s263 + $0x198] sm:$0xff]
        %368 = vst [vmem:[%s264 + $0x198] sm:$0xff] %v367
        %v369 = vld [vmem:[%s263 + $0x1a0] sm:$0xff]
        %370 = vst [vmem:[%s264 + $0x1a0] sm:$0xff] %v369
        %v371 = vld [vmem:[%s263 + $0x1a8] sm:$0xff]
        %372 = vst [vmem:[%s264 + $0x1a8] sm:$0xff] %v371
        %v373 = vld [vmem:[%s263 + $0x1b0] sm:$0xff]
        %374 = vst [vmem:[%s264 + $0x1b0] sm:$0xff] %v373
        %v375 = vld [vmem:[%s263 + $0x1b8] sm:$0xff]
        %376 = vst [vmem:[%s264 + $0x1b8] sm:$0xff] %v375
        %v377 = vld [vmem:[%s263 + $0x1c0] sm:$0xff]
        %378 = vst [vmem:[%s264 + $0x1c0] sm:$0xff] %v377
        %v379 = vld [vmem:[%s263 + $0x1c8] sm:$0xff]
        %380 = vst [vmem:[%s264 + $0x1c8] sm:$0xff] %v379
        %v381 = vld [vmem:[%s263 + $0x1d0] sm:$0xff]
        %382 = vst [vmem:[%s264 + $0x1d0] sm:$0xff] %v381
        %v383 = vld [vmem:[%s263 + $0x1d8] sm:$0xff]
        %384 = vst [vmem:[%s264 + $0x1d8] sm:$0xff] %v383
        %v385 = vld [vmem:[%s263 + $0x1e0] sm:$0xff]
        %386 = vst [vmem:[%s264 + $0x1e0] sm:$0xff] %v385
        %v387 = vld [vmem:[%s263 + $0x1e8] sm:$0xff]
        %388 = vst [vmem:[%s264 + $0x1e8] sm:$0xff] %v387
        %v389 = vld [vmem:[%s263 + $0x1f0] sm:$0xff]
        %390 = vst [vmem:[%s264 + $0x1f0] sm:$0xff] %v389
        %v391 = vld [vmem:[%s263 + $0x1f8] sm:$0xff]
        %392 = vst [vmem:[%s264 + $0x1f8] sm:$0xff] %v391
        %v393 = vld [vmem:[%s263 + $0x200] sm:$0xff]
        %394 = vst [vmem:[%s264 + $0x200] sm:$0xff] %v393
        %v395 = vld [vmem:[%s263 + $0x208] sm:$0xff]
        %396 = vst [vmem:[%s264 + $0x208] sm:$0xff] %v395
        %v397 = vld [vmem:[%s263 + $0x210] sm:$0xff]
        %398 = vst [vmem:[%s264 + $0x210] sm:$0xff] %v397
        %v399 = vld [vmem:[%s263 + $0x218] sm:$0xff]
        %400 = vst [vmem:[%s264 + $0x218] sm:$0xff] %v399
        %v401 = vld [vmem:[%s263 + $0x220] sm:$0xff]
        %402 = vst [vmem:[%s264 + $0x220] sm:$0xff] %v401
        %v403 = vld [vmem:[%s263 + $0x228] sm:$0xff]
        %404 = vst [vmem:[%s264 + $0x228] sm:$0xff] %v403
        %v405 = vld [vmem:[%s263 + $0x230] sm:$0xff]
        %406 = vst [vmem:[%s264 + $0x230] sm:$0xff] %v405
        %v407 = vld [vmem:[%s263 + $0x238] sm:$0xff]
        %408 = vst [vmem:[%s264 + $0x238] sm:$0xff] %v407
        %v409 = vld [vmem:[%s263 + $0x240] sm:$0xff]
        %410 = vst [vmem:[%s264 + $0x240] sm:$0xff] %v409
        %v411 = vld [vmem:[%s263 + $0x248] sm:$0xff]
        %412 = vst [vmem:[%s264 + $0x248] sm:$0xff] %v411
        %v413 = vld [vmem:[%s263 + $0x250] sm:$0xff]
        %414 = vst [vmem:[%s264 + $0x250] sm:$0xff] %v413
        %v415 = vld [vmem:[%s263 + $0x258] sm:$0xff]
        %416 = vst [vmem:[%s264 + $0x258] sm:$0xff] %v415
        %v417 = vld [vmem:[%s263 + $0x260] sm:$0xff]
        %418 = vst [vmem:[%s264 + $0x260] sm:$0xff] %v417
        %v419 = vld [vmem:[%s263 + $0x268] sm:$0xff]
        %420 = vst [vmem:[%s264 + $0x268] sm:$0xff] %v419
        %v421 = vld [vmem:[%s263 + $0x270] sm:$0xff]
        %422 = vst [vmem:[%s264 + $0x270] sm:$0xff] %v421
        %v423 = vld [vmem:[%s263 + $0x278] sm:$0xff]
        %424 = vst [vmem:[%s264 + $0x278] sm:$0xff] %v423
      $region87: #{bbp_mnist_forward.1} parent=81 // loop_footer
        %s262 = sadd.s32 1, %s258
      $region88: #{bbp_mnist_forward.1} parent=81 // loop_footer_branch
        %257 = sbr.rel target = $region84
      $region89: #{bbp_mnist_forward.1} parent=81 // loop_exit
        _
    $region82: #{bbp_mnist_forward.1} parent=66 // pred_fallthru
      _
    %p425 = pneg %p253
    // Predicated region
    $region90: #{bbp_mnist_forward.1} parent=66 // pred_check
      _
    $region91: #{bbp_mnist_forward.1} parent=66 // pred_check_branch
      %427 = sbr.rel (%p253) target = $region93
    $region92: #{bbp_mnist_forward.1} parent=66 // pred_region
      %s428 = sand.u32 640, 7
    $region93: #{bbp_mnist_forward.1} parent=66 // pred_fallthru
      _
  $region67: #{bbp_mnist_forward.1} parent=0 // pred_fallthru
    _
  // Predicated region
  $region68: #{bbp_mnist_forward.1} parent=0 // pred_check
    %p238 = pneg %p234
  $region69: #{bbp_mnist_forward.1} parent=0 // pred_check_branch
    %240 = sbr.rel (%p238) target = $region71
  $region70: #{bbp_mnist_forward.1} parent=0 // pred_region
    %s241 = sshllo.u32 0, 640
    loop: start=0, step=1, limit=1
    $region72: #{bbp_mnist_forward.1} parent=70 // loop_pre_header
      _
    $region73: #{bbp_mnist_forward.1} parent=70 // loop_header
      %s243 = sphi 0, %s247
      %p244 = scmp.ge.s32.totalorder %s243, 1
      %s248 = sphi %s8, %s8
      %s249 = sphi [#allocation3], [#allocation3]
    $region74: #{bbp_mnist_forward.1} parent=70 // loop_header_branch
      %246 = sbr.rel (%p244) target = $region78
    $region75: #{bbp_mnist_forward.1} parent=70 // loop_body
      %v250 = vld [vmem:[%s248] sm:%s241]
      %251 = vst [vmem:[%s249] sm:%s241] %v250
    $region76: #{bbp_mnist_forward.1} parent=70 // loop_footer
      %s247 = sadd.s32 1, %s243
    $region77: #{bbp_mnist_forward.1} parent=70 // loop_footer_branch
      %242 = sbr.rel target = $region73
    $region78: #{bbp_mnist_forward.1} parent=70 // loop_exit
      _
  $region71: #{bbp_mnist_forward.1} parent=0 // pred_fallthru
    _
  // Predicated region
  $region94: #{bbp_mnist_forward.1} parent=0 // pred_check
    _
  $region95: #{bbp_mnist_forward.1} parent=0 // pred_check_branch
    %431 = sbr.rel (0) target = $region97
  $region96: #{bbp_mnist_forward.1} parent=0 // pred_region
    %432 = vsyncadd %s232, 10240
  $region97: #{bbp_mnist_forward.1} parent=0 // pred_fallthru
    _
  %s433 = scalar_lea.sflag [#allocation8], 2
  %p435 = scmp.lt.u32.totalorder 640, 8
  %p436 = pneg %p435
  // Predicated region
  $region98: #{bbp_mnist_forward.1} parent=0 // pred_check
    _
  $region99: #{bbp_mnist_forward.1} parent=0 // pred_check_branch
    %438 = sbr.rel (%p435) target = $region101
  $region100: #{bbp_mnist_forward.1} parent=0 // pred_region
    %s453 = sand.u32 640, 7
    %p454 = scmp.eq.s32.totalorder %s453, 0
    // Predicated region
    $region113: #{bbp_mnist_forward.1} parent=100 // pred_check
      %p455 = pneg %p454
    $region114: #{bbp_mnist_forward.1} parent=100 // pred_check_branch
      %457 = sbr.rel (%p455) target = $region116
    $region115: #{bbp_mnist_forward.1} parent=100 // pred_region
      loop: start=0, step=1, limit=1
      $region117: #{bbp_mnist_forward.1} parent=115 // loop_pre_header
        _
      $region118: #{bbp_mnist_forward.1} parent=115 // loop_header
        %s459 = sphi 0, %s463
        %p460 = scmp.ge.s32.totalorder %s459, 1
        %s464 = sphi %s9, %s9
        %s465 = sphi [#allocation4], [#allocation4]
      $region119: #{bbp_mnist_forward.1} parent=115 // loop_header_branch
        %462 = sbr.rel (%p460) target = $region123
      $region120: #{bbp_mnist_forward.1} parent=115 // loop_body
        %v466 = vld [vmem:[%s464] sm:$0xff]
        %467 = vst [vmem:[%s465] sm:$0xff] %v466
        %v468 = vld [vmem:[%s464 + $0x8] sm:$0xff]
        %469 = vst [vmem:[%s465 + $0x8] sm:$0xff] %v468
        %v470 = vld [vmem:[%s464 + $0x10] sm:$0xff]
        %471 = vst [vmem:[%s465 + $0x10] sm:$0xff] %v470
        %v472 = vld [vmem:[%s464 + $0x18] sm:$0xff]
        %473 = vst [vmem:[%s465 + $0x18] sm:$0xff] %v472
        %v474 = vld [vmem:[%s464 + $0x20] sm:$0xff]
        %475 = vst [vmem:[%s465 + $0x20] sm:$0xff] %v474
        %v476 = vld [vmem:[%s464 + $0x28] sm:$0xff]
        %477 = vst [vmem:[%s465 + $0x28] sm:$0xff] %v476
        %v478 = vld [vmem:[%s464 + $0x30] sm:$0xff]
        %479 = vst [vmem:[%s465 + $0x30] sm:$0xff] %v478
        %v480 = vld [vmem:[%s464 + $0x38] sm:$0xff]
        %481 = vst [vmem:[%s465 + $0x38] sm:$0xff] %v480
        %v482 = vld [vmem:[%s464 + $0x40] sm:$0xff]
        %483 = vst [vmem:[%s465 + $0x40] sm:$0xff] %v482
        %v484 = vld [vmem:[%s464 + $0x48] sm:$0xff]
        %485 = vst [vmem:[%s465 + $0x48] sm:$0xff] %v484
        %v486 = vld [vmem:[%s464 + $0x50] sm:$0xff]
        %487 = vst [vmem:[%s465 + $0x50] sm:$0xff] %v486
        %v488 = vld [vmem:[%s464 + $0x58] sm:$0xff]
        %489 = vst [vmem:[%s465 + $0x58] sm:$0xff] %v488
        %v490 = vld [vmem:[%s464 + $0x60] sm:$0xff]
        %491 = vst [vmem:[%s465 + $0x60] sm:$0xff] %v490
        %v492 = vld [vmem:[%s464 + $0x68] sm:$0xff]
        %493 = vst [vmem:[%s465 + $0x68] sm:$0xff] %v492
        %v494 = vld [vmem:[%s464 + $0x70] sm:$0xff]
        %495 = vst [vmem:[%s465 + $0x70] sm:$0xff] %v494
        %v496 = vld [vmem:[%s464 + $0x78] sm:$0xff]
        %497 = vst [vmem:[%s465 + $0x78] sm:$0xff] %v496
        %v498 = vld [vmem:[%s464 + $0x80] sm:$0xff]
        %499 = vst [vmem:[%s465 + $0x80] sm:$0xff] %v498
        %v500 = vld [vmem:[%s464 + $0x88] sm:$0xff]
        %501 = vst [vmem:[%s465 + $0x88] sm:$0xff] %v500
        %v502 = vld [vmem:[%s464 + $0x90] sm:$0xff]
        %503 = vst [vmem:[%s465 + $0x90] sm:$0xff] %v502
        %v504 = vld [vmem:[%s464 + $0x98] sm:$0xff]
        %505 = vst [vmem:[%s465 + $0x98] sm:$0xff] %v504
        %v506 = vld [vmem:[%s464 + $0xa0] sm:$0xff]
        %507 = vst [vmem:[%s465 + $0xa0] sm:$0xff] %v506
        %v508 = vld [vmem:[%s464 + $0xa8] sm:$0xff]
        %509 = vst [vmem:[%s465 + $0xa8] sm:$0xff] %v508
        %v510 = vld [vmem:[%s464 + $0xb0] sm:$0xff]
        %511 = vst [vmem:[%s465 + $0xb0] sm:$0xff] %v510
        %v512 = vld [vmem:[%s464 + $0xb8] sm:$0xff]
        %513 = vst [vmem:[%s465 + $0xb8] sm:$0xff] %v512
        %v514 = vld [vmem:[%s464 + $0xc0] sm:$0xff]
        %515 = vst [vmem:[%s465 + $0xc0] sm:$0xff] %v514
        %v516 = vld [vmem:[%s464 + $0xc8] sm:$0xff]
        %517 = vst [vmem:[%s465 + $0xc8] sm:$0xff] %v516
        %v518 = vld [vmem:[%s464 + $0xd0] sm:$0xff]
        %519 = vst [vmem:[%s465 + $0xd0] sm:$0xff] %v518
        %v520 = vld [vmem:[%s464 + $0xd8] sm:$0xff]
        %521 = vst [vmem:[%s465 + $0xd8] sm:$0xff] %v520
        %v522 = vld [vmem:[%s464 + $0xe0] sm:$0xff]
        %523 = vst [vmem:[%s465 + $0xe0] sm:$0xff] %v522
        %v524 = vld [vmem:[%s464 + $0xe8] sm:$0xff]
        %525 = vst [vmem:[%s465 + $0xe8] sm:$0xff] %v524
        %v526 = vld [vmem:[%s464 + $0xf0] sm:$0xff]
        %527 = vst [vmem:[%s465 + $0xf0] sm:$0xff] %v526
        %v528 = vld [vmem:[%s464 + $0xf8] sm:$0xff]
        %529 = vst [vmem:[%s465 + $0xf8] sm:$0xff] %v528
        %v530 = vld [vmem:[%s464 + $0x100] sm:$0xff]
        %531 = vst [vmem:[%s465 + $0x100] sm:$0xff] %v530
        %v532 = vld [vmem:[%s464 + $0x108] sm:$0xff]
        %533 = vst [vmem:[%s465 + $0x108] sm:$0xff] %v532
        %v534 = vld [vmem:[%s464 + $0x110] sm:$0xff]
        %535 = vst [vmem:[%s465 + $0x110] sm:$0xff] %v534
        %v536 = vld [vmem:[%s464 + $0x118] sm:$0xff]
        %537 = vst [vmem:[%s465 + $0x118] sm:$0xff] %v536
        %v538 = vld [vmem:[%s464 + $0x120] sm:$0xff]
        %539 = vst [vmem:[%s465 + $0x120] sm:$0xff] %v538
        %v540 = vld [vmem:[%s464 + $0x128] sm:$0xff]
        %541 = vst [vmem:[%s465 + $0x128] sm:$0xff] %v540
        %v542 = vld [vmem:[%s464 + $0x130] sm:$0xff]
        %543 = vst [vmem:[%s465 + $0x130] sm:$0xff] %v542
        %v544 = vld [vmem:[%s464 + $0x138] sm:$0xff]
        %545 = vst [vmem:[%s465 + $0x138] sm:$0xff] %v544
        %v546 = vld [vmem:[%s464 + $0x140] sm:$0xff]
        %547 = vst [vmem:[%s465 + $0x140] sm:$0xff] %v546
        %v548 = vld [vmem:[%s464 + $0x148] sm:$0xff]
        %549 = vst [vmem:[%s465 + $0x148] sm:$0xff] %v548
        %v550 = vld [vmem:[%s464 + $0x150] sm:$0xff]
        %551 = vst [vmem:[%s465 + $0x150] sm:$0xff] %v550
        %v552 = vld [vmem:[%s464 + $0x158] sm:$0xff]
        %553 = vst [vmem:[%s465 + $0x158] sm:$0xff] %v552
        %v554 = vld [vmem:[%s464 + $0x160] sm:$0xff]
        %555 = vst [vmem:[%s465 + $0x160] sm:$0xff] %v554
        %v556 = vld [vmem:[%s464 + $0x168] sm:$0xff]
        %557 = vst [vmem:[%s465 + $0x168] sm:$0xff] %v556
        %v558 = vld [vmem:[%s464 + $0x170] sm:$0xff]
        %559 = vst [vmem:[%s465 + $0x170] sm:$0xff] %v558
        %v560 = vld [vmem:[%s464 + $0x178] sm:$0xff]
        %561 = vst [vmem:[%s465 + $0x178] sm:$0xff] %v560
        %v562 = vld [vmem:[%s464 + $0x180] sm:$0xff]
        %563 = vst [vmem:[%s465 + $0x180] sm:$0xff] %v562
        %v564 = vld [vmem:[%s464 + $0x188] sm:$0xff]
        %565 = vst [vmem:[%s465 + $0x188] sm:$0xff] %v564
        %v566 = vld [vmem:[%s464 + $0x190] sm:$0xff]
        %567 = vst [vmem:[%s465 + $0x190] sm:$0xff] %v566
        %v568 = vld [vmem:[%s464 + $0x198] sm:$0xff]
        %569 = vst [vmem:[%s465 + $0x198] sm:$0xff] %v568
        %v570 = vld [vmem:[%s464 + $0x1a0] sm:$0xff]
        %571 = vst [vmem:[%s465 + $0x1a0] sm:$0xff] %v570
        %v572 = vld [vmem:[%s464 + $0x1a8] sm:$0xff]
        %573 = vst [vmem:[%s465 + $0x1a8] sm:$0xff] %v572
        %v574 = vld [vmem:[%s464 + $0x1b0] sm:$0xff]
        %575 = vst [vmem:[%s465 + $0x1b0] sm:$0xff] %v574
        %v576 = vld [vmem:[%s464 + $0x1b8] sm:$0xff]
        %577 = vst [vmem:[%s465 + $0x1b8] sm:$0xff] %v576
        %v578 = vld [vmem:[%s464 + $0x1c0] sm:$0xff]
        %579 = vst [vmem:[%s465 + $0x1c0] sm:$0xff] %v578
        %v580 = vld [vmem:[%s464 + $0x1c8] sm:$0xff]
        %581 = vst [vmem:[%s465 + $0x1c8] sm:$0xff] %v580
        %v582 = vld [vmem:[%s464 + $0x1d0] sm:$0xff]
        %583 = vst [vmem:[%s465 + $0x1d0] sm:$0xff] %v582
        %v584 = vld [vmem:[%s464 + $0x1d8] sm:$0xff]
        %585 = vst [vmem:[%s465 + $0x1d8] sm:$0xff] %v584
        %v586 = vld [vmem:[%s464 + $0x1e0] sm:$0xff]
        %587 = vst [vmem:[%s465 + $0x1e0] sm:$0xff] %v586
        %v588 = vld [vmem:[%s464 + $0x1e8] sm:$0xff]
        %589 = vst [vmem:[%s465 + $0x1e8] sm:$0xff] %v588
        %v590 = vld [vmem:[%s464 + $0x1f0] sm:$0xff]
        %591 = vst [vmem:[%s465 + $0x1f0] sm:$0xff] %v590
        %v592 = vld [vmem:[%s464 + $0x1f8] sm:$0xff]
        %593 = vst [vmem:[%s465 + $0x1f8] sm:$0xff] %v592
        %v594 = vld [vmem:[%s464 + $0x200] sm:$0xff]
        %595 = vst [vmem:[%s465 + $0x200] sm:$0xff] %v594
        %v596 = vld [vmem:[%s464 + $0x208] sm:$0xff]
        %597 = vst [vmem:[%s465 + $0x208] sm:$0xff] %v596
        %v598 = vld [vmem:[%s464 + $0x210] sm:$0xff]
        %599 = vst [vmem:[%s465 + $0x210] sm:$0xff] %v598
        %v600 = vld [vmem:[%s464 + $0x218] sm:$0xff]
        %601 = vst [vmem:[%s465 + $0x218] sm:$0xff] %v600
        %v602 = vld [vmem:[%s464 + $0x220] sm:$0xff]
        %603 = vst [vmem:[%s465 + $0x220] sm:$0xff] %v602
        %v604 = vld [vmem:[%s464 + $0x228] sm:$0xff]
        %605 = vst [vmem:[%s465 + $0x228] sm:$0xff] %v604
        %v606 = vld [vmem:[%s464 + $0x230] sm:$0xff]
        %607 = vst [vmem:[%s465 + $0x230] sm:$0xff] %v606
        %v608 = vld [vmem:[%s464 + $0x238] sm:$0xff]
        %609 = vst [vmem:[%s465 + $0x238] sm:$0xff] %v608
        %v610 = vld [vmem:[%s464 + $0x240] sm:$0xff]
        %611 = vst [vmem:[%s465 + $0x240] sm:$0xff] %v610
        %v612 = vld [vmem:[%s464 + $0x248] sm:$0xff]
        %613 = vst [vmem:[%s465 + $0x248] sm:$0xff] %v612
        %v614 = vld [vmem:[%s464 + $0x250] sm:$0xff]
        %615 = vst [vmem:[%s465 + $0x250] sm:$0xff] %v614
        %v616 = vld [vmem:[%s464 + $0x258] sm:$0xff]
        %617 = vst [vmem:[%s465 + $0x258] sm:$0xff] %v616
        %v618 = vld [vmem:[%s464 + $0x260] sm:$0xff]
        %619 = vst [vmem:[%s465 + $0x260] sm:$0xff] %v618
        %v620 = vld [vmem:[%s464 + $0x268] sm:$0xff]
        %621 = vst [vmem:[%s465 + $0x268] sm:$0xff] %v620
        %v622 = vld [vmem:[%s464 + $0x270] sm:$0xff]
        %623 = vst [vmem:[%s465 + $0x270] sm:$0xff] %v622
        %v624 = vld [vmem:[%s464 + $0x278] sm:$0xff]
        %625 = vst [vmem:[%s465 + $0x278] sm:$0xff] %v624
      $region121: #{bbp_mnist_forward.1} parent=115 // loop_footer
        %s463 = sadd.s32 1, %s459
      $region122: #{bbp_mnist_forward.1} parent=115 // loop_footer_branch
        %458 = sbr.rel target = $region118
      $region123: #{bbp_mnist_forward.1} parent=115 // loop_exit
        _
    $region116: #{bbp_mnist_forward.1} parent=100 // pred_fallthru
      _
    %p626 = pneg %p454
    // Predicated region
    $region124: #{bbp_mnist_forward.1} parent=100 // pred_check
      _
    $region125: #{bbp_mnist_forward.1} parent=100 // pred_check_branch
      %628 = sbr.rel (%p454) target = $region127
    $region126: #{bbp_mnist_forward.1} parent=100 // pred_region
      %s629 = sand.u32 640, 7
    $region127: #{bbp_mnist_forward.1} parent=100 // pred_fallthru
      _
  $region101: #{bbp_mnist_forward.1} parent=0 // pred_fallthru
    _
  // Predicated region
  $region102: #{bbp_mnist_forward.1} parent=0 // pred_check
    %p439 = pneg %p435
  $region103: #{bbp_mnist_forward.1} parent=0 // pred_check_branch
    %441 = sbr.rel (%p439) target = $region105
  $region104: #{bbp_mnist_forward.1} parent=0 // pred_region
    %s442 = sshllo.u32 0, 640
    loop: start=0, step=1, limit=1
    $region106: #{bbp_mnist_forward.1} parent=104 // loop_pre_header
      _
    $region107: #{bbp_mnist_forward.1} parent=104 // loop_header
      %s444 = sphi 0, %s448
      %p445 = scmp.ge.s32.totalorder %s444, 1
      %s449 = sphi %s9, %s9
      %s450 = sphi [#allocation4], [#allocation4]
    $region108: #{bbp_mnist_forward.1} parent=104 // loop_header_branch
      %447 = sbr.rel (%p445) target = $region112
    $region109: #{bbp_mnist_forward.1} parent=104 // loop_body
      %v451 = vld [vmem:[%s449] sm:%s442]
      %452 = vst [vmem:[%s450] sm:%s442] %v451
    $region110: #{bbp_mnist_forward.1} parent=104 // loop_footer
      %s448 = sadd.s32 1, %s444
    $region111: #{bbp_mnist_forward.1} parent=104 // loop_footer_branch
      %443 = sbr.rel target = $region107
    $region112: #{bbp_mnist_forward.1} parent=104 // loop_exit
      _
  $region105: #{bbp_mnist_forward.1} parent=0 // pred_fallthru
    _
  // Predicated region
  $region128: #{bbp_mnist_forward.1} parent=0 // pred_check
    _
  $region129: #{bbp_mnist_forward.1} parent=0 // pred_check_branch
    %632 = sbr.rel (0) target = $region131
  $region130: #{bbp_mnist_forward.1} parent=0 // pred_region
    %633 = vsyncadd %s433, 10240
  $region131: #{bbp_mnist_forward.1} parent=0 // pred_fallthru
    _
  %s634 = scalar_lea.sflag [#allocation8], 3
  %p636 = scmp.lt.u32.totalorder 120, 8
  %p637 = pneg %p636
  // Predicated region
  $region132: #{bbp_mnist_forward.1} parent=0 // pred_check
    _
  $region133: #{bbp_mnist_forward.1} parent=0 // pred_check_branch
    %639 = sbr.rel (%p636) target = $region135
  $region134: #{bbp_mnist_forward.1} parent=0 // pred_region
    %s654 = sand.u32 120, 7
    %p655 = scmp.eq.s32.totalorder %s654, 0
    // Predicated region
    $region147: #{bbp_mnist_forward.1} parent=134 // pred_check
      %p656 = pneg %p655
    $region148: #{bbp_mnist_forward.1} parent=134 // pred_check_branch
      %658 = sbr.rel (%p656) target = $region150
    $region149: #{bbp_mnist_forward.1} parent=134 // pred_region
      loop: start=0, step=1, limit=1
      $region151: #{bbp_mnist_forward.1} parent=149 // loop_pre_header
        _
      $region152: #{bbp_mnist_forward.1} parent=149 // loop_header
        %s660 = sphi 0, %s664
        %p661 = scmp.ge.s32.totalorder %s660, 1
        %s665 = sphi %s10, %s10
        %s666 = sphi [#allocation5], [#allocation5]
      $region153: #{bbp_mnist_forward.1} parent=149 // loop_header_branch
        %663 = sbr.rel (%p661) target = $region157
      $region154: #{bbp_mnist_forward.1} parent=149 // loop_body
        %v667 = vld [vmem:[%s665] sm:$0xff]
        %668 = vst [vmem:[%s666] sm:$0xff] %v667
        %v669 = vld [vmem:[%s665 + $0x8] sm:$0xff]
        %670 = vst [vmem:[%s666 + $0x8] sm:$0xff] %v669
        %v671 = vld [vmem:[%s665 + $0x10] sm:$0xff]
        %672 = vst [vmem:[%s666 + $0x10] sm:$0xff] %v671
        %v673 = vld [vmem:[%s665 + $0x18] sm:$0xff]
        %674 = vst [vmem:[%s666 + $0x18] sm:$0xff] %v673
        %v675 = vld [vmem:[%s665 + $0x20] sm:$0xff]
        %676 = vst [vmem:[%s666 + $0x20] sm:$0xff] %v675
        %v677 = vld [vmem:[%s665 + $0x28] sm:$0xff]
        %678 = vst [vmem:[%s666 + $0x28] sm:$0xff] %v677
        %v679 = vld [vmem:[%s665 + $0x30] sm:$0xff]
        %680 = vst [vmem:[%s666 + $0x30] sm:$0xff] %v679
        %v681 = vld [vmem:[%s665 + $0x38] sm:$0xff]
        %682 = vst [vmem:[%s666 + $0x38] sm:$0xff] %v681
        %v683 = vld [vmem:[%s665 + $0x40] sm:$0xff]
        %684 = vst [vmem:[%s666 + $0x40] sm:$0xff] %v683
        %v685 = vld [vmem:[%s665 + $0x48] sm:$0xff]
        %686 = vst [vmem:[%s666 + $0x48] sm:$0xff] %v685
        %v687 = vld [vmem:[%s665 + $0x50] sm:$0xff]
        %688 = vst [vmem:[%s666 + $0x50] sm:$0xff] %v687
        %v689 = vld [vmem:[%s665 + $0x58] sm:$0xff]
        %690 = vst [vmem:[%s666 + $0x58] sm:$0xff] %v689
        %v691 = vld [vmem:[%s665 + $0x60] sm:$0xff]
        %692 = vst [vmem:[%s666 + $0x60] sm:$0xff] %v691
        %v693 = vld [vmem:[%s665 + $0x68] sm:$0xff]
        %694 = vst [vmem:[%s666 + $0x68] sm:$0xff] %v693
        %v695 = vld [vmem:[%s665 + $0x70] sm:$0xff]
        %696 = vst [vmem:[%s666 + $0x70] sm:$0xff] %v695
      $region155: #{bbp_mnist_forward.1} parent=149 // loop_footer
        %s664 = sadd.s32 1, %s660
      $region156: #{bbp_mnist_forward.1} parent=149 // loop_footer_branch
        %659 = sbr.rel target = $region152
      $region157: #{bbp_mnist_forward.1} parent=149 // loop_exit
        _
    $region150: #{bbp_mnist_forward.1} parent=134 // pred_fallthru
      _
    %p697 = pneg %p655
    // Predicated region
    $region158: #{bbp_mnist_forward.1} parent=134 // pred_check
      _
    $region159: #{bbp_mnist_forward.1} parent=134 // pred_check_branch
      %699 = sbr.rel (%p655) target = $region161
    $region160: #{bbp_mnist_forward.1} parent=134 // pred_region
      %s700 = sand.u32 120, 7
    $region161: #{bbp_mnist_forward.1} parent=134 // pred_fallthru
      _
  $region135: #{bbp_mnist_forward.1} parent=0 // pred_fallthru
    _
  // Predicated region
  $region136: #{bbp_mnist_forward.1} parent=0 // pred_check
    %p640 = pneg %p636
  $region137: #{bbp_mnist_forward.1} parent=0 // pred_check_branch
    %642 = sbr.rel (%p640) target = $region139
  $region138: #{bbp_mnist_forward.1} parent=0 // pred_region
    %s643 = sshllo.u32 0, 120
    loop: start=0, step=1, limit=1
    $region140: #{bbp_mnist_forward.1} parent=138 // loop_pre_header
      _
    $region141: #{bbp_mnist_forward.1} parent=138 // loop_header
      %s645 = sphi 0, %s649
      %p646 = scmp.ge.s32.totalorder %s645, 1
      %s650 = sphi %s10, %s10
      %s651 = sphi [#allocation5], [#allocation5]
    $region142: #{bbp_mnist_forward.1} parent=138 // loop_header_branch
      %648 = sbr.rel (%p646) target = $region146
    $region143: #{bbp_mnist_forward.1} parent=138 // loop_body
      %v652 = vld [vmem:[%s650] sm:%s643]
      %653 = vst [vmem:[%s651] sm:%s643] %v652
    $region144: #{bbp_mnist_forward.1} parent=138 // loop_footer
      %s649 = sadd.s32 1, %s645
    $region145: #{bbp_mnist_forward.1} parent=138 // loop_footer_branch
      %644 = sbr.rel target = $region141
    $region146: #{bbp_mnist_forward.1} parent=138 // loop_exit
      _
  $region139: #{bbp_mnist_forward.1} parent=0 // pred_fallthru
    _
  // Predicated region
  $region162: #{bbp_mnist_forward.1} parent=0 // pred_check
    _
  $region163: #{bbp_mnist_forward.1} parent=0 // pred_check_branch
    %703 = sbr.rel (0) target = $region165
  $region164: #{bbp_mnist_forward.1} parent=0 // pred_region
    %704 = vsyncadd %s634, 1920
  $region165: #{bbp_mnist_forward.1} parent=0 // pred_fallthru
    _
  %s705 = scalar_lea.sflag [#allocation8], 4
  %p707 = scmp.lt.u32.totalorder 120, 8
  %p708 = pneg %p707
  // Predicated region
  $region166: #{bbp_mnist_forward.1} parent=0 // pred_check
    _
  $region167: #{bbp_mnist_forward.1} parent=0 // pred_check_branch
    %710 = sbr.rel (%p707) target = $region169
  $region168: #{bbp_mnist_forward.1} parent=0 // pred_region
    %s725 = sand.u32 120, 7
    %p726 = scmp.eq.s32.totalorder %s725, 0
    // Predicated region
    $region181: #{bbp_mnist_forward.1} parent=168 // pred_check
      %p727 = pneg %p726
    $region182: #{bbp_mnist_forward.1} parent=168 // pred_check_branch
      %729 = sbr.rel (%p727) target = $region184
    $region183: #{bbp_mnist_forward.1} parent=168 // pred_region
      loop: start=0, step=1, limit=1
      $region185: #{bbp_mnist_forward.1} parent=183 // loop_pre_header
        _
      $region186: #{bbp_mnist_forward.1} parent=183 // loop_header
        %s731 = sphi 0, %s735
        %p732 = scmp.ge.s32.totalorder %s731, 1
        %s736 = sphi %s11, %s11
        %s737 = sphi [#allocation6], [#allocation6]
      $region187: #{bbp_mnist_forward.1} parent=183 // loop_header_branch
        %734 = sbr.rel (%p732) target = $region191
      $region188: #{bbp_mnist_forward.1} parent=183 // loop_body
        %v738 = vld [vmem:[%s736] sm:$0xff]
        %739 = vst [vmem:[%s737] sm:$0xff] %v738
        %v740 = vld [vmem:[%s736 + $0x8] sm:$0xff]
        %741 = vst [vmem:[%s737 + $0x8] sm:$0xff] %v740
        %v742 = vld [vmem:[%s736 + $0x10] sm:$0xff]
        %743 = vst [vmem:[%s737 + $0x10] sm:$0xff] %v742
        %v744 = vld [vmem:[%s736 + $0x18] sm:$0xff]
        %745 = vst [vmem:[%s737 + $0x18] sm:$0xff] %v744
        %v746 = vld [vmem:[%s736 + $0x20] sm:$0xff]
        %747 = vst [vmem:[%s737 + $0x20] sm:$0xff] %v746
        %v748 = vld [vmem:[%s736 + $0x28] sm:$0xff]
        %749 = vst [vmem:[%s737 + $0x28] sm:$0xff] %v748
        %v750 = vld [vmem:[%s736 + $0x30] sm:$0xff]
        %751 = vst [vmem:[%s737 + $0x30] sm:$0xff] %v750
        %v752 = vld [vmem:[%s736 + $0x38] sm:$0xff]
        %753 = vst [vmem:[%s737 + $0x38] sm:$0xff] %v752
        %v754 = vld [vmem:[%s736 + $0x40] sm:$0xff]
        %755 = vst [vmem:[%s737 + $0x40] sm:$0xff] %v754
        %v756 = vld [vmem:[%s736 + $0x48] sm:$0xff]
        %757 = vst [vmem:[%s737 + $0x48] sm:$0xff] %v756
        %v758 = vld [vmem:[%s736 + $0x50] sm:$0xff]
        %759 = vst [vmem:[%s737 + $0x50] sm:$0xff] %v758
        %v760 = vld [vmem:[%s736 + $0x58] sm:$0xff]
        %761 = vst [vmem:[%s737 + $0x58] sm:$0xff] %v760
        %v762 = vld [vmem:[%s736 + $0x60] sm:$0xff]
        %763 = vst [vmem:[%s737 + $0x60] sm:$0xff] %v762
        %v764 = vld [vmem:[%s736 + $0x68] sm:$0xff]
        %765 = vst [vmem:[%s737 + $0x68] sm:$0xff] %v764
        %v766 = vld [vmem:[%s736 + $0x70] sm:$0xff]
        %767 = vst [vmem:[%s737 + $0x70] sm:$0xff] %v766
      $region189: #{bbp_mnist_forward.1} parent=183 // loop_footer
        %s735 = sadd.s32 1, %s731
      $region190: #{bbp_mnist_forward.1} parent=183 // loop_footer_branch
        %730 = sbr.rel target = $region186
      $region191: #{bbp_mnist_forward.1} parent=183 // loop_exit
        _
    $region184: #{bbp_mnist_forward.1} parent=168 // pred_fallthru
      _
    %p768 = pneg %p726
    // Predicated region
    $region192: #{bbp_mnist_forward.1} parent=168 // pred_check
      _
    $region193: #{bbp_mnist_forward.1} parent=168 // pred_check_branch
      %770 = sbr.rel (%p726) target = $region195
    $region194: #{bbp_mnist_forward.1} parent=168 // pred_region
      %s771 = sand.u32 120, 7
    $region195: #{bbp_mnist_forward.1} parent=168 // pred_fallthru
      _
  $region169: #{bbp_mnist_forward.1} parent=0 // pred_fallthru
    _
  // Predicated region
  $region170: #{bbp_mnist_forward.1} parent=0 // pred_check
    %p711 = pneg %p707
  $region171: #{bbp_mnist_forward.1} parent=0 // pred_check_branch
    %713 = sbr.rel (%p711) target = $region173
  $region172: #{bbp_mnist_forward.1} parent=0 // pred_region
    %s714 = sshllo.u32 0, 120
    loop: start=0, step=1, limit=1
    $region174: #{bbp_mnist_forward.1} parent=172 // loop_pre_header
      _
    $region175: #{bbp_mnist_forward.1} parent=172 // loop_header
      %s716 = sphi 0, %s720
      %p717 = scmp.ge.s32.totalorder %s716, 1
      %s721 = sphi %s11, %s11
      %s722 = sphi [#allocation6], [#allocation6]
    $region176: #{bbp_mnist_forward.1} parent=172 // loop_header_branch
      %719 = sbr.rel (%p717) target = $region180
    $region177: #{bbp_mnist_forward.1} parent=172 // loop_body
      %v723 = vld [vmem:[%s721] sm:%s714]
      %724 = vst [vmem:[%s722] sm:%s714] %v723
    $region178: #{bbp_mnist_forward.1} parent=172 // loop_footer
      %s720 = sadd.s32 1, %s716
    $region179: #{bbp_mnist_forward.1} parent=172 // loop_footer_branch
      %715 = sbr.rel target = $region175
    $region180: #{bbp_mnist_forward.1} parent=172 // loop_exit
      _
  $region173: #{bbp_mnist_forward.1} parent=0 // pred_fallthru
    _
  // Predicated region
  $region196: #{bbp_mnist_forward.1} parent=0 // pred_check
    _
  $region197: #{bbp_mnist_forward.1} parent=0 // pred_check_branch
    %774 = sbr.rel (0) target = $region199
  $region198: #{bbp_mnist_forward.1} parent=0 // pred_region
    %775 = vsyncadd %s705, 1920
  $region199: #{bbp_mnist_forward.1} parent=0 // pred_fallthru
    _
  %s776 = scalar_lea.sflag [#allocation8], 5
  %p778 = scmp.lt.u32.totalorder 120, 8
  %p779 = pneg %p778
  // Predicated region
  $region200: #{bbp_mnist_forward.1} parent=0 // pred_check
    _
  $region201: #{bbp_mnist_forward.1} parent=0 // pred_check_branch
    %781 = sbr.rel (%p778) target = $region203
  $region202: #{bbp_mnist_forward.1} parent=0 // pred_region
    %s796 = sand.u32 120, 7
    %p797 = scmp.eq.s32.totalorder %s796, 0
    // Predicated region
    $region215: #{bbp_mnist_forward.1} parent=202 // pred_check
      %p798 = pneg %p797
    $region216: #{bbp_mnist_forward.1} parent=202 // pred_check_branch
      %800 = sbr.rel (%p798) target = $region218
    $region217: #{bbp_mnist_forward.1} parent=202 // pred_region
      loop: start=0, step=1, limit=1
      $region219: #{bbp_mnist_forward.1} parent=217 // loop_pre_header
        _
      $region220: #{bbp_mnist_forward.1} parent=217 // loop_header
        %s802 = sphi 0, %s806
        %p803 = scmp.ge.s32.totalorder %s802, 1
        %s807 = sphi %s12, %s12
        %s808 = sphi [#allocation7], [#allocation7]
      $region221: #{bbp_mnist_forward.1} parent=217 // loop_header_branch
        %805 = sbr.rel (%p803) target = $region225
      $region222: #{bbp_mnist_forward.1} parent=217 // loop_body
        %v809 = vld [vmem:[%s807] sm:$0xff]
        %810 = vst [vmem:[%s808] sm:$0xff] %v809
        %v811 = vld [vmem:[%s807 + $0x8] sm:$0xff]
        %812 = vst [vmem:[%s808 + $0x8] sm:$0xff] %v811
        %v813 = vld [vmem:[%s807 + $0x10] sm:$0xff]
        %814 = vst [vmem:[%s808 + $0x10] sm:$0xff] %v813
        %v815 = vld [vmem:[%s807 + $0x18] sm:$0xff]
        %816 = vst [vmem:[%s808 + $0x18] sm:$0xff] %v815
        %v817 = vld [vmem:[%s807 + $0x20] sm:$0xff]
        %818 = vst [vmem:[%s808 + $0x20] sm:$0xff] %v817
        %v819 = vld [vmem:[%s807 + $0x28] sm:$0xff]
        %820 = vst [vmem:[%s808 + $0x28] sm:$0xff] %v819
        %v821 = vld [vmem:[%s807 + $0x30] sm:$0xff]
        %822 = vst [vmem:[%s808 + $0x30] sm:$0xff] %v821
        %v823 = vld [vmem:[%s807 + $0x38] sm:$0xff]
        %824 = vst [vmem:[%s808 + $0x38] sm:$0xff] %v823
        %v825 = vld [vmem:[%s807 + $0x40] sm:$0xff]
        %826 = vst [vmem:[%s808 + $0x40] sm:$0xff] %v825
        %v827 = vld [vmem:[%s807 + $0x48] sm:$0xff]
        %828 = vst [vmem:[%s808 + $0x48] sm:$0xff] %v827
        %v829 = vld [vmem:[%s807 + $0x50] sm:$0xff]
        %830 = vst [vmem:[%s808 + $0x50] sm:$0xff] %v829
        %v831 = vld [vmem:[%s807 + $0x58] sm:$0xff]
        %832 = vst [vmem:[%s808 + $0x58] sm:$0xff] %v831
        %v833 = vld [vmem:[%s807 + $0x60] sm:$0xff]
        %834 = vst [vmem:[%s808 + $0x60] sm:$0xff] %v833
        %v835 = vld [vmem:[%s807 + $0x68] sm:$0xff]
        %836 = vst [vmem:[%s808 + $0x68] sm:$0xff] %v835
        %v837 = vld [vmem:[%s807 + $0x70] sm:$0xff]
        %838 = vst [vmem:[%s808 + $0x70] sm:$0xff] %v837
      $region223: #{bbp_mnist_forward.1} parent=217 // loop_footer
        %s806 = sadd.s32 1, %s802
      $region224: #{bbp_mnist_forward.1} parent=217 // loop_footer_branch
        %801 = sbr.rel target = $region220
      $region225: #{bbp_mnist_forward.1} parent=217 // loop_exit
        _
    $region218: #{bbp_mnist_forward.1} parent=202 // pred_fallthru
      _
    %p839 = pneg %p797
    // Predicated region
    $region226: #{bbp_mnist_forward.1} parent=202 // pred_check
      _
    $region227: #{bbp_mnist_forward.1} parent=202 // pred_check_branch
      %841 = sbr.rel (%p797) target = $region229
    $region228: #{bbp_mnist_forward.1} parent=202 // pred_region
      %s842 = sand.u32 120, 7
    $region229: #{bbp_mnist_forward.1} parent=202 // pred_fallthru
      _
  $region203: #{bbp_mnist_forward.1} parent=0 // pred_fallthru
    _
  // Predicated region
  $region204: #{bbp_mnist_forward.1} parent=0 // pred_check
    %p782 = pneg %p778
  $region205: #{bbp_mnist_forward.1} parent=0 // pred_check_branch
    %784 = sbr.rel (%p782) target = $region207
  $region206: #{bbp_mnist_forward.1} parent=0 // pred_region
    %s785 = sshllo.u32 0, 120
    loop: start=0, step=1, limit=1
    $region208: #{bbp_mnist_forward.1} parent=206 // loop_pre_header
      _
    $region209: #{bbp_mnist_forward.1} parent=206 // loop_header
      %s787 = sphi 0, %s791
      %p788 = scmp.ge.s32.totalorder %s787, 1
      %s792 = sphi %s12, %s12
      %s793 = sphi [#allocation7], [#allocation7]
    $region210: #{bbp_mnist_forward.1} parent=206 // loop_header_branch
      %790 = sbr.rel (%p788) target = $region214
    $region211: #{bbp_mnist_forward.1} parent=206 // loop_body
      %v794 = vld [vmem:[%s792] sm:%s785]
      %795 = vst [vmem:[%s793] sm:%s785] %v794
    $region212: #{bbp_mnist_forward.1} parent=206 // loop_footer
      %s791 = sadd.s32 1, %s787
    $region213: #{bbp_mnist_forward.1} parent=206 // loop_footer_branch
      %786 = sbr.rel target = $region209
    $region214: #{bbp_mnist_forward.1} parent=206 // loop_exit
      _
  $region207: #{bbp_mnist_forward.1} parent=0 // pred_fallthru
    _
  // Predicated region
  $region230: #{bbp_mnist_forward.1} parent=0 // pred_check
    _
  $region231: #{bbp_mnist_forward.1} parent=0 // pred_check_branch
    %845 = sbr.rel (0) target = $region233
  $region232: #{bbp_mnist_forward.1} parent=0 // pred_region
    %846 = vsyncadd %s776, 1920
  $region233: #{bbp_mnist_forward.1} parent=0 // pred_fallthru
    _
  %v847 = vld [vmem:[%s0] sm:$0xff]
  %v848 = vld [vmem:[%s0 + $0x8] sm:$0xff]
  %v849 = vld [vmem:[%s0 + $0x10] sm:$0xff]
  %v850 = vld [vmem:[%s0 + $0x18] sm:$0xff]
  %v851 = vld [vmem:[%s0 + $0x20] sm:$0xff]
  %v852 = vld [vmem:[%s0 + $0x28] sm:$0xff]
  %v853 = vld [vmem:[%s0 + $0x30] sm:$0xff]
  %v854 = vld [vmem:[%s0 + $0x38] sm:$0xff]
  %v855 = vld [vmem:[%s0 + $0x40] sm:$0xff]
  %v856 = vld [vmem:[%s0 + $0x48] sm:$0xff]
  %v857 = vld [vmem:[%s0 + $0x50] sm:$0xff]
  %v858 = vld [vmem:[%s0 + $0x58] sm:$0xff]
  %v859 = vld [vmem:[%s0 + $0x60] sm:$0xff]
  %v860 = vld [vmem:[%s0 + $0x68] sm:$0xff]
  %v861 = vld [vmem:[%s0 + $0x70] sm:$0xff]
  %v862 = vld [vmem:[%s0 + $0x78] sm:$0xff]
  %v863 = vld [vmem:[%s0 + $0x80] sm:$0xff]
  %v864 = vld [vmem:[%s0 + $0x88] sm:$0xff]
  %v865 = vld [vmem:[%s0 + $0x90] sm:$0xff]
  %v866 = vld [vmem:[%s0 + $0x98] sm:$0xff]
  %v867 = vld [vmem:[%s0 + $0xa0] sm:$0xff]
  %v868 = vld [vmem:[%s0 + $0xa8] sm:$0xff]
  %v869 = vld [vmem:[%s0 + $0xb0] sm:$0xff]
  %v870 = vld [vmem:[%s0 + $0xb8] sm:$0xff]
  %v871 = vld [vmem:[%s0 + $0xc0] sm:$0xff]
  %v872 = vld [vmem:[%s0 + $0xc8] sm:$0xff]
  %v873 = vld [vmem:[%s0 + $0xd0] sm:$0xff]
  %v874 = vld [vmem:[%s0 + $0xd8] sm:$0xff]
  %v875 = vld [vmem:[%s0 + $0xe0] sm:$0xff]
  %v876 = vld [vmem:[%s0 + $0xe8] sm:$0xff]
  %v877 = vld [vmem:[%s0 + $0xf0] sm:$0xff]
  %v878 = vld [vmem:[%s0 + $0xf8] sm:$0xff]
  %v879 = vld [vmem:[%s0 + $0x100] sm:$0xff]
  %v880 = vld [vmem:[%s0 + $0x108] sm:$0xff]
  %v881 = vld [vmem:[%s0 + $0x110] sm:$0xff]
  %v882 = vld [vmem:[%s0 + $0x118] sm:$0xff]
  %v883 = vld [vmem:[%s0 + $0x120] sm:$0xff]
  %v884 = vld [vmem:[%s0 + $0x128] sm:$0xff]
  %v885 = vld [vmem:[%s0 + $0x130] sm:$0xff]
  %v886 = vld [vmem:[%s0 + $0x138] sm:$0xff]
  %v887 = vld [vmem:[%s0 + $0x140] sm:$0xff]
  %v888 = vld [vmem:[%s0 + $0x148] sm:$0xff]
  %v889 = vld [vmem:[%s0 + $0x150] sm:$0xff]
  %v890 = vld [vmem:[%s0 + $0x158] sm:$0xff]
  %v891 = vld [vmem:[%s0 + $0x160] sm:$0xff]
  %v892 = vld [vmem:[%s0 + $0x168] sm:$0xff]
  %v893 = vld [vmem:[%s0 + $0x170] sm:$0xff]
  %v894 = vld [vmem:[%s0 + $0x178] sm:$0xff]
  %v895 = vld [vmem:[%s0 + $0x180] sm:$0xff]
  %v896 = vld [vmem:[%s0 + $0x188] sm:$0xff]
  %v897 = vld [vmem:[%s0 + $0x190] sm:$0xff]
  %v898 = vld [vmem:[%s0 + $0x198] sm:$0xff]
  %v899 = vld [vmem:[%s0 + $0x1a0] sm:$0xff]
  %v900 = vld [vmem:[%s0 + $0x1a8] sm:$0xff]
  %v901 = vld [vmem:[%s0 + $0x1b0] sm:$0xff]
  %v902 = vld [vmem:[%s0 + $0x1b8] sm:$0xff]
  %v903 = vld [vmem:[%s1] sm:$0xff]
  %v904 = vld [vmem:[%s1 + $0x8] sm:$0xff]
  %v905 = vld [vmem:[%s1 + $0x10] sm:$0xff]
  %v906 = vld [vmem:[%s1 + $0x18] sm:$0xff]
  %v907 = vld [vmem:[%s1 + $0x20] sm:$0xff]
  %v908 = vld [vmem:[%s1 + $0x28] sm:$0xff]
  %v909 = vld [vmem:[%s1 + $0x30] sm:$0xff]
  %v910 = vld [vmem:[%s1 + $0x38] sm:$0xff]
  %v911 = vld [vmem:[%s1 + $0x40] sm:$0xff]
  %v912 = vld [vmem:[%s1 + $0x48] sm:$0xff]
  %v913 = vld [vmem:[%s1 + $0x50] sm:$0xff]
  %v914 = vld [vmem:[%s1 + $0x58] sm:$0xff]
  %v915 = vld [vmem:[%s1 + $0x60] sm:$0xff]
  %v916 = vld [vmem:[%s1 + $0x68] sm:$0xff]
  %v917 = vld [vmem:[%s1 + $0x70] sm:$0xff]
  %v918 = vld [vmem:[%s1 + $0x78] sm:$0xff]
  %v919 = vld [vmem:[%s1 + $0x80] sm:$0xff]
  %v920 = vld [vmem:[%s1 + $0x88] sm:$0xff]
  %v921 = vld [vmem:[%s1 + $0x90] sm:$0xff]
  %v922 = vld [vmem:[%s1 + $0x98] sm:$0xff]
  %v923 = vld [vmem:[%s1 + $0xa0] sm:$0xff]
  %v924 = vld [vmem:[%s1 + $0xa8] sm:$0xff]
  %v925 = vld [vmem:[%s1 + $0xb0] sm:$0xff]
  %v926 = vld [vmem:[%s1 + $0xb8] sm:$0xff]
  %v927 = vld [vmem:[%s1 + $0xc0] sm:$0xff]
  %v928 = vld [vmem:[%s1 + $0xc8] sm:$0xff]
  %v929 = vld [vmem:[%s1 + $0xd0] sm:$0xff]
  %v930 = vld [vmem:[%s1 + $0xd8] sm:$0xff]
  %v931 = vld [vmem:[%s1 + $0xe0] sm:$0xff]
  %v932 = vld [vmem:[%s1 + $0xe8] sm:$0xff]
  %v933 = vld [vmem:[%s1 + $0xf0] sm:$0xff]
  %v934 = vld [vmem:[%s1 + $0xf8] sm:$0xff]
  %v935 = vld [vmem:[%s1 + $0x100] sm:$0xff]
  %v936 = vld [vmem:[%s1 + $0x108] sm:$0xff]
  %v937 = vld [vmem:[%s1 + $0x110] sm:$0xff]
  %v938 = vld [vmem:[%s1 + $0x118] sm:$0xff]
  %v939 = vld [vmem:[%s1 + $0x120] sm:$0xff]
  %v940 = vld [vmem:[%s1 + $0x128] sm:$0xff]
  %v941 = vld [vmem:[%s1 + $0x130] sm:$0xff]
  %v942 = vld [vmem:[%s1 + $0x138] sm:$0xff]
  %v943 = vld [vmem:[%s3] ss:$8 sm:$0x3]
  %v945 = vlaneseq
  %v946 = vshrl.u32 %v945, 7
  %v947 = vsub.s32 0, %v946
  %v948 = vrot.slane %v943, %v947
  %v949 = vlaneseq
  %v950 = vshrl.u32 %v949, 7
  %v951 = vsub.s32 1, %v950
  %v952 = vrot.slane %v943, %v951
  %vm955 = vcmask 261120
  %v957 = vsel %vm955, %v848, 0
  %v960 = vsel %vm955, %v850, 0
  %v963 = vsel %vm955, %v852, 0
  %v966 = vsel %vm955, %v854, 0
  %v969 = vsel %vm955, %v856, 0
  %v972 = vsel %vm955, %v858, 0
  %v975 = vsel %vm955, %v860, 0
  %v978 = vsel %vm955, %v862, 0
  %v981 = vsel %vm955, %v864, 0
  %v984 = vsel %vm955, %v866, 0
  %v987 = vsel %vm955, %v868, 0
  %v990 = vsel %vm955, %v870, 0
  %v993 = vsel %vm955, %v872, 0
  %v996 = vsel %vm955, %v874, 0
  %v999 = vsel %vm955, %v876, 0
  %v1002 = vsel %vm955, %v878, 0
  %v1005 = vsel %vm955, %v880, 0
  %v1008 = vsel %vm955, %v882, 0
  %v1011 = vsel %vm955, %v884, 0
  %v1014 = vsel %vm955, %v886, 0
  %v1017 = vsel %vm955, %v888, 0
  %v1020 = vsel %vm955, %v890, 0
  %v1023 = vsel %vm955, %v892, 0
  %v1026 = vsel %vm955, %v894, 0
  %v1029 = vsel %vm955, %v896, 0
  %v1032 = vsel %vm955, %v898, 0
  %v1035 = vsel %vm955, %v900, 0
  %v1038 = vsel %vm955, %v902, 0
  %1040 = vmatprep.subr.mxu0 %v904
  %1041 = vmatpush1.msra.mxu0 %v903
  %1042 = vmatprep.subr.mxu0 %v906
  %1043 = vmatpush1.msra.mxu0 %v905
  %1044 = vmatprep.subr.mxu0 %v908
  %1045 = vmatpush1.msra.mxu0 %v907
  %1046 = vmatprep.subr.mxu0 %v910
  %1047 = vmatpush1.msra.mxu0 %v909
  %1048 = vmatprep.subr.mxu0 %v912
  %1049 = vmatpush1.msra.mxu0 %v911
  %1050 = vmatprep.subr.mxu0 %v914
  %1051 = vmatpush1.msra.mxu0 %v913
  %1052 = vmatprep.subr.mxu0 %v916
  %1053 = vmatpush1.msra.mxu0 %v915
  %1054 = vmatprep.subr.mxu0 %v918
  %1055 = vmatpush1.msra.mxu0 %v917
  %1056 = vmatprep.subr.mxu0 %v920
  %1057 = vmatpush1.msra.mxu0 %v919
  %1058 = vmatprep.subr.mxu0 %v922
  %1059 = vmatpush1.msra.mxu0 %v921
  %1060 = vmatprep.subr.mxu0 %v924
  %1061 = vmatpush1.msra.mxu0 %v923
  %1062 = vmatprep.subr.mxu0 %v926
  %1063 = vmatpush1.msra.mxu0 %v925
  %1064 = vmatprep.subr.mxu0 %v928
  %1065 = vmatpush1.msra.mxu0 %v927
  %1066 = vmatprep.subr.mxu0 %v930
  %1067 = vmatpush1.msra.mxu0 %v929
  %1068 = vmatprep.subr.mxu0 %v932
  %1069 = vmatpush1.msra.mxu0 %v931
  %1070 = vmatprep.subr.mxu0 %v934
  %1071 = vmatpush1.msra.mxu0 %v933
  %1072 = vmatprep.subr.mxu0 %v936
  %1073 = vmatpush1.msra.mxu0 %v935
  %1074 = vmatprep.subr.mxu0 %v938
  %1075 = vmatpush1.msra.mxu0 %v937
  %1076 = vmatprep.subr.mxu0 %v940
  %1077 = vmatpush1.msra.mxu0 %v939
  %1078 = vmatprep.subr.mxu0 %v942
  %1079 = vmatpush1.msra.mxu0 %v941
  %1080 = vmatprep.subr.mxu0 0.0
  %1081 = vmatpush1.msra.mxu0 0.0
  %1082 = vmatprep.subr.mxu0 0.0
  %1083 = vmatpush1.msra.mxu0 0.0
  %1084 = vmatprep.subr.mxu0 0.0
  %1085 = vmatpush1.msra.mxu0 0.0
  %1086 = vmatprep.subr.mxu0 0.0
  %1087 = vmatpush1.msra.mxu0 0.0
  %1088 = vmatprep.subr.mxu0 0.0
  %1089 = vmatpush1.msra.mxu0 0.0
  %1090 = vmatprep.subr.mxu0 0.0
  %1091 = vmatpush1.msra.mxu0 0.0
  %1092 = vmatprep.subr.mxu0 0.0
  %1093 = vmatpush1.msra.mxu0 0.0
  %1094 = vmatprep.subr.mxu0 0.0
  %1095 = vmatpush1.msra.mxu0 0.0
  %1096 = vmatprep.subr.mxu0 0.0
  %1097 = vmatpush1.msra.mxu0 0.0
  %1098 = vmatprep.subr.mxu0 0.0
  %1099 = vmatpush1.msra.mxu0 0.0
  %1100 = vmatprep.subr.mxu0 0.0
  %1101 = vmatpush1.msra.mxu0 0.0
  %1102 = vmatprep.subr.mxu0 0.0
  %1103 = vmatpush1.msra.mxu0 0.0
  %1104 = vmatprep.mubr.f32.mxu0 %v957
  %1105 = vmatmul.mubr.f32.gmra.mrb[0].mxu0 %v847
  %v1106 = vpop.f32.mrb[0].mxu0
  %v1107 = vadd.f32 %v948, %v1106
  %v1108 = vpop.f32.mrb[0].mxu0
  %v1109 = vadd.f32 %v952, %v1108
  %1110 = vmatprep.mubr.f32.mxu0 %v960
  %1111 = vmatmul.mubr.f32.gmra.mrb[0].mxu0 %v849
  %v1112 = vpop.f32.mrb[0].mxu0
  %v1113 = vadd.f32 %v948, %v1112
  %v1114 = vpop.f32.mrb[0].mxu0
  %v1115 = vadd.f32 %v952, %v1114
  %1116 = vmatprep.mubr.f32.mxu0 %v963
  %1117 = vmatmul.mubr.f32.gmra.mrb[0].mxu0 %v851
  %v1118 = vpop.f32.mrb[0].mxu0
  %v1119 = vadd.f32 %v948, %v1118
  %v1120 = vpop.f32.mrb[0].mxu0
  %v1121 = vadd.f32 %v952, %v1120
  %1122 = vmatprep.mubr.f32.mxu0 %v966
  %1123 = vmatmul.mubr.f32.gmra.mrb[0].mxu0 %v853
  %v1124 = vpop.f32.mrb[0].mxu0
  %v1125 = vadd.f32 %v948, %v1124
  %v1126 = vpop.f32.mrb[0].mxu0
  %v1127 = vadd.f32 %v952, %v1126
  %1128 = vmatprep.mubr.f32.mxu0 %v969
  %1129 = vmatmul.mubr.f32.gmra.mrb[0].mxu0 %v855
  %v1130 = vpop.f32.mrb[0].mxu0
  %v1131 = vadd.f32 %v948, %v1130
  %v1132 = vpop.f32.mrb[0].mxu0
  %v1133 = vadd.f32 %v952, %v1132
  %1134 = vmatprep.mubr.f32.mxu0 %v972
  %1135 = vmatmul.mubr.f32.gmra.mrb[0].mxu0 %v857
  %v1136 = vpop.f32.mrb[0].mxu0
  %v1137 = vadd.f32 %v948, %v1136
  %v1138 = vpop.f32.mrb[0].mxu0
  %v1139 = vadd.f32 %v952, %v1138
  %1140 = vmatprep.mubr.f32.mxu0 %v975
  %1141 = vmatmul.mubr.f32.gmra.mrb[0].mxu0 %v859
  %v1142 = vpop.f32.mrb[0].mxu0
  %v1143 = vadd.f32 %v948, %v1142
  %v1144 = vpop.f32.mrb[0].mxu0
  %v1145 = vadd.f32 %v952, %v1144
  %1146 = vmatprep.mubr.f32.mxu0 %v978
  %1147 = vmatmul.mubr.f32.gmra.mrb[0].mxu0 %v861
  %v1148 = vpop.f32.mrb[0].mxu0
  %v1149 = vadd.f32 %v948, %v1148
  %v1150 = vpop.f32.mrb[0].mxu0
  %v1151 = vadd.f32 %v952, %v1150
  %1152 = vmatprep.mubr.f32.mxu0 %v981
  %1153 = vmatmul.mubr.f32.gmra.mrb[0].mxu0 %v863
  %v1154 = vpop.f32.mrb[0].mxu0
  %v1155 = vadd.f32 %v948, %v1154
  %v1156 = vpop.f32.mrb[0].mxu0
  %v1157 = vadd.f32 %v952, %v1156
  %1158 = vmatprep.mubr.f32.mxu0 %v984
  %1159 = vmatmul.mubr.f32.gmra.mrb[0].mxu0 %v865
  %v1160 = vpop.f32.mrb[0].mxu0
  %v1161 = vadd.f32 %v948, %v1160
  %v1162 = vpop.f32.mrb[0].mxu0
  %v1163 = vadd.f32 %v952, %v1162
  %1164 = vmatprep.mubr.f32.mxu0 %v987
  %1165 = vmatmul.mubr.f32.gmra.mrb[0].mxu0 %v867
  %v1166 = vpop.f32.mrb[0].mxu0
  %v1167 = vadd.f32 %v948, %v1166
  %v1168 = vpop.f32.mrb[0].mxu0
  %v1169 = vadd.f32 %v952, %v1168
  %1170 = vmatprep.mubr.f32.mxu0 %v990
  %1171 = vmatmul.mubr.f32.gmra.mrb[0].mxu0 %v869
  %v1172 = vpop.f32.mrb[0].mxu0
  %v1173 = vadd.f32 %v948, %v1172
  %v1174 = vpop.f32.mrb[0].mxu0
  %v1175 = vadd.f32 %v952, %v1174
  %1176 = vmatprep.mubr.f32.mxu0 %v993
  %1177 = vmatmul.mubr.f32.gmra.mrb[0].mxu0 %v871
  %v1178 = vpop.f32.mrb[0].mxu0
  %v1179 = vadd.f32 %v948, %v1178
  %v1180 = vpop.f32.mrb[0].mxu0
  %v1181 = vadd.f32 %v952, %v1180
  %1182 = vmatprep.mubr.f32.mxu0 %v996
  %1183 = vmatmul.mubr.f32.gmra.mrb[0].mxu0 %v873
  %v1184 = vpop.f32.mrb[0].mxu0
  %v1185 = vadd.f32 %v948, %v1184
  %v1186 = vpop.f32.mrb[0].mxu0
  %v1187 = vadd.f32 %v952, %v1186
  %1188 = vmatprep.mubr.f32.mxu0 %v999
  %1189 = vmatmul.mubr.f32.gmra.mrb[0].mxu0 %v875
  %v1190 = vpop.f32.mrb[0].mxu0
  %v1191 = vadd.f32 %v948, %v1190
  %v1192 = vpop.f32.mrb[0].mxu0
  %v1193 = vadd.f32 %v952, %v1192
  %1194 = vmatprep.mubr.f32.mxu0 %v1002
  %1195 = vmatmul.mubr.f32.gmra.mrb[0].mxu0 %v877
  %v1196 = vpop.f32.mrb[0].mxu0
  %v1197 = vadd.f32 %v948, %v1196
  %v1198 = vpop.f32.mrb[0].mxu0
  %v1199 = vadd.f32 %v952, %v1198
  %1200 = vmatprep.mubr.f32.mxu0 %v1005
  %1201 = vmatmul.mubr.f32.gmra.mrb[0].mxu0 %v879
  %v1202 = vpop.f32.mrb[0].mxu0
  %v1203 = vadd.f32 %v948, %v1202
  %v1204 = vpop.f32.mrb[0].mxu0
  %v1205 = vadd.f32 %v952, %v1204
  %1206 = vmatprep.mubr.f32.mxu0 %v1008
  %1207 = vmatmul.mubr.f32.gmra.mrb[0].mxu0 %v881
  %v1208 = vpop.f32.mrb[0].mxu0
  %v1209 = vadd.f32 %v948, %v1208
  %v1210 = vpop.f32.mrb[0].mxu0
  %v1211 = vadd.f32 %v952, %v1210
  %1212 = vmatprep.mubr.f32.mxu0 %v1011
  %1213 = vmatmul.mubr.f32.gmra.mrb[0].mxu0 %v883
  %v1214 = vpop.f32.mrb[0].mxu0
  %v1215 = vadd.f32 %v948, %v1214
  %v1216 = vpop.f32.mrb[0].mxu0
  %v1217 = vadd.f32 %v952, %v1216
  %1218 = vmatprep.mubr.f32.mxu0 %v1014
  %1219 = vmatmul.mubr.f32.gmra.mrb[0].mxu0 %v885
  %v1220 = vpop.f32.mrb[0].mxu0
  %v1221 = vadd.f32 %v948, %v1220
  %v1222 = vpop.f32.mrb[0].mxu0
  %v1223 = vadd.f32 %v952, %v1222
  %1224 = vmatprep.mubr.f32.mxu0 %v1017
  %1225 = vmatmul.mubr.f32.gmra.mrb[0].mxu0 %v887
  %v1226 = vpop.f32.mrb[0].mxu0
  %v1227 = vadd.f32 %v948, %v1226
  %v1228 = vpop.f32.mrb[0].mxu0
  %v1229 = vadd.f32 %v952, %v1228
  %1230 = vmatprep.mubr.f32.mxu0 %v1020
  %1231 = vmatmul.mubr.f32.gmra.mrb[0].mxu0 %v889
  %v1232 = vpop.f32.mrb[0].mxu0
  %v1233 = vadd.f32 %v948, %v1232
  %v1234 = vpop.f32.mrb[0].mxu0
  %v1235 = vadd.f32 %v952, %v1234
  %1236 = vmatprep.mubr.f32.mxu0 %v1023
  %1237 = vmatmul.mubr.f32.gmra.mrb[0].mxu0 %v891
  %v1238 = vpop.f32.mrb[0].mxu0
  %v1239 = vadd.f32 %v948, %v1238
  %v1240 = vpop.f32.mrb[0].mxu0
  %v1241 = vadd.f32 %v952, %v1240
  %1242 = vmatprep.mubr.f32.mxu0 %v1026
  %1243 = vmatmul.mubr.f32.gmra.mrb[0].mxu0 %v893
  %v1244 = vpop.f32.mrb[0].mxu0
  %v1245 = vadd.f32 %v948, %v1244
  %v1246 = vpop.f32.mrb[0].mxu0
  %v1247 = vadd.f32 %v952, %v1246
  %1248 = vmatprep.mubr.f32.mxu0 %v1029
  %1249 = vmatmul.mubr.f32.gmra.mrb[0].mxu0 %v895
  %v1250 = vpop.f32.mrb[0].mxu0
  %v1251 = vadd.f32 %v948, %v1250
  %v1252 = vpop.f32.mrb[0].mxu0
  %v1253 = vadd.f32 %v952, %v1252
  %1254 = vmatprep.mubr.f32.mxu0 %v1032
  %1255 = vmatmul.mubr.f32.gmra.mrb[0].mxu0 %v897
  %v1256 = vpop.f32.mrb[0].mxu0
  %v1257 = vadd.f32 %v948, %v1256
  %v1258 = vpop.f32.mrb[0].mxu0
  %v1259 = vadd.f32 %v952, %v1258
  %1260 = vmatprep.mubr.f32.mxu0 %v1035
  %1261 = vmatmul.mubr.f32.gmra.mrb[0].mxu0 %v899
  %v1262 = vpop.f32.mrb[0].mxu0
  %v1263 = vadd.f32 %v948, %v1262
  %v1264 = vpop.f32.mrb[0].mxu0
  %v1265 = vadd.f32 %v952, %v1264
  %1266 = vmatprep.mubr.f32.mxu0 %v1038
  %1267 = vmatmul.mubr.f32.gmra.mrb[0].mxu0 %v901
  %v1268 = vpop.f32.mrb[0].mxu0
  %v1269 = vadd.f32 %v948, %v1268
  %v1270 = vpop.f32.mrb[0].mxu0
  %v1271 = vadd.f32 %v952, %v1270
  %1272 = vdwg.mxu0
  %v1273 = vmax.f32 %v1107, 0.0
  %v1274 = vmax.f32 %v1109, 0.0
  %v1275 = vmax.f32 %v1113, 0.0
  %v1276 = vmax.f32 %v1115, 0.0
  %v1277 = vmax.f32 %v1119, 0.0
  %v1278 = vmax.f32 %v1121, 0.0
  %v1279 = vmax.f32 %v1125, 0.0
  %v1280 = vmax.f32 %v1127, 0.0
  %v1281 = vmax.f32 %v1131, 0.0
  %v1282 = vmax.f32 %v1133, 0.0
  %v1283 = vmax.f32 %v1137, 0.0
  %v1284 = vmax.f32 %v1139, 0.0
  %v1285 = vmax.f32 %v1143, 0.0
  %v1286 = vmax.f32 %v1145, 0.0
  %v1287 = vmax.f32 %v1149, 0.0
  %v1288 = vmax.f32 %v1151, 0.0
  %v1289 = vmax.f32 %v1155, 0.0
  %v1290 = vmax.f32 %v1157, 0.0
  %v1291 = vmax.f32 %v1161, 0.0
  %v1292 = vmax.f32 %v1163, 0.0
  %v1293 = vmax.f32 %v1167, 0.0
  %v1294 = vmax.f32 %v1169, 0.0
  %v1295 = vmax.f32 %v1173, 0.0
  %v1296 = vmax.f32 %v1175, 0.0
  %v1297 = vmax.f32 %v1179, 0.0
  %v1298 = vmax.f32 %v1181, 0.0
  %v1299 = vmax.f32 %v1185, 0.0
  %v1300 = vmax.f32 %v1187, 0.0
  %v1301 = vmax.f32 %v1191, 0.0
  %v1302 = vmax.f32 %v1193, 0.0
  %v1303 = vmax.f32 %v1197, 0.0
  %v1304 = vmax.f32 %v1199, 0.0
  %v1305 = vmax.f32 %v1203, 0.0
  %v1306 = vmax.f32 %v1205, 0.0
  %v1307 = vmax.f32 %v1209, 0.0
  %v1308 = vmax.f32 %v1211, 0.0
  %v1309 = vmax.f32 %v1215, 0.0
  %v1310 = vmax.f32 %v1217, 0.0
  %v1311 = vmax.f32 %v1221, 0.0
  %v1312 = vmax.f32 %v1223, 0.0
  %v1313 = vmax.f32 %v1227, 0.0
  %v1314 = vmax.f32 %v1229, 0.0
  %v1315 = vmax.f32 %v1233, 0.0
  %v1316 = vmax.f32 %v1235, 0.0
  %v1317 = vmax.f32 %v1239, 0.0
  %v1318 = vmax.f32 %v1241, 0.0
  %v1319 = vmax.f32 %v1245, 0.0
  %v1320 = vmax.f32 %v1247, 0.0
  %v1321 = vmax.f32 %v1251, 0.0
  %v1322 = vmax.f32 %v1253, 0.0
  %v1323 = vmax.f32 %v1257, 0.0
  %v1324 = vmax.f32 %v1259, 0.0
  %v1325 = vmax.f32 %v1263, 0.0
  %v1326 = vmax.f32 %v1265, 0.0
  %v1327 = vmax.f32 %v1269, 0.0
  %v1328 = vmax.f32 %v1271, 0.0
  %v1329 = vmax.f32 %v1273, %v1274
  %v1330 = vmax.f32 %v1275, %v1276
  %v1331 = vmax.f32 %v1277, %v1278
  %v1332 = vmax.f32 %v1279, %v1280
  %v1333 = vmax.f32 %v1281, %v1282
  %v1334 = vmax.f32 %v1283, %v1284
  %v1335 = vmax.f32 %v1285, %v1286
  %v1336 = vmax.f32 %v1287, %v1288
  %v1337 = vmax.f32 %v1289, %v1290
  %v1338 = vmax.f32 %v1291, %v1292
  %v1339 = vmax.f32 %v1293, %v1294
  %v1340 = vmax.f32 %v1295, %v1296
  %v1341 = vmax.f32 %v1297, %v1298
  %v1342 = vmax.f32 %v1299, %v1300
  %v1343 = vmax.f32 %v1301, %v1302
  %v1344 = vmax.f32 %v1303, %v1304
  %v1345 = vmax.f32 %v1305, %v1306
  %v1346 = vmax.f32 %v1307, %v1308
  %v1347 = vmax.f32 %v1309, %v1310
  %v1348 = vmax.f32 %v1311, %v1312
  %v1349 = vmax.f32 %v1313, %v1314
  %v1350 = vmax.f32 %v1315, %v1316
  %v1351 = vmax.f32 %v1317, %v1318
  %v1352 = vmax.f32 %v1319, %v1320
  %v1353 = vmax.f32 %v1321, %v1322
  %v1354 = vmax.f32 %v1323, %v1324
  %v1355 = vmax.f32 %v1325, %v1326
  %v1356 = vmax.f32 %v1327, %v1328
  %v1357 = vmax.f32 %v1329, %v1343
  %v1358 = vmax.f32 %v1330, %v1344
  %v1359 = vmax.f32 %v1331, %v1345
  %v1360 = vmax.f32 %v1332, %v1346
  %v1361 = vmax.f32 %v1333, %v1347
  %v1362 = vmax.f32 %v1334, %v1348
  %v1363 = vmax.f32 %v1335, %v1349
  %v1364 = vmax.f32 %v1336, %v1350
  %v1365 = vmax.f32 %v1337, %v1351
  %v1366 = vmax.f32 %v1338, %v1352
  %v1367 = vmax.f32 %v1339, %v1353
  %v1368 = vmax.f32 %v1340, %v1354
  %v1369 = vmax.f32 %v1341, %v1355
  %v1370 = vmax.f32 %v1342, %v1356
  %v1371 = vld [vmem:[%s2] sm:$0xff]
  %v1372 = vld [vmem:[%s2 + $0x8] sm:$0xff]
  %v1373 = vld [vmem:[%s2 + $0x10] sm:$0xff]
  %v1374 = vld [vmem:[%s2 + $0x18] sm:$0xff]
  %v1375 = vld [vmem:[%s2 + $0x20] sm:$0xff]
  %v1376 = vld [vmem:[%s2 + $0x28] sm:$0xff]
  %v1377 = vld [vmem:[%s2 + $0x30] sm:$0xff]
  %v1378 = vld [vmem:[%s2 + $0x38] sm:$0xff]
  %v1379 = vld [vmem:[%s2 + $0x40] sm:$0xff]
  %v1380 = vld [vmem:[%s2 + $0x48] sm:$0xff]
  %v1381 = vld [vmem:[%s2 + $0x50] sm:$0xff]
  %v1382 = vld [vmem:[%s2 + $0x58] sm:$0xff]
  %v1383 = vld [vmem:[%s2 + $0x60] sm:$0xff]
  %v1384 = vld [vmem:[%s2 + $0x68] sm:$0xff]
  %v1385 = vld [vmem:[%s2 + $0x70] sm:$0xff]
  %v1386 = vld [vmem:[%s2 + $0x78] sm:$0xff]
  %v1387 = vld [vmem:[%s2 + $0x80] sm:$0xff]
  %v1388 = vld [vmem:[%s2 + $0x88] sm:$0xff]
  %v1389 = vld [vmem:[%s2 + $0x90] sm:$0xff]
  %v1390 = vld [vmem:[%s2 + $0x98] sm:$0xff]
  %v1391 = vld [vmem:[%s2 + $0xa0] sm:$0xff]
  %v1392 = vld [vmem:[%s2 + $0xa8] sm:$0xff]
  %v1393 = vld [vmem:[%s2 + $0xb0] sm:$0xff]
  %v1394 = vld [vmem:[%s2 + $0xb8] sm:$0xff]
  %v1395 = vld [vmem:[%s2 + $0xc0] sm:$0xff]
  %v1396 = vld [vmem:[%s2 + $0xc8] sm:$0xff]
  %v1397 = vld [vmem:[%s2 + $0xd0] sm:$0xff]
  %v1398 = vld [vmem:[%s2 + $0xd8] sm:$0xff]
  %v1399 = vld [vmem:[%s2 + $0xe0] sm:$0xff]
  %v1400 = vld [vmem:[%s2 + $0xe8] sm:$0xff]
  %v1401 = vld [vmem:[%s2 + $0xf0] sm:$0xff]
  %v1402 = vld [vmem:[%s2 + $0xf8] sm:$0xff]
  %v1403 = vld [vmem:[%s2 + $0x100] sm:$0xff]
  %v1404 = vld [vmem:[%s2 + $0x108] sm:$0xff]
  %v1405 = vld [vmem:[%s2 + $0x110] sm:$0xff]
  %v1406 = vld [vmem:[%s2 + $0x118] sm:$0xff]
  %v1407 = vld [vmem:[%s2 + $0x120] sm:$0xff]
  %v1408 = vld [vmem:[%s2 + $0x128] sm:$0xff]
  %v1409 = vld [vmem:[%s2 + $0x130] sm:$0xff]
  %v1410 = vld [vmem:[%s2 + $0x138] sm:$0xff]
  %v1411 = vld [vmem:[%s2 + $0x140] sm:$0xff]
  %v1412 = vld [vmem:[%s2 + $0x148] sm:$0xff]
  %v1413 = vld [vmem:[%s2 + $0x150] sm:$0xff]
  %v1414 = vld [vmem:[%s2 + $0x158] sm:$0xff]
  %v1415 = vld [vmem:[%s2 + $0x160] sm:$0xff]
  %v1416 = vld [vmem:[%s2 + $0x168] sm:$0xff]
  %v1417 = vld [vmem:[%s2 + $0x170] sm:$0xff]
  %v1418 = vld [vmem:[%s2 + $0x178] sm:$0xff]
  %v1419 = vld [vmem:[%s2 + $0x180] sm:$0xff]
  %v1420 = vld [vmem:[%s2 + $0x188] sm:$0xff]
  %v1421 = vld [vmem:[%s2 + $0x190] sm:$0xff]
  %v1422 = vld [vmem:[%s2 + $0x198] sm:$0xff]
  %v1423 = vld [vmem:[%s2 + $0x1a0] sm:$0xff]
  %v1424 = vld [vmem:[%s2 + $0x1a8] sm:$0xff]
  %v1425 = vld [vmem:[%s2 + $0x1b0] sm:$0xff]
  %v1426 = vld [vmem:[%s2 + $0x1b8] sm:$0xff]
  %v1427 = vld [vmem:[%s2 + $0x1c0] sm:$0xff]
  %v1428 = vld [vmem:[%s2 + $0x1c8] sm:$0xff]
  %v1429 = vld [vmem:[%s2 + $0x1d0] sm:$0xff]
  %v1430 = vld [vmem:[%s2 + $0x1d8] sm:$0xff]
  %v1431 = vld [vmem:[%s2 + $0x1e0] sm:$0xff]
  %v1432 = vld [vmem:[%s2 + $0x1e8] sm:$0xff]
  %v1433 = vld [vmem:[%s2 + $0x1f0] sm:$0xff]
  %v1434 = vld [vmem:[%s2 + $0x1f8] sm:$0xff]
  %v1435 = vld [vmem:[%s2 + $0x200] sm:$0xff]
  %v1436 = vld [vmem:[%s2 + $0x208] sm:$0xff]
  %v1437 = vld [vmem:[%s2 + $0x210] sm:$0xff]
  %v1438 = vld [vmem:[%s2 + $0x218] sm:$0xff]
  %v1439 = vld [vmem:[%s2 + $0x220] sm:$0xff]
  %v1440 = vld [vmem:[%s2 + $0x228] sm:$0xff]
  %v1441 = vld [vmem:[%s2 + $0x230] sm:$0xff]
  %v1442 = vld [vmem:[%s2 + $0x238] sm:$0xff]
  %v1443 = vld [vmem:[%s2 + $0x240] sm:$0xff]
  %v1444 = vld [vmem:[%s2 + $0x248] sm:$0xff]
  %v1445 = vld [vmem:[%s2 + $0x250] sm:$0xff]
  %v1446 = vld [vmem:[%s2 + $0x258] sm:$0xff]
  %v1447 = vld [vmem:[%s2 + $0x260] sm:$0xff]
  %v1448 = vld [vmem:[%s2 + $0x268] sm:$0xff]
  %v1449 = vld [vmem:[%s2 + $0x270] sm:$0xff]
  %v1450 = vld [vmem:[%s2 + $0x278] sm:$0xff]
  %v1451 = vld [vmem:[%s2 + $0x280] sm:$0xff]
  %v1452 = vld [vmem:[%s2 + $0x288] sm:$0xff]
  %v1453 = vld [vmem:[%s2 + $0x290] sm:$0xff]
  %v1454 = vld [vmem:[%s2 + $0x298] sm:$0xff]
  %v1455 = vld [vmem:[%s2 + $0x2a0] sm:$0xff]
  %v1456 = vld [vmem:[%s2 + $0x2a8] sm:$0xff]
  %v1457 = vld [vmem:[%s2 + $0x2b0] sm:$0xff]
  %v1458 = vld [vmem:[%s2 + $0x2b8] sm:$0xff]
  %v1459 = vld [vmem:[%s2 + $0x2c0] sm:$0xff]
  %v1460 = vld [vmem:[%s2 + $0x2c8] sm:$0xff]
  %v1461 = vld [vmem:[%s2 + $0x2d0] sm:$0xff]
  %v1462 = vld [vmem:[%s2 + $0x2d8] sm:$0xff]
  %v1463 = vld [vmem:[%s2 + $0x2e0] sm:$0xff]
  %v1464 = vld [vmem:[%s2 + $0x2e8] sm:$0xff]
  %v1465 = vld [vmem:[%s2 + $0x2f0] sm:$0xff]
  %v1466 = vld [vmem:[%s2 + $0x2f8] sm:$0xff]
  %v1467 = vld [vmem:[%s2 + $0x300] sm:$0xff]
  %v1468 = vld [vmem:[%s2 + $0x308] sm:$0xff]
  %v1469 = vld [vmem:[%s2 + $0x310] sm:$0xff]
  %v1470 = vld [vmem:[%s2 + $0x318] sm:$0xff]
  %v1471 = vld [vmem:[%s2 + $0x320] sm:$0xff]
  %v1472 = vld [vmem:[%s2 + $0x328] sm:$0xff]
  %v1473 = vld [vmem:[%s2 + $0x330] sm:$0xff]
  %v1474 = vld [vmem:[%s2 + $0x338] sm:$0xff]
  %v1475 = vld [vmem:[%s2 + $0x340] sm:$0xff]
  %v1476 = vld [vmem:[%s2 + $0x348] sm:$0xff]
  %v1477 = vld [vmem:[%s2 + $0x350] sm:$0xff]
  %v1478 = vld [vmem:[%s2 + $0x358] sm:$0xff]
  %v1479 = vld [vmem:[%s2 + $0x360] sm:$0xff]
  %v1480 = vld [vmem:[%s2 + $0x368] sm:$0xff]
  %v1481 = vld [vmem:[%s2 + $0x370] sm:$0xff]
  %v1482 = vld [vmem:[%s2 + $0x378] sm:$0xff]
  %v1483 = vld [vmem:[%s2 + $0x380] sm:$0xff]
  %v1484 = vld [vmem:[%s2 + $0x388] sm:$0xff]
  %v1485 = vld [vmem:[%s2 + $0x390] sm:$0xff]
  %v1486 = vld [vmem:[%s2 + $0x398] sm:$0xff]
  %v1487 = vld [vmem:[%s2 + $0x3a0] sm:$0xff]
  %v1488 = vld [vmem:[%s2 + $0x3a8] sm:$0xff]
  %v1489 = vld [vmem:[%s2 + $0x3b0] sm:$0xff]
  %v1490 = vld [vmem:[%s2 + $0x3b8] sm:$0xff]
  %v1491 = vld [vmem:[%s2 + $0x3c0] sm:$0xff]
  %v1492 = vld [vmem:[%s2 + $0x3c8] sm:$0xff]
  %v1493 = vld [vmem:[%s2 + $0x3d0] sm:$0xff]
  %v1494 = vld [vmem:[%s2 + $0x3d8] sm:$0xff]
  %v1495 = vld [vmem:[%s2 + $0x3e0] sm:$0xff]
  %v1496 = vld [vmem:[%s2 + $0x3e8] sm:$0xff]
  %v1497 = vld [vmem:[%s2 + $0x3f0] sm:$0xff]
  %v1498 = vld [vmem:[%s2 + $0x3f8] sm:$0xff]
  %v1499 = vld [vmem:[%s2 + $0x400] sm:$0xff]
  %v1500 = vld [vmem:[%s2 + $0x408] sm:$0xff]
  %v1501 = vld [vmem:[%s2 + $0x410] sm:$0xff]
  %v1502 = vld [vmem:[%s2 + $0x418] sm:$0xff]
  %v1503 = vld [vmem:[%s2 + $0x420] sm:$0xff]
  %v1504 = vld [vmem:[%s2 + $0x428] sm:$0xff]
  %v1505 = vld [vmem:[%s2 + $0x430] sm:$0xff]
  %v1506 = vld [vmem:[%s2 + $0x438] sm:$0xff]
  %v1507 = vld [vmem:[%s2 + $0x440] sm:$0xff]
  %v1508 = vld [vmem:[%s2 + $0x448] sm:$0xff]
  %v1509 = vld [vmem:[%s2 + $0x450] sm:$0xff]
  %v1510 = vld [vmem:[%s2 + $0x458] sm:$0xff]
  %v1511 = vld [vmem:[%s2 + $0x460] sm:$0xff]
  %v1512 = vld [vmem:[%s2 + $0x468] sm:$0xff]
  %v1513 = vld [vmem:[%s2 + $0x470] sm:$0xff]
  %v1514 = vld [vmem:[%s2 + $0x478] sm:$0xff]
  %v1515 = vld [vmem:[%s2 + $0x480] sm:$0xff]
  %v1516 = vld [vmem:[%s2 + $0x488] sm:$0xff]
  %v1517 = vld [vmem:[%s2 + $0x490] sm:$0xff]
  %v1518 = vld [vmem:[%s2 + $0x498] sm:$0xff]
  %v1519 = vld [vmem:[%s2 + $0x4a0] sm:$0xff]
  %v1520 = vld [vmem:[%s2 + $0x4a8] sm:$0xff]
  %v1521 = vld [vmem:[%s2 + $0x4b0] sm:$0xff]
  %v1522 = vld [vmem:[%s2 + $0x4b8] sm:$0xff]
  %v1523 = vld [vmem:[%s2 + $0x4c0] sm:$0xff]
  %v1524 = vld [vmem:[%s2 + $0x4c8] sm:$0xff]
  %v1525 = vld [vmem:[%s2 + $0x4d0] sm:$0xff]
  %v1526 = vld [vmem:[%s2 + $0x4d8] sm:$0xff]
  %v1527 = vld [vmem:[%s2 + $0x4e0] sm:$0xff]
  %v1528 = vld [vmem:[%s2 + $0x4e8] sm:$0xff]
  %v1529 = vld [vmem:[%s2 + $0x4f0] sm:$0xff]
  %v1530 = vld [vmem:[%s2 + $0x4f8] sm:$0xff]
  %s1531 = scalar_lea.vmem %s3, 1
  %v1532 = vld [vmem:[%s1531] ss:$8 sm:$0x3]
  %v1534 = vlaneseq
  %v1535 = vshrl.u32 %v1534, 7
  %v1536 = vsub.s32 0, %v1535
  %v1537 = vrot.slane %v1532, %v1536
  %v1538 = vlaneseq
  %v1539 = vshrl.u32 %v1538, 7
  %v1540 = vsub.s32 1, %v1539
  %v1541 = vrot.slane %v1532, %v1540
  %1544 = vmatprep.subr.mxu0 %v1372
  %1545 = vmatpush1.msra.mxu0 %v1371
  %1546 = vmatprep.subr.mxu0 %v1374
  %1547 = vmatpush1.msra.mxu0 %v1373
  %1548 = vmatprep.subr.mxu0 %v1376
  %1549 = vmatpush1.msra.mxu0 %v1375
  %1550 = vmatprep.subr.mxu0 %v1378
  %1551 = vmatpush1.msra.mxu0 %v1377
  %1552 = vmatprep.subr.mxu0 %v1380
  %1553 = vmatpush1.msra.mxu0 %v1379
  %1554 = vmatprep.subr.mxu0 %v1382
  %1555 = vmatpush1.msra.mxu0 %v1381
  %1556 = vmatprep.subr.mxu0 %v1384
  %1557 = vmatpush1.msra.mxu0 %v1383
  %1558 = vmatprep.subr.mxu0 %v1386
  %1559 = vmatpush1.msra.mxu0 %v1385
  %1560 = vmatprep.subr.mxu0 %v1388
  %1561 = vmatpush1.msra.mxu0 %v1387
  %1562 = vmatprep.subr.mxu0 %v1390
  %1563 = vmatpush1.msra.mxu0 %v1389
  %1564 = vmatprep.subr.mxu0 %v1392
  %1565 = vmatpush1.msra.mxu0 %v1391
  %1566 = vmatprep.subr.mxu0 %v1394
  %1567 = vmatpush1.msra.mxu0 %v1393
  %1568 = vmatprep.subr.mxu0 %v1396
  %1569 = vmatpush1.msra.mxu0 %v1395
  %1570 = vmatprep.subr.mxu0 %v1398
  %1571 = vmatpush1.msra.mxu0 %v1397
  %1572 = vmatprep.subr.mxu0 %v1400
  %1573 = vmatpush1.msra.mxu0 %v1399
  %1574 = vmatprep.subr.mxu0 %v1402
  %1575 = vmatpush1.msra.mxu0 %v1401
  %1576 = vmatprep.subr.mxu0 %v1404
  %1577 = vmatpush1.msra.mxu0 %v1403
  %1578 = vmatprep.subr.mxu0 %v1406
  %1579 = vmatpush1.msra.mxu0 %v1405
  %1580 = vmatprep.subr.mxu0 %v1408
  %1581 = vmatpush1.msra.mxu0 %v1407
  %1582 = vmatprep.subr.mxu0 %v1410
  %1583 = vmatpush1.msra.mxu0 %v1409
  %1584 = vmatprep.subr.mxu0 %v1412
  %1585 = vmatpush1.msra.mxu0 %v1411
  %1586 = vmatprep.subr.mxu0 %v1414
  %1587 = vmatpush1.msra.mxu0 %v1413
  %1588 = vmatprep.subr.mxu0 %v1416
  %1589 = vmatpush1.msra.mxu0 %v1415
  %1590 = vmatprep.subr.mxu0 %v1418
  %1591 = vmatpush1.msra.mxu0 %v1417
  %1592 = vmatprep.subr.mxu0 %v1420
  %1593 = vmatpush1.msra.mxu0 %v1419
  %1594 = vmatprep.subr.mxu0 %v1422
  %1595 = vmatpush1.msra.mxu0 %v1421
  %1596 = vmatprep.subr.mxu0 %v1424
  %1597 = vmatpush1.msra.mxu0 %v1423
  %1598 = vmatprep.subr.mxu0 %v1426
  %1599 = vmatpush1.msra.mxu0 %v1425
  %1600 = vmatprep.subr.mxu0 %v1428
  %1601 = vmatpush1.msra.mxu0 %v1427
  %1602 = vmatprep.subr.mxu0 %v1430
  %1603 = vmatpush1.msra.mxu0 %v1429
  %1604 = vmatprep.subr.mxu0 %v1432
  %1605 = vmatpush1.msra.mxu0 %v1431
  %1606 = vmatprep.subr.mxu0 %v1434
  %1607 = vmatpush1.msra.mxu0 %v1433
  %1608 = vmatprep.mubr.f32.mxu0 %v1364
  %1609 = vmatmul.mubr.f32.gmra.mrb[0].mxu0 %v1357
  %v1610 = vpop.f32.mrb[0].mxu0
  %v1611 = vadd.f32 %v1537, %v1610
  %v1612 = vpop.f32.mrb[0].mxu0
  %v1613 = vadd.f32 %v1541, %v1612
  %1614 = vmatprep.mubr.f32.mxu0 %v1365
  %1615 = vmatmul.mubr.f32.gmra.mrb[0].mxu0 %v1358
  %v1616 = vpop.f32.mrb[0].mxu0
  %v1617 = vadd.f32 %v1537, %v1616
  %v1618 = vpop.f32.mrb[0].mxu0
  %v1619 = vadd.f32 %v1541, %v1618
  %1620 = vmatprep.mubr.f32.mxu0 %v1366
  %1621 = vmatmul.mubr.f32.gmra.mrb[0].mxu0 %v1359
  %v1622 = vpop.f32.mrb[0].mxu0
  %v1623 = vadd.f32 %v1537, %v1622
  %v1624 = vpop.f32.mrb[0].mxu0
  %v1625 = vadd.f32 %v1541, %v1624
  %1626 = vmatprep.mubr.f32.mxu0 %v1367
  %1627 = vmatmul.mubr.f32.gmra.mrb[0].mxu0 %v1360
  %v1628 = vpop.f32.mrb[0].mxu0
  %v1629 = vadd.f32 %v1537, %v1628
  %v1630 = vpop.f32.mrb[0].mxu0
  %v1631 = vadd.f32 %v1541, %v1630
  %1632 = vmatprep.mubr.f32.mxu0 %v1368
  %1633 = vmatmul.mubr.f32.gmra.mrb[0].mxu0 %v1361
  %v1634 = vpop.f32.mrb[0].mxu0
  %v1635 = vadd.f32 %v1537, %v1634
  %v1636 = vpop.f32.mrb[0].mxu0
  %v1637 = vadd.f32 %v1541, %v1636
  %1638 = vmatprep.mubr.f32.mxu0 %v1358
  %1639 = vmatmul.mubr.f32.gmra.mrb[0].mxu0 %v1364
  %v1640 = vpop.f32.mrb[0].mxu0
  %v1641 = vadd.f32 %v1537, %v1640
  %v1642 = vpop.f32.mrb[0].mxu0
  %v1643 = vadd.f32 %v1541, %v1642
  %1644 = vmatprep.mubr.f32.mxu0 %v1359
  %1645 = vmatmul.mubr.f32.gmra.mrb[0].mxu0 %v1365
  %v1646 = vpop.f32.mrb[0].mxu0
  %v1647 = vadd.f32 %v1537, %v1646
  %v1648 = vpop.f32.mrb[0].mxu0
  %v1649 = vadd.f32 %v1541, %v1648
  %1650 = vmatprep.mubr.f32.mxu0 %v1360
  %1651 = vmatmul.mubr.f32.gmra.mrb[0].mxu0 %v1366
  %v1652 = vpop.f32.mrb[0].mxu0
  %v1653 = vadd.f32 %v1537, %v1652
  %v1654 = vpop.f32.mrb[0].mxu0
  %v1655 = vadd.f32 %v1541, %v1654
  %1656 = vmatprep.mubr.f32.mxu0 %v1361
  %1657 = vmatmul.mubr.f32.gmra.mrb[0].mxu0 %v1367
  %v1658 = vpop.f32.mrb[0].mxu0
  %v1659 = vadd.f32 %v1537, %v1658
  %v1660 = vpop.f32.mrb[0].mxu0
  %v1661 = vadd.f32 %v1541, %v1660
  %1662 = vmatprep.mubr.f32.mxu0 %v1362
  %1663 = vmatmul.mubr.f32.gmra.mrb[0].mxu0 %v1368
  %v1664 = vpop.f32.mrb[0].mxu0
  %v1665 = vadd.f32 %v1537, %v1664
  %v1666 = vpop.f32.mrb[0].mxu0
  %v1667 = vadd.f32 %v1541, %v1666
  %1668 = vdwg.mxu0
  %1669 = vmatprep.subr.mxu0 %v1436
  %1670 = vmatpush1.msra.mxu0 %v1435
  %1671 = vmatprep.subr.mxu0 %v1438
  %1672 = vmatpush1.msra.mxu0 %v1437
  %1673 = vmatprep.subr.mxu0 %v1440
  %1674 = vmatpush1.msra.mxu0 %v1439
  %1675 = vmatprep.subr.mxu0 %v1442
  %1676 = vmatpush1.msra.mxu0 %v1441
  %1677 = vmatprep.subr.mxu0 %v1444
  %1678 = vmatpush1.msra.mxu0 %v1443
  %1679 = vmatprep.subr.mxu0 %v1446
  %1680 = vmatpush1.msra.mxu0 %v1445
  %1681 = vmatprep.subr.mxu0 %v1448
  %1682 = vmatpush1.msra.mxu0 %v1447
  %1683 = vmatprep.subr.mxu0 %v1450
  %1684 = vmatpush1.msra.mxu0 %v1449
  %1685 = vmatprep.subr.mxu0 %v1452
  %1686 = vmatpush1.msra.mxu0 %v1451
  %1687 = vmatprep.subr.mxu0 %v1454
  %1688 = vmatpush1.msra.mxu0 %v1453
  %1689 = vmatprep.subr.mxu0 %v1456
  %1690 = vmatpush1.msra.mxu0 %v1455
  %1691 = vmatprep.subr.mxu0 %v1458
  %1692 = vmatpush1.msra.mxu0 %v1457
  %1693 = vmatprep.subr.mxu0 %v1460
  %1694 = vmatpush1.msra.mxu0 %v1459
  %1695 = vmatprep.subr.mxu0 %v1462
  %1696 = vmatpush1.msra.mxu0 %v1461
  %1697 = vmatprep.subr.mxu0 %v1464
  %1698 = vmatpush1.msra.mxu0 %v1463
  %1699 = vmatprep.subr.mxu0 %v1466
  %1700 = vmatpush1.msra.mxu0 %v1465
  %1701 = vmatprep.subr.mxu0 %v1468
  %1702 = vmatpush1.msra.mxu0 %v1467
  %1703 = vmatprep.subr.mxu0 %v1470
  %1704 = vmatpush1.msra.mxu0 %v1469
  %1705 = vmatprep.subr.mxu0 %v1472
  %1706 = vmatpush1.msra.mxu0 %v1471
  %1707 = vmatprep.subr.mxu0 %v1474
  %1708 = vmatpush1.msra.mxu0 %v1473
  %1709 = vmatprep.subr.mxu0 %v1476
  %1710 = vmatpush1.msra.mxu0 %v1475
  %1711 = vmatprep.subr.mxu0 %v1478
  %1712 = vmatpush1.msra.mxu0 %v1477
  %1713 = vmatprep.subr.mxu0 %v1480
  %1714 = vmatpush1.msra.mxu0 %v1479
  %1715 = vmatprep.subr.mxu0 %v1482
  %1716 = vmatpush1.msra.mxu0 %v1481
  %1717 = vmatprep.subr.mxu0 %v1484
  %1718 = vmatpush1.msra.mxu0 %v1483
  %1719 = vmatprep.subr.mxu0 %v1486
  %1720 = vmatpush1.msra.mxu0 %v1485
  %1721 = vmatprep.subr.mxu0 %v1488
  %1722 = vmatpush1.msra.mxu0 %v1487
  %1723 = vmatprep.subr.mxu0 %v1490
  %1724 = vmatpush1.msra.mxu0 %v1489
  %1725 = vmatprep.subr.mxu0 %v1492
  %1726 = vmatpush1.msra.mxu0 %v1491
  %1727 = vmatprep.subr.mxu0 %v1494
  %1728 = vmatpush1.msra.mxu0 %v1493
  %1729 = vmatprep.subr.mxu0 %v1496
  %1730 = vmatpush1.msra.mxu0 %v1495
  %1731 = vmatprep.subr.mxu0 %v1498
  %1732 = vmatpush1.msra.mxu0 %v1497
  %1733 = vmatprep.mubr.f32.mxu0 %v1365
  %1734 = vmatmul.mubr.f32.gmra.mrb[0].mxu0 %v1358
  %v1735 = vpop.f32.mrb[0].mxu0
  %v1736 = vadd.f32 %v1611, %v1735
  %v1737 = vpop.f32.mrb[0].mxu0
  %v1738 = vadd.f32 %v1613, %v1737
  %1739 = vmatprep.mubr.f32.mxu0 %v1366
  %1740 = vmatmul.mubr.f32.gmra.mrb[0].mxu0 %v1359
  %v1741 = vpop.f32.mrb[0].mxu0
  %v1742 = vadd.f32 %v1617, %v1741
  %v1743 = vpop.f32.mrb[0].mxu0
  %v1744 = vadd.f32 %v1619, %v1743
  %1745 = vmatprep.mubr.f32.mxu0 %v1367
  %1746 = vmatmul.mubr.f32.gmra.mrb[0].mxu0 %v1360
  %v1747 = vpop.f32.mrb[0].mxu0
  %v1748 = vadd.f32 %v1623, %v1747
  %v1749 = vpop.f32.mrb[0].mxu0
  %v1750 = vadd.f32 %v1625, %v1749
  %1751 = vmatprep.mubr.f32.mxu0 %v1368
  %1752 = vmatmul.mubr.f32.gmra.mrb[0].mxu0 %v1361
  %v1753 = vpop.f32.mrb[0].mxu0
  %v1754 = vadd.f32 %v1629, %v1753
  %v1755 = vpop.f32.mrb[0].mxu0
  %v1756 = vadd.f32 %v1631, %v1755
  %1757 = vmatprep.mubr.f32.mxu0 %v1369
  %1758 = vmatmul.mubr.f32.gmra.mrb[0].mxu0 %v1362
  %v1759 = vpop.f32.mrb[0].mxu0
  %v1760 = vadd.f32 %v1635, %v1759
  %v1761 = vpop.f32.mrb[0].mxu0
  %v1762 = vadd.f32 %v1637, %v1761
  %1763 = vmatprep.mubr.f32.mxu0 %v1359
  %1764 = vmatmul.mubr.f32.gmra.mrb[0].mxu0 %v1365
  %v1765 = vpop.f32.mrb[0].mxu0
  %v1766 = vadd.f32 %v1641, %v1765
  %v1767 = vpop.f32.mrb[0].mxu0
  %v1768 = vadd.f32 %v1643, %v1767
  %1769 = vmatprep.mubr.f32.mxu0 %v1360
  %1770 = vmatmul.mubr.f32.gmra.mrb[0].mxu0 %v1366
  %v1771 = vpop.f32.mrb[0].mxu0
  %v1772 = vadd.f32 %v1647, %v1771
  %v1773 = vpop.f32.mrb[0].mxu0
  %v1774 = vadd.f32 %v1649, %v1773
  %1775 = vmatprep.mubr.f32.mxu0 %v1361
  %1776 = vmatmul.mubr.f32.gmra.mrb[0].mxu0 %v1367
  %v1777 = vpop.f32.mrb[0].mxu0
  %v1778 = vadd.f32 %v1653, %v1777
  %v1779 = vpop.f32.mrb[0].mxu0
  %v1780 = vadd.f32 %v1655, %v1779
  %1781 = vmatprep.mubr.f32.mxu0 %v1362
  %1782 = vmatmul.mubr.f32.gmra.mrb[0].mxu0 %v1368
  %v1783 = vpop.f32.mrb[0].mxu0
  %v1784 = vadd.f32 %v1659, %v1783
  %v1785 = vpop.f32.mrb[0].mxu0
  %v1786 = vadd.f32 %v1661, %v1785
  %1787 = vmatprep.mubr.f32.mxu0 %v1363
  %1788 = vmatmul.mubr.f32.gmra.mrb[0].mxu0 %v1369
  %v1789 = vpop.f32.mrb[0].mxu0
  %v1790 = vadd.f32 %v1665, %v1789
  %v1791 = vpop.f32.mrb[0].mxu0
  %v1792 = vadd.f32 %v1667, %v1791
  %1793 = vdwg.mxu0
  %1794 = vmatprep.subr.mxu0 %v1500
  %1795 = vmatpush1.msra.mxu0 %v1499
  %1796 = vmatprep.subr.mxu0 %v1502
  %1797 = vmatpush1.msra.mxu0 %v1501
  %1798 = vmatprep.subr.mxu0 %v1504
  %1799 = vmatpush1.msra.mxu0 %v1503
  %1800 = vmatprep.subr.mxu0 %v1506
  %1801 = vmatpush1.msra.mxu0 %v1505
  %1802 = vmatprep.subr.mxu0 %v1508
  %1803 = vmatpush1.msra.mxu0 %v1507
  %1804 = vmatprep.subr.mxu0 %v1510
  %1805 = vmatpush1.msra.mxu0 %v1509
  %1806 = vmatprep.subr.mxu0 %v1512
  %1807 = vmatpush1.msra.mxu0 %v1511
  %1808 = vmatprep.subr.mxu0 %v1514
  %1809 = vmatpush1.msra.mxu0 %v1513
  %1810 = vmatprep.subr.mxu0 %v1516
  %1811 = vmatpush1.msra.mxu0 %v1515
  %1812 = vmatprep.subr.mxu0 %v1518
  %1813 = vmatpush1.msra.mxu0 %v1517
  %1814 = vmatprep.subr.mxu0 %v1520
  %1815 = vmatpush1.msra.mxu0 %v1519
  %1816 = vmatprep.subr.mxu0 %v1522
  %1817 = vmatpush1.msra.mxu0 %v1521
  %1818 = vmatprep.subr.mxu0 %v1524
  %1819 = vmatpush1.msra.mxu0 %v1523
  %1820 = vmatprep.subr.mxu0 %v1526
  %1821 = vmatpush1.msra.mxu0 %v1525
  %1822 = vmatprep.subr.mxu0 %v1528
  %1823 = vmatpush1.msra.mxu0 %v1527
  %1824 = vmatprep.subr.mxu0 %v1530
  %1825 = vmatpush1.msra.mxu0 %v1529
  %1826 = vmatprep.subr.mxu0 0.0
  %1827 = vmatpush1.msra.mxu0 0.0
  %1828 = vmatprep.subr.mxu0 0.0
  %1829 = vmatpush1.msra.mxu0 0.0
  %1830 = vmatprep.subr.mxu0 0.0
  %1831 = vmatpush1.msra.mxu0 0.0
  %1832 = vmatprep.subr.mxu0 0.0
  %1833 = vmatpush1.msra.mxu0 0.0
  %1834 = vmatprep.subr.mxu0 0.0
  %1835 = vmatpush1.msra.mxu0 0.0
  %1836 = vmatprep.subr.mxu0 0.0
  %1837 = vmatpush1.msra.mxu0 0.0
  %1838 = vmatprep.subr.mxu0 0.0
  %1839 = vmatpush1.msra.mxu0 0.0
  %1840 = vmatprep.subr.mxu0 0.0
  %1841 = vmatpush1.msra.mxu0 0.0
  %1842 = vmatprep.subr.mxu0 0.0
  %1843 = vmatpush1.msra.mxu0 0.0
  %1844 = vmatprep.subr.mxu0 0.0
  %1845 = vmatpush1.msra.mxu0 0.0
  %1846 = vmatprep.subr.mxu0 0.0
  %1847 = vmatpush1.msra.mxu0 0.0
  %1848 = vmatprep.subr.mxu0 0.0
  %1849 = vmatpush1.msra.mxu0 0.0
  %1850 = vmatprep.subr.mxu0 0.0
  %1851 = vmatpush1.msra.mxu0 0.0
  %1852 = vmatprep.subr.mxu0 0.0
  %1853 = vmatpush1.msra.mxu0 0.0
  %1854 = vmatprep.subr.mxu0 0.0
  %1855 = vmatpush1.msra.mxu0 0.0
  %1856 = vmatprep.subr.mxu0 0.0
  %1857 = vmatpush1.msra.mxu0 0.0
  %1858 = vmatprep.mubr.f32.mxu0 0.0
  %1859 = vmatmul.mubr.f32.gmra.mrb[0].mxu0 %v1359
  %v1860 = vpop.f32.mrb[0].mxu0
  %v1861 = vadd.f32 %v1736, %v1860
  %v1862 = vpop.f32.mrb[0].mxu0
  %v1863 = vadd.f32 %v1738, %v1862
  %1864 = vmatprep.mubr.f32.mxu0 0.0
  %1865 = vmatmul.mubr.f32.gmra.mrb[0].mxu0 %v1360
  %v1866 = vpop.f32.mrb[0].mxu0
  %v1867 = vadd.f32 %v1742, %v1866
  %v1868 = vpop.f32.mrb[0].mxu0
  %v1869 = vadd.f32 %v1744, %v1868
  %1870 = vmatprep.mubr.f32.mxu0 0.0
  %1871 = vmatmul.mubr.f32.gmra.mrb[0].mxu0 %v1361
  %v1872 = vpop.f32.mrb[0].mxu0
  %v1873 = vadd.f32 %v1748, %v1872
  %v1874 = vpop.f32.mrb[0].mxu0
  %v1875 = vadd.f32 %v1750, %v1874
  %1876 = vmatprep.mubr.f32.mxu0 0.0
  %1877 = vmatmul.mubr.f32.gmra.mrb[0].mxu0 %v1362
  %v1878 = vpop.f32.mrb[0].mxu0
  %v1879 = vadd.f32 %v1754, %v1878
  %v1880 = vpop.f32.mrb[0].mxu0
  %v1881 = vadd.f32 %v1756, %v1880
  %1882 = vmatprep.mubr.f32.mxu0 0.0
  %1883 = vmatmul.mubr.f32.gmra.mrb[0].mxu0 %v1363
  %v1884 = vpop.f32.mrb[0].mxu0
  %v1885 = vadd.f32 %v1760, %v1884
  %v1886 = vpop.f32.mrb[0].mxu0
  %v1887 = vadd.f32 %v1762, %v1886
  %1888 = vmatprep.mubr.f32.mxu0 0.0
  %1889 = vmatmul.mubr.f32.gmra.mrb[0].mxu0 %v1366
  %v1890 = vpop.f32.mrb[0].mxu0
  %v1891 = vadd.f32 %v1766, %v1890
  %v1892 = vpop.f32.mrb[0].mxu0
  %v1893 = vadd.f32 %v1768, %v1892
  %1894 = vmatprep.mubr.f32.mxu0 0.0
  %1895 = vmatmul.mubr.f32.gmra.mrb[0].mxu0 %v1367
  %v1896 = vpop.f32.mrb[0].mxu0
  %v1897 = vadd.f32 %v1772, %v1896
  %v1898 = vpop.f32.mrb[0].mxu0
  %v1899 = vadd.f32 %v1774, %v1898
  %1900 = vmatprep.mubr.f32.mxu0 0.0
  %1901 = vmatmul.mubr.f32.gmra.mrb[0].mxu0 %v1368
  %v1902 = vpop.f32.mrb[0].mxu0
  %v1903 = vadd.f32 %v1778, %v1902
  %v1904 = vpop.f32.mrb[0].mxu0
  %v1905 = vadd.f32 %v1780, %v1904
  %1906 = vmatprep.mubr.f32.mxu0 0.0
  %1907 = vmatmul.mubr.f32.gmra.mrb[0].mxu0 %v1369
  %v1908 = vpop.f32.mrb[0].mxu0
  %v1909 = vadd.f32 %v1784, %v1908
  %v1910 = vpop.f32.mrb[0].mxu0
  %v1911 = vadd.f32 %v1786, %v1910
  %1912 = vmatprep.mubr.f32.mxu0 0.0
  %1913 = vmatmul.mubr.f32.gmra.mrb[0].mxu0 %v1370
  %v1914 = vpop.f32.mrb[0].mxu0
  %v1915 = vadd.f32 %v1790, %v1914
  %v1916 = vpop.f32.mrb[0].mxu0
  %v1917 = vadd.f32 %v1792, %v1916
  %1918 = vdwg.mxu0
  %v1919 = vmax.f32 %v1861, 0.0
  %v1920 = vmax.f32 %v1863, 0.0
  %v1921 = vmax.f32 %v1867, 0.0
  %v1922 = vmax.f32 %v1869, 0.0
  %v1923 = vmax.f32 %v1873, 0.0
  %v1924 = vmax.f32 %v1875, 0.0
  %v1925 = vmax.f32 %v1879, 0.0
  %v1926 = vmax.f32 %v1881, 0.0
  %v1927 = vmax.f32 %v1885, 0.0
  %v1928 = vmax.f32 %v1887, 0.0
  %v1929 = vmax.f32 %v1891, 0.0
  %v1930 = vmax.f32 %v1893, 0.0
  %v1931 = vmax.f32 %v1897, 0.0
  %v1932 = vmax.f32 %v1899, 0.0
  %v1933 = vmax.f32 %v1903, 0.0
  %v1934 = vmax.f32 %v1905, 0.0
  %v1935 = vmax.f32 %v1909, 0.0
  %v1936 = vmax.f32 %v1911, 0.0
  %v1937 = vmax.f32 %v1915, 0.0
  %v1938 = vmax.f32 %v1917, 0.0
  %v1939 = vmax.f32 %v1919, %v1920
  %v1940 = vmax.f32 %v1921, %v1922
  %v1941 = vmax.f32 %v1923, %v1924
  %v1942 = vmax.f32 %v1925, %v1926
  %v1943 = vmax.f32 %v1927, %v1928
  %v1944 = vmax.f32 %v1929, %v1930
  %v1945 = vmax.f32 %v1931, %v1932
  %v1946 = vmax.f32 %v1933, %v1934
  %v1947 = vmax.f32 %v1935, %v1936
  %v1948 = vmax.f32 %v1937, %v1938
  %v1949 = vmax.f32 %v1939, %v1944
  %v1950 = vmax.f32 %v1940, %v1945
  %v1951 = vmax.f32 %v1941, %v1946
  %v1952 = vmax.f32 %v1942, %v1947
  %v1953 = vmax.f32 %v1943, %v1948
  %s1954 = smul.u32 640, 1
  %s1955 = sshll.u32 %s1954, 4
  %1956 = dma.done [#allocation8], %s1955
  %s1957 = sshll.u32 %s1954, 4
  %1958 = dma.done %s232, %s1957
  %s1959 = sshll.u32 %s1954, 4
  %1960 = dma.done %s433, %s1959
  %v1961 = vld [vmem:[#allocation2] sm:$0xff]
  %v1962 = vld [vmem:[#allocation2 + $0x8] sm:$0xff]
  %v1963 = vld [vmem:[#allocation2 + $0x10] sm:$0xff]
  %v1964 = vld [vmem:[#allocation2 + $0x18] sm:$0xff]
  %v1965 = vld [vmem:[#allocation2 + $0x20] sm:$0xff]
  %v1966 = vld [vmem:[#allocation2 + $0x28] sm:$0xff]
  %v1967 = vld [vmem:[#allocation2 + $0x30] sm:$0xff]
  %v1968 = vld [vmem:[#allocation2 + $0x38] sm:$0xff]
  %v1969 = vld [vmem:[#allocation2 + $0x40] sm:$0xff]
  %v1970 = vld [vmem:[#allocation2 + $0x48] sm:$0xff]
  %v1971 = vld [vmem:[#allocation2 + $0x50] sm:$0xff]
  %v1972 = vld [vmem:[#allocation2 + $0x58] sm:$0xff]
  %v1973 = vld [vmem:[#allocation2 + $0x60] sm:$0xff]
  %v1974 = vld [vmem:[#allocation2 + $0x68] sm:$0xff]
  %v1975 = vld [vmem:[#allocation2 + $0x70] sm:$0xff]
  %v1976 = vld [vmem:[#allocation2 + $0x78] sm:$0xff]
  %v1977 = vld [vmem:[#allocation2 + $0x80] sm:$0xff]
  %v1978 = vld [vmem:[#allocation2 + $0x88] sm:$0xff]
  %v1979 = vld [vmem:[#allocation2 + $0x90] sm:$0xff]
  %v1980 = vld [vmem:[#allocation2 + $0x98] sm:$0xff]
  %v1981 = vld [vmem:[#allocation2 + $0xa0] sm:$0xff]
  %v1982 = vld [vmem:[#allocation2 + $0xa8] sm:$0xff]
  %v1983 = vld [vmem:[#allocation2 + $0xb0] sm:$0xff]
  %v1984 = vld [vmem:[#allocation2 + $0xb8] sm:$0xff]
  %v1985 = vld [vmem:[#allocation2 + $0xc0] sm:$0xff]
  %v1986 = vld [vmem:[#allocation2 + $0xc8] sm:$0xff]
  %v1987 = vld [vmem:[#allocation2 + $0xd0] sm:$0xff]
  %v1988 = vld [vmem:[#allocation2 + $0xd8] sm:$0xff]
  %v1989 = vld [vmem:[#allocation2 + $0xe0] sm:$0xff]
  %v1990 = vld [vmem:[#allocation2 + $0xe8] sm:$0xff]
  %v1991 = vld [vmem:[#allocation2 + $0xf0] sm:$0xff]
  %v1992 = vld [vmem:[#allocation2 + $0xf8] sm:$0xff]
  %v1993 = vld [vmem:[#allocation2 + $0x100] sm:$0xff]
  %v1994 = vld [vmem:[#allocation2 + $0x108] sm:$0xff]
  %v1995 = vld [vmem:[#allocation2 + $0x110] sm:$0xff]
  %v1996 = vld [vmem:[#allocation2 + $0x118] sm:$0xff]
  %v1997 = vld [vmem:[#allocation2 + $0x120] sm:$0xff]
  %v1998 = vld [vmem:[#allocation2 + $0x128] sm:$0xff]
  %v1999 = vld [vmem:[#allocation2 + $0x130] sm:$0xff]
  %v2000 = vld [vmem:[#allocation2 + $0x138] sm:$0xff]
  %v2001 = vld [vmem:[#allocation2 + $0x140] sm:$0xff]
  %v2002 = vld [vmem:[#allocation2 + $0x148] sm:$0xff]
  %v2003 = vld [vmem:[#allocation2 + $0x150] sm:$0xff]
  %v2004 = vld [vmem:[#allocation2 + $0x158] sm:$0xff]
  %v2005 = vld [vmem:[#allocation2 + $0x160] sm:$0xff]
  %v2006 = vld [vmem:[#allocation2 + $0x168] sm:$0xff]
  %v2007 = vld [vmem:[#allocation2 + $0x170] sm:$0xff]
  %v2008 = vld [vmem:[#allocation2 + $0x178] sm:$0xff]
  %v2009 = vld [vmem:[#allocation2 + $0x180] sm:$0xff]
  %v2010 = vld [vmem:[#allocation2 + $0x188] sm:$0xff]
  %v2011 = vld [vmem:[#allocation2 + $0x190] sm:$0xff]
  %v2012 = vld [vmem:[#allocation2 + $0x198] sm:$0xff]
  %v2013 = vld [vmem:[#allocation2 + $0x1a0] sm:$0xff]
  %v2014 = vld [vmem:[#allocation2 + $0x1a8] sm:$0xff]
  %v2015 = vld [vmem:[#allocation2 + $0x1b0] sm:$0xff]
  %v2016 = vld [vmem:[#allocation2 + $0x1b8] sm:$0xff]
  %v2017 = vld [vmem:[#allocation2 + $0x1c0] sm:$0xff]
  %v2018 = vld [vmem:[#allocation2 + $0x1c8] sm:$0xff]
  %v2019 = vld [vmem:[#allocation2 + $0x1d0] sm:$0xff]
  %v2020 = vld [vmem:[#allocation2 + $0x1d8] sm:$0xff]
  %v2021 = vld [vmem:[#allocation2 + $0x1e0] sm:$0xff]
  %v2022 = vld [vmem:[#allocation2 + $0x1e8] sm:$0xff]
  %v2023 = vld [vmem:[#allocation2 + $0x1f0] sm:$0xff]
  %v2024 = vld [vmem:[#allocation2 + $0x1f8] sm:$0xff]
  %v2025 = vld [vmem:[#allocation2 + $0x200] sm:$0xff]
  %v2026 = vld [vmem:[#allocation2 + $0x208] sm:$0xff]
  %v2027 = vld [vmem:[#allocation2 + $0x210] sm:$0xff]
  %v2028 = vld [vmem:[#allocation2 + $0x218] sm:$0xff]
  %v2029 = vld [vmem:[#allocation2 + $0x220] sm:$0xff]
  %v2030 = vld [vmem:[#allocation2 + $0x228] sm:$0xff]
  %v2031 = vld [vmem:[#allocation2 + $0x230] sm:$0xff]
  %v2032 = vld [vmem:[#allocation2 + $0x238] sm:$0xff]
  %v2033 = vld [vmem:[#allocation2 + $0x240] sm:$0xff]
  %v2034 = vld [vmem:[#allocation2 + $0x248] sm:$0xff]
  %v2035 = vld [vmem:[#allocation2 + $0x250] sm:$0xff]
  %v2036 = vld [vmem:[#allocation2 + $0x258] sm:$0xff]
  %v2037 = vld [vmem:[#allocation2 + $0x260] sm:$0xff]
  %v2038 = vld [vmem:[#allocation2 + $0x268] sm:$0xff]
  %v2039 = vld [vmem:[#allocation2 + $0x270] sm:$0xff]
  %v2040 = vld [vmem:[#allocation2 + $0x278] sm:$0xff]
  %v2041 = vld [vmem:[#allocation3] sm:$0xff]
  %v2042 = vld [vmem:[#allocation3 + $0x8] sm:$0xff]
  %v2043 = vld [vmem:[#allocation3 + $0x10] sm:$0xff]
  %v2044 = vld [vmem:[#allocation3 + $0x18] sm:$0xff]
  %v2045 = vld [vmem:[#allocation3 + $0x20] sm:$0xff]
  %v2046 = vld [vmem:[#allocation3 + $0x28] sm:$0xff]
  %v2047 = vld [vmem:[#allocation3 + $0x30] sm:$0xff]
  %v2048 = vld [vmem:[#allocation3 + $0x38] sm:$0xff]
  %v2049 = vld [vmem:[#allocation3 + $0x40] sm:$0xff]
  %v2050 = vld [vmem:[#allocation3 + $0x48] sm:$0xff]
  %v2051 = vld [vmem:[#allocation3 + $0x50] sm:$0xff]
  %v2052 = vld [vmem:[#allocation3 + $0x58] sm:$0xff]
  %v2053 = vld [vmem:[#allocation3 + $0x60] sm:$0xff]
  %v2054 = vld [vmem:[#allocation3 + $0x68] sm:$0xff]
  %v2055 = vld [vmem:[#allocation3 + $0x70] sm:$0xff]
  %v2056 = vld [vmem:[#allocation3 + $0x78] sm:$0xff]
  %v2057 = vld [vmem:[#allocation3 + $0x80] sm:$0xff]
  %v2058 = vld [vmem:[#allocation3 + $0x88] sm:$0xff]
  %v2059 = vld [vmem:[#allocation3 + $0x90] sm:$0xff]
  %v2060 = vld [vmem:[#allocation3 + $0x98] sm:$0xff]
  %v2061 = vld [vmem:[#allocation3 + $0xa0] sm:$0xff]
  %v2062 = vld [vmem:[#allocation3 + $0xa8] sm:$0xff]
  %v2063 = vld [vmem:[#allocation3 + $0xb0] sm:$0xff]
  %v2064 = vld [vmem:[#allocation3 + $0xb8] sm:$0xff]
  %v2065 = vld [vmem:[#allocation3 + $0xc0] sm:$0xff]
  %v2066 = vld [vmem:[#allocation3 + $0xc8] sm:$0xff]
  %v2067 = vld [vmem:[#allocation3 + $0xd0] sm:$0xff]
  %v2068 = vld [vmem:[#allocation3 + $0xd8] sm:$0xff]
  %v2069 = vld [vmem:[#allocation3 + $0xe0] sm:$0xff]
  %v2070 = vld [vmem:[#allocation3 + $0xe8] sm:$0xff]
  %v2071 = vld [vmem:[#allocation3 + $0xf0] sm:$0xff]
  %v2072 = vld [vmem:[#allocation3 + $0xf8] sm:$0xff]
  %v2073 = vld [vmem:[#allocation3 + $0x100] sm:$0xff]
  %v2074 = vld [vmem:[#allocation3 + $0x108] sm:$0xff]
  %v2075 = vld [vmem:[#allocation3 + $0x110] sm:$0xff]
  %v2076 = vld [vmem:[#allocation3 + $0x118] sm:$0xff]
  %v2077 = vld [vmem:[#allocation3 + $0x120] sm:$0xff]
  %v2078 = vld [vmem:[#allocation3 + $0x128] sm:$0xff]
  %v2079 = vld [vmem:[#allocation3 + $0x130] sm:$0xff]
  %v2080 = vld [vmem:[#allocation3 + $0x138] sm:$0xff]
  %v2081 = vld [vmem:[#allocation3 + $0x140] sm:$0xff]
  %v2082 = vld [vmem:[#allocation3 + $0x148] sm:$0xff]
  %v2083 = vld [vmem:[#allocation3 + $0x150] sm:$0xff]
  %v2084 = vld [vmem:[#allocation3 + $0x158] sm:$0xff]
  %v2085 = vld [vmem:[#allocation3 + $0x160] sm:$0xff]
  %v2086 = vld [vmem:[#allocation3 + $0x168] sm:$0xff]
  %v2087 = vld [vmem:[#allocation3 + $0x170] sm:$0xff]
  %v2088 = vld [vmem:[#allocation3 + $0x178] sm:$0xff]
  %v2089 = vld [vmem:[#allocation3 + $0x180] sm:$0xff]
  %v2090 = vld [vmem:[#allocation3 + $0x188] sm:$0xff]
  %v2091 = vld [vmem:[#allocation3 + $0x190] sm:$0xff]
  %v2092 = vld [vmem:[#allocation3 + $0x198] sm:$0xff]
  %v2093 = vld [vmem:[#allocation3 + $0x1a0] sm:$0xff]
  %v2094 = vld [vmem:[#allocation3 + $0x1a8] sm:$0xff]
  %v2095 = vld [vmem:[#allocation3 + $0x1b0] sm:$0xff]
  %v2096 = vld [vmem:[#allocation3 + $0x1b8] sm:$0xff]
  %v2097 = vld [vmem:[#allocation3 + $0x1c0] sm:$0xff]
  %v2098 = vld [vmem:[#allocation3 + $0x1c8] sm:$0xff]
  %v2099 = vld [vmem:[#allocation3 + $0x1d0] sm:$0xff]
  %v2100 = vld [vmem:[#allocation3 + $0x1d8] sm:$0xff]
  %v2101 = vld [vmem:[#allocation3 + $0x1e0] sm:$0xff]
  %v2102 = vld [vmem:[#allocation3 + $0x1e8] sm:$0xff]
  %v2103 = vld [vmem:[#allocation3 + $0x1f0] sm:$0xff]
  %v2104 = vld [vmem:[#allocation3 + $0x1f8] sm:$0xff]
  %v2105 = vld [vmem:[#allocation3 + $0x200] sm:$0xff]
  %v2106 = vld [vmem:[#allocation3 + $0x208] sm:$0xff]
  %v2107 = vld [vmem:[#allocation3 + $0x210] sm:$0xff]
  %v2108 = vld [vmem:[#allocation3 + $0x218] sm:$0xff]
  %v2109 = vld [vmem:[#allocation3 + $0x220] sm:$0xff]
  %v2110 = vld [vmem:[#allocation3 + $0x228] sm:$0xff]
  %v2111 = vld [vmem:[#allocation3 + $0x230] sm:$0xff]
  %v2112 = vld [vmem:[#allocation3 + $0x238] sm:$0xff]
  %v2113 = vld [vmem:[#allocation3 + $0x240] sm:$0xff]
  %v2114 = vld [vmem:[#allocation3 + $0x248] sm:$0xff]
  %v2115 = vld [vmem:[#allocation3 + $0x250] sm:$0xff]
  %v2116 = vld [vmem:[#allocation3 + $0x258] sm:$0xff]
  %v2117 = vld [vmem:[#allocation3 + $0x260] sm:$0xff]
  %v2118 = vld [vmem:[#allocation3 + $0x268] sm:$0xff]
  %v2119 = vld [vmem:[#allocation3 + $0x270] sm:$0xff]
  %v2120 = vld [vmem:[#allocation3 + $0x278] sm:$0xff]
  %v2121 = vld [vmem:[#allocation4] sm:$0xff]
  %v2122 = vld [vmem:[#allocation4 + $0x8] sm:$0xff]
  %v2123 = vld [vmem:[#allocation4 + $0x10] sm:$0xff]
  %v2124 = vld [vmem:[#allocation4 + $0x18] sm:$0xff]
  %v2125 = vld [vmem:[#allocation4 + $0x20] sm:$0xff]
  %v2126 = vld [vmem:[#allocation4 + $0x28] sm:$0xff]
  %v2127 = vld [vmem:[#allocation4 + $0x30] sm:$0xff]
  %v2128 = vld [vmem:[#allocation4 + $0x38] sm:$0xff]
  %v2129 = vld [vmem:[#allocation4 + $0x40] sm:$0xff]
  %v2130 = vld [vmem:[#allocation4 + $0x48] sm:$0xff]
  %v2131 = vld [vmem:[#allocation4 + $0x50] sm:$0xff]
  %v2132 = vld [vmem:[#allocation4 + $0x58] sm:$0xff]
  %v2133 = vld [vmem:[#allocation4 + $0x60] sm:$0xff]
  %v2134 = vld [vmem:[#allocation4 + $0x68] sm:$0xff]
  %v2135 = vld [vmem:[#allocation4 + $0x70] sm:$0xff]
  %v2136 = vld [vmem:[#allocation4 + $0x78] sm:$0xff]
  %v2137 = vld [vmem:[#allocation4 + $0x80] sm:$0xff]
  %v2138 = vld [vmem:[#allocation4 + $0x88] sm:$0xff]
  %v2139 = vld [vmem:[#allocation4 + $0x90] sm:$0xff]
  %v2140 = vld [vmem:[#allocation4 + $0x98] sm:$0xff]
  %v2141 = vld [vmem:[#allocation4 + $0xa0] sm:$0xff]
  %v2142 = vld [vmem:[#allocation4 + $0xa8] sm:$0xff]
  %v2143 = vld [vmem:[#allocation4 + $0xb0] sm:$0xff]
  %v2144 = vld [vmem:[#allocation4 + $0xb8] sm:$0xff]
  %v2145 = vld [vmem:[#allocation4 + $0xc0] sm:$0xff]
  %v2146 = vld [vmem:[#allocation4 + $0xc8] sm:$0xff]
  %v2147 = vld [vmem:[#allocation4 + $0xd0] sm:$0xff]
  %v2148 = vld [vmem:[#allocation4 + $0xd8] sm:$0xff]
  %v2149 = vld [vmem:[#allocation4 + $0xe0] sm:$0xff]
  %v2150 = vld [vmem:[#allocation4 + $0xe8] sm:$0xff]
  %v2151 = vld [vmem:[#allocation4 + $0xf0] sm:$0xff]
  %v2152 = vld [vmem:[#allocation4 + $0xf8] sm:$0xff]
  %v2153 = vld [vmem:[#allocation4 + $0x100] sm:$0xff]
  %v2154 = vld [vmem:[#allocation4 + $0x108] sm:$0xff]
  %v2155 = vld [vmem:[#allocation4 + $0x110] sm:$0xff]
  %v2156 = vld [vmem:[#allocation4 + $0x118] sm:$0xff]
  %v2157 = vld [vmem:[#allocation4 + $0x120] sm:$0xff]
  %v2158 = vld [vmem:[#allocation4 + $0x128] sm:$0xff]
  %v2159 = vld [vmem:[#allocation4 + $0x130] sm:$0xff]
  %v2160 = vld [vmem:[#allocation4 + $0x138] sm:$0xff]
  %v2161 = vld [vmem:[#allocation4 + $0x140] sm:$0xff]
  %v2162 = vld [vmem:[#allocation4 + $0x148] sm:$0xff]
  %v2163 = vld [vmem:[#allocation4 + $0x150] sm:$0xff]
  %v2164 = vld [vmem:[#allocation4 + $0x158] sm:$0xff]
  %v2165 = vld [vmem:[#allocation4 + $0x160] sm:$0xff]
  %v2166 = vld [vmem:[#allocation4 + $0x168] sm:$0xff]
  %v2167 = vld [vmem:[#allocation4 + $0x170] sm:$0xff]
  %v2168 = vld [vmem:[#allocation4 + $0x178] sm:$0xff]
  %v2169 = vld [vmem:[#allocation4 + $0x180] sm:$0xff]
  %v2170 = vld [vmem:[#allocation4 + $0x188] sm:$0xff]
  %v2171 = vld [vmem:[#allocation4 + $0x190] sm:$0xff]
  %v2172 = vld [vmem:[#allocation4 + $0x198] sm:$0xff]
  %v2173 = vld [vmem:[#allocation4 + $0x1a0] sm:$0xff]
  %v2174 = vld [vmem:[#allocation4 + $0x1a8] sm:$0xff]
  %v2175 = vld [vmem:[#allocation4 + $0x1b0] sm:$0xff]
  %v2176 = vld [vmem:[#allocation4 + $0x1b8] sm:$0xff]
  %v2177 = vld [vmem:[#allocation4 + $0x1c0] sm:$0xff]
  %v2178 = vld [vmem:[#allocation4 + $0x1c8] sm:$0xff]
  %v2179 = vld [vmem:[#allocation4 + $0x1d0] sm:$0xff]
  %v2180 = vld [vmem:[#allocation4 + $0x1d8] sm:$0xff]
  %v2181 = vld [vmem:[#allocation4 + $0x1e0] sm:$0xff]
  %v2182 = vld [vmem:[#allocation4 + $0x1e8] sm:$0xff]
  %v2183 = vld [vmem:[#allocation4 + $0x1f0] sm:$0xff]
  %v2184 = vld [vmem:[#allocation4 + $0x1f8] sm:$0xff]
  %v2185 = vld [vmem:[#allocation4 + $0x200] sm:$0xff]
  %v2186 = vld [vmem:[#allocation4 + $0x208] sm:$0xff]
  %v2187 = vld [vmem:[#allocation4 + $0x210] sm:$0xff]
  %v2188 = vld [vmem:[#allocation4 + $0x218] sm:$0xff]
  %v2189 = vld [vmem:[#allocation4 + $0x220] sm:$0xff]
  %v2190 = vld [vmem:[#allocation4 + $0x228] sm:$0xff]
  %v2191 = vld [vmem:[#allocation4 + $0x230] sm:$0xff]
  %v2192 = vld [vmem:[#allocation4 + $0x238] sm:$0xff]
  %v2193 = vld [vmem:[#allocation4 + $0x240] sm:$0xff]
  %v2194 = vld [vmem:[#allocation4 + $0x248] sm:$0xff]
  %v2195 = vld [vmem:[#allocation4 + $0x250] sm:$0xff]
  %v2196 = vld [vmem:[#allocation4 + $0x258] sm:$0xff]
  %v2197 = vld [vmem:[#allocation4 + $0x260] sm:$0xff]
  %v2198 = vld [vmem:[#allocation4 + $0x268] sm:$0xff]
  %v2199 = vld [vmem:[#allocation4 + $0x270] sm:$0xff]
  %v2200 = vld [vmem:[#allocation4 + $0x278] sm:$0xff]
  %v2201 = vld [vmem:[%s3 + $0x2] ss:$0 sm:$0xff]
  %v2202 = vld [vmem:[%s3 + $0x3] ss:$0 sm:$0xff]
  %v2203 = vld [vmem:[%s3 + $0x4] ss:$0 sm:$0xff]
  %v2204 = vmax.f32 %v2041, 0.0
  %v2205 = vmax.f32 %v2042, 0.0
  %v2206 = vmax.f32 %v2043, 0.0
  %v2207 = vmax.f32 %v2044, 0.0
  %v2208 = vmax.f32 %v2045, 0.0
  %v2209 = vmax.f32 %v2046, 0.0
  %v2210 = vmax.f32 %v2047, 0.0
  %v2211 = vmax.f32 %v2048, 0.0
  %v2212 = vmax.f32 %v2049, 0.0
  %v2213 = vmax.f32 %v2050, 0.0
  %v2214 = vmax.f32 %v2051, 0.0
  %v2215 = vmax.f32 %v2052, 0.0
  %v2216 = vmax.f32 %v2053, 0.0
  %v2217 = vmax.f32 %v2054, 0.0
  %v2218 = vmax.f32 %v2055, 0.0
  %v2219 = vmax.f32 %v2056, 0.0
  %v2220 = vmax.f32 %v2057, 0.0
  %v2221 = vmax.f32 %v2058, 0.0
  %v2222 = vmax.f32 %v2059, 0.0
  %v2223 = vmax.f32 %v2060, 0.0
  %v2224 = vmax.f32 %v2061, 0.0
  %v2225 = vmax.f32 %v2062, 0.0
  %v2226 = vmax.f32 %v2063, 0.0
  %v2227 = vmax.f32 %v2064, 0.0
  %v2228 = vmax.f32 %v2065, 0.0
  %v2229 = vmax.f32 %v2066, 0.0
  %v2230 = vmax.f32 %v2067, 0.0
  %v2231 = vmax.f32 %v2068, 0.0
  %v2232 = vmax.f32 %v2069, 0.0
  %v2233 = vmax.f32 %v2070, 0.0
  %v2234 = vmax.f32 %v2071, 0.0
  %v2235 = vmax.f32 %v2072, 0.0
  %v2236 = vmax.f32 %v2073, 0.0
  %v2237 = vmax.f32 %v2074, 0.0
  %v2238 = vmax.f32 %v2075, 0.0
  %v2239 = vmax.f32 %v2076, 0.0
  %v2240 = vmax.f32 %v2077, 0.0
  %v2241 = vmax.f32 %v2078, 0.0
  %v2242 = vmax.f32 %v2079, 0.0
  %v2243 = vmax.f32 %v2080, 0.0
  %v2244 = vmax.f32 %v2081, 0.0
  %v2245 = vmax.f32 %v2082, 0.0
  %v2246 = vmax.f32 %v2083, 0.0
  %v2247 = vmax.f32 %v2084, 0.0
  %v2248 = vmax.f32 %v2085, 0.0
  %v2249 = vmax.f32 %v2086, 0.0
  %v2250 = vmax.f32 %v2087, 0.0
  %v2251 = vmax.f32 %v2088, 0.0
  %v2252 = vmax.f32 %v2089, 0.0
  %v2253 = vmax.f32 %v2090, 0.0
  %v2254 = vmax.f32 %v2091, 0.0
  %v2255 = vmax.f32 %v2092, 0.0
  %v2256 = vmax.f32 %v2093, 0.0
  %v2257 = vmax.f32 %v2094, 0.0
  %v2258 = vmax.f32 %v2095, 0.0
  %v2259 = vmax.f32 %v2096, 0.0
  %v2260 = vmax.f32 %v2097, 0.0
  %v2261 = vmax.f32 %v2098, 0.0
  %v2262 = vmax.f32 %v2099, 0.0
  %v2263 = vmax.f32 %v2100, 0.0
  %v2264 = vmax.f32 %v2101, 0.0
  %v2265 = vmax.f32 %v2102, 0.0
  %v2266 = vmax.f32 %v2103, 0.0
  %v2267 = vmax.f32 %v2104, 0.0
  %v2268 = vmax.f32 %v2105, 0.0
  %v2269 = vmax.f32 %v2106, 0.0
  %v2270 = vmax.f32 %v2107, 0.0
  %v2271 = vmax.f32 %v2108, 0.0
  %v2272 = vmax.f32 %v2109, 0.0
  %v2273 = vmax.f32 %v2110, 0.0
  %v2274 = vmax.f32 %v2111, 0.0
  %v2275 = vmax.f32 %v2112, 0.0
  %v2276 = vmax.f32 %v2113, 0.0
  %v2277 = vmax.f32 %v2114, 0.0
  %v2278 = vmax.f32 %v2115, 0.0
  %v2279 = vmax.f32 %v2116, 0.0
  %v2280 = vmax.f32 %v2117, 0.0
  %v2281 = vmax.f32 %v2118, 0.0
  %v2282 = vmax.f32 %v2119, 0.0
  %v2283 = vmax.f32 %v2120, 0.0
  %v2284 = vand.u32 2147483647, %v2041
  %v2285 = vand.u32 2147483647, %v2042
  %v2286 = vand.u32 2147483647, %v2043
  %v2287 = vand.u32 2147483647, %v2044
  %v2288 = vand.u32 2147483647, %v2045
  %v2289 = vand.u32 2147483647, %v2046
  %v2290 = vand.u32 2147483647, %v2047
  %v2291 = vand.u32 2147483647, %v2048
  %v2292 = vand.u32 2147483647, %v2049
  %v2293 = vand.u32 2147483647, %v2050
  %v2294 = vand.u32 2147483647, %v2051
  %v2295 = vand.u32 2147483647, %v2052
  %v2296 = vand.u32 2147483647, %v2053
  %v2297 = vand.u32 2147483647, %v2054
  %v2298 = vand.u32 2147483647, %v2055
  %v2299 = vand.u32 2147483647, %v2056
  %v2300 = vand.u32 2147483647, %v2057
  %v2301 = vand.u32 2147483647, %v2058
  %v2302 = vand.u32 2147483647, %v2059
  %v2303 = vand.u32 2147483647, %v2060
  %v2304 = vand.u32 2147483647, %v2061
  %v2305 = vand.u32 2147483647, %v2062
  %v2306 = vand.u32 2147483647, %v2063
  %v2307 = vand.u32 2147483647, %v2064
  %v2308 = vand.u32 2147483647, %v2065
  %v2309 = vand.u32 2147483647, %v2066
  %v2310 = vand.u32 2147483647, %v2067
  %v2311 = vand.u32 2147483647, %v2068
  %v2312 = vand.u32 2147483647, %v2069
  %v2313 = vand.u32 2147483647, %v2070
  %v2314 = vand.u32 2147483647, %v2071
  %v2315 = vand.u32 2147483647, %v2072
  %v2316 = vand.u32 2147483647, %v2073
  %v2317 = vand.u32 2147483647, %v2074
  %v2318 = vand.u32 2147483647, %v2075
  %v2319 = vand.u32 2147483647, %v2076
  %v2320 = vand.u32 2147483647, %v2077
  %v2321 = vand.u32 2147483647, %v2078
  %v2322 = vand.u32 2147483647, %v2079
  %v2323 = vand.u32 2147483647, %v2080
  %v2324 = vand.u32 2147483647, %v2081
  %v2325 = vand.u32 2147483647, %v2082
  %v2326 = vand.u32 2147483647, %v2083
  %v2327 = vand.u32 2147483647, %v2084
  %v2328 = vand.u32 2147483647, %v2085
  %v2329 = vand.u32 2147483647, %v2086
  %v2330 = vand.u32 2147483647, %v2087
  %v2331 = vand.u32 2147483647, %v2088
  %v2332 = vand.u32 2147483647, %v2089
  %v2333 = vand.u32 2147483647, %v2090
  %v2334 = vand.u32 2147483647, %v2091
  %v2335 = vand.u32 2147483647, %v2092
  %v2336 = vand.u32 2147483647, %v2093
  %v2337 = vand.u32 2147483647, %v2094
  %v2338 = vand.u32 2147483647, %v2095
  %v2339 = vand.u32 2147483647, %v2096
  %v2340 = vand.u32 2147483647, %v2097
  %v2341 = vand.u32 2147483647, %v2098
  %v2342 = vand.u32 2147483647, %v2099
  %v2343 = vand.u32 2147483647, %v2100
  %v2344 = vand.u32 2147483647, %v2101
  %v2345 = vand.u32 2147483647, %v2102
  %v2346 = vand.u32 2147483647, %v2103
  %v2347 = vand.u32 2147483647, %v2104
  %v2348 = vand.u32 2147483647, %v2105
  %v2349 = vand.u32 2147483647, %v2106
  %v2350 = vand.u32 2147483647, %v2107
  %v2351 = vand.u32 2147483647, %v2108
  %v2352 = vand.u32 2147483647, %v2109
  %v2353 = vand.u32 2147483647, %v2110
  %v2354 = vand.u32 2147483647, %v2111
  %v2355 = vand.u32 2147483647, %v2112
  %v2356 = vand.u32 2147483647, %v2113
  %v2357 = vand.u32 2147483647, %v2114
  %v2358 = vand.u32 2147483647, %v2115
  %v2359 = vand.u32 2147483647, %v2116
  %v2360 = vand.u32 2147483647, %v2117
  %v2361 = vand.u32 2147483647, %v2118
  %v2362 = vand.u32 2147483647, %v2119
  %v2363 = vand.u32 2147483647, %v2120
  %v2364 = vsub.f32 0.0, %v2284
  %v2365 = vsub.f32 0.0, %v2285
  %v2366 = vsub.f32 0.0, %v2286
  %v2367 = vsub.f32 0.0, %v2287
  %v2368 = vsub.f32 0.0, %v2288
  %v2369 = vsub.f32 0.0, %v2289
  %v2370 = vsub.f32 0.0, %v2290
  %v2371 = vsub.f32 0.0, %v2291
  %v2372 = vsub.f32 0.0, %v2292
  %v2373 = vsub.f32 0.0, %v2293
  %v2374 = vsub.f32 0.0, %v2294
  %v2375 = vsub.f32 0.0, %v2295
  %v2376 = vsub.f32 0.0, %v2296
  %v2377 = vsub.f32 0.0, %v2297
  %v2378 = vsub.f32 0.0, %v2298
  %v2379 = vsub.f32 0.0, %v2299
  %v2380 = vsub.f32 0.0, %v2300
  %v2381 = vsub.f32 0.0, %v2301
  %v2382 = vsub.f32 0.0, %v2302
  %v2383 = vsub.f32 0.0, %v2303
  %v2384 = vsub.f32 0.0, %v2304
  %v2385 = vsub.f32 0.0, %v2305
  %v2386 = vsub.f32 0.0, %v2306
  %v2387 = vsub.f32 0.0, %v2307
  %v2388 = vsub.f32 0.0, %v2308
  %v2389 = vsub.f32 0.0, %v2309
  %v2390 = vsub.f32 0.0, %v2310
  %v2391 = vsub.f32 0.0, %v2311
  %v2392 = vsub.f32 0.0, %v2312
  %v2393 = vsub.f32 0.0, %v2313
  %v2394 = vsub.f32 0.0, %v2314
  %v2395 = vsub.f32 0.0, %v2315
  %v2396 = vsub.f32 0.0, %v2316
  %v2397 = vsub.f32 0.0, %v2317
  %v2398 = vsub.f32 0.0, %v2318
  %v2399 = vsub.f32 0.0, %v2319
  %v2400 = vsub.f32 0.0, %v2320
  %v2401 = vsub.f32 0.0, %v2321
  %v2402 = vsub.f32 0.0, %v2322
  %v2403 = vsub.f32 0.0, %v2323
  %v2404 = vsub.f32 0.0, %v2324
  %v2405 = vsub.f32 0.0, %v2325
  %v2406 = vsub.f32 0.0, %v2326
  %v2407 = vsub.f32 0.0, %v2327
  %v2408 = vsub.f32 0.0, %v2328
  %v2409 = vsub.f32 0.0, %v2329
  %v2410 = vsub.f32 0.0, %v2330
  %v2411 = vsub.f32 0.0, %v2331
  %v2412 = vsub.f32 0.0, %v2332
  %v2413 = vsub.f32 0.0, %v2333
  %v2414 = vsub.f32 0.0, %v2334
  %v2415 = vsub.f32 0.0, %v2335
  %v2416 = vsub.f32 0.0, %v2336
  %v2417 = vsub.f32 0.0, %v2337
  %v2418 = vsub.f32 0.0, %v2338
  %v2419 = vsub.f32 0.0, %v2339
  %v2420 = vsub.f32 0.0, %v2340
  %v2421 = vsub.f32 0.0, %v2341
  %v2422 = vsub.f32 0.0, %v2342
  %v2423 = vsub.f32 0.0, %v2343
  %v2424 = vsub.f32 0.0, %v2344
  %v2425 = vsub.f32 0.0, %v2345
  %v2426 = vsub.f32 0.0, %v2346
  %v2427 = vsub.f32 0.0, %v2347
  %v2428 = vsub.f32 0.0, %v2348
  %v2429 = vsub.f32 0.0, %v2349
  %v2430 = vsub.f32 0.0, %v2350
  %v2431 = vsub.f32 0.0, %v2351
  %v2432 = vsub.f32 0.0, %v2352
  %v2433 = vsub.f32 0.0, %v2353
  %v2434 = vsub.f32 0.0, %v2354
  %v2435 = vsub.f32 0.0, %v2355
  %v2436 = vsub.f32 0.0, %v2356
  %v2437 = vsub.f32 0.0, %v2357
  %v2438 = vsub.f32 0.0, %v2358
  %v2439 = vsub.f32 0.0, %v2359
  %v2440 = vsub.f32 0.0, %v2360
  %v2441 = vsub.f32 0.0, %v2361
  %v2442 = vsub.f32 0.0, %v2362
  %v2443 = vsub.f32 0.0, %v2363
  %v2444 = vmul.f32 %v2364, 1.442695
  %v2445 = vpow.pop %v2444
  %v2446 = vmul.f32 %v2365, 1.442695
  %v2447 = vpow.pop %v2446
  %v2448 = vmul.f32 %v2366, 1.442695
  %v2449 = vpow.pop %v2448
  %v2450 = vmul.f32 %v2367, 1.442695
  %v2451 = vpow.pop %v2450
  %v2452 = vmul.f32 %v2368, 1.442695
  %v2453 = vpow.pop %v2452
  %v2454 = vmul.f32 %v2369, 1.442695
  %v2455 = vpow.pop %v2454
  %v2456 = vmul.f32 %v2370, 1.442695
  %v2457 = vpow.pop %v2456
  %v2458 = vmul.f32 %v2371, 1.442695
  %v2459 = vpow.pop %v2458
  %v2460 = vmul.f32 %v2372, 1.442695
  %v2461 = vpow.pop %v2460
  %v2462 = vmul.f32 %v2373, 1.442695
  %v2463 = vpow.pop %v2462
  %v2464 = vmul.f32 %v2374, 1.442695
  %v2465 = vpow.pop %v2464
  %v2466 = vmul.f32 %v2375, 1.442695
  %v2467 = vpow.pop %v2466
  %v2468 = vmul.f32 %v2376, 1.442695
  %v2469 = vpow.pop %v2468
  %v2470 = vmul.f32 %v2377, 1.442695
  %v2471 = vpow.pop %v2470
  %v2472 = vmul.f32 %v2378, 1.442695
  %v2473 = vpow.pop %v2472
  %v2474 = vmul.f32 %v2379, 1.442695
  %v2475 = vpow.pop %v2474
  %v2476 = vmul.f32 %v2380, 1.442695
  %v2477 = vpow.pop %v2476
  %v2478 = vmul.f32 %v2381, 1.442695
  %v2479 = vpow.pop %v2478
  %v2480 = vmul.f32 %v2382, 1.442695
  %v2481 = vpow.pop %v2480
  %v2482 = vmul.f32 %v2383, 1.442695
  %v2483 = vpow.pop %v2482
  %v2484 = vmul.f32 %v2384, 1.442695
  %v2485 = vpow.pop %v2484
  %v2486 = vmul.f32 %v2385, 1.442695
  %v2487 = vpow.pop %v2486
  %v2488 = vmul.f32 %v2386, 1.442695
  %v2489 = vpow.pop %v2488
  %v2490 = vmul.f32 %v2387, 1.442695
  %v2491 = vpow.pop %v2490
  %v2492 = vmul.f32 %v2388, 1.442695
  %v2493 = vpow.pop %v2492
  %v2494 = vmul.f32 %v2389, 1.442695
  %v2495 = vpow.pop %v2494
  %v2496 = vmul.f32 %v2390, 1.442695
  %v2497 = vpow.pop %v2496
  %v2498 = vmul.f32 %v2391, 1.442695
  %v2499 = vpow.pop %v2498
  %v2500 = vmul.f32 %v2392, 1.442695
  %v2501 = vpow.pop %v2500
  %v2502 = vmul.f32 %v2393, 1.442695
  %v2503 = vpow.pop %v2502
  %v2504 = vmul.f32 %v2394, 1.442695
  %v2505 = vpow.pop %v2504
  %v2506 = vmul.f32 %v2395, 1.442695
  %v2507 = vpow.pop %v2506
  %v2508 = vmul.f32 %v2396, 1.442695
  %v2509 = vpow.pop %v2508
  %v2510 = vmul.f32 %v2397, 1.442695
  %v2511 = vpow.pop %v2510
  %v2512 = vmul.f32 %v2398, 1.442695
  %v2513 = vpow.pop %v2512
  %v2514 = vmul.f32 %v2399, 1.442695
  %v2515 = vpow.pop %v2514
  %v2516 = vmul.f32 %v2400, 1.442695
  %v2517 = vpow.pop %v2516
  %v2518 = vmul.f32 %v2401, 1.442695
  %v2519 = vpow.pop %v2518
  %v2520 = vmul.f32 %v2402, 1.442695
  %v2521 = vpow.pop %v2520
  %v2522 = vmul.f32 %v2403, 1.442695
  %v2523 = vpow.pop %v2522
  %v2524 = vmul.f32 %v2404, 1.442695
  %v2525 = vpow.pop %v2524
  %v2526 = vmul.f32 %v2405, 1.442695
  %v2527 = vpow.pop %v2526
  %v2528 = vmul.f32 %v2406, 1.442695
  %v2529 = vpow.pop %v2528
  %v2530 = vmul.f32 %v2407, 1.442695
  %v2531 = vpow.pop %v2530
  %v2532 = vmul.f32 %v2408, 1.442695
  %v2533 = vpow.pop %v2532
  %v2534 = vmul.f32 %v2409, 1.442695
  %v2535 = vpow.pop %v2534
  %v2536 = vmul.f32 %v2410, 1.442695
  %v2537 = vpow.pop %v2536
  %v2538 = vmul.f32 %v2411, 1.442695
  %v2539 = vpow.pop %v2538
  %v2540 = vmul.f32 %v2412, 1.442695
  %v2541 = vpow.pop %v2540
  %v2542 = vmul.f32 %v2413, 1.442695
  %v2543 = vpow.pop %v2542
  %v2544 = vmul.f32 %v2414, 1.442695
  %v2545 = vpow.pop %v2544
  %v2546 = vmul.f32 %v2415, 1.442695
  %v2547 = vpow.pop %v2546
  %v2548 = vmul.f32 %v2416, 1.442695
  %v2549 = vpow.pop %v2548
  %v2550 = vmul.f32 %v2417, 1.442695
  %v2551 = vpow.pop %v2550
  %v2552 = vmul.f32 %v2418, 1.442695
  %v2553 = vpow.pop %v2552
  %v2554 = vmul.f32 %v2419, 1.442695
  %v2555 = vpow.pop %v2554
  %v2556 = vmul.f32 %v2420, 1.442695
  %v2557 = vpow.pop %v2556
  %v2558 = vmul.f32 %v2421, 1.442695
  %v2559 = vpow.pop %v2558
  %v2560 = vmul.f32 %v2422, 1.442695
  %v2561 = vpow.pop %v2560
  %v2562 = vmul.f32 %v2423, 1.442695
  %v2563 = vpow.pop %v2562
  %v2564 = vmul.f32 %v2424, 1.442695
  %v2565 = vpow.pop %v2564
  %v2566 = vmul.f32 %v2425, 1.442695
  %v2567 = vpow.pop %v2566
  %v2568 = vmul.f32 %v2426, 1.442695
  %v2569 = vpow.pop %v2568
  %v2570 = vmul.f32 %v2427, 1.442695
  %v2571 = vpow.pop %v2570
  %v2572 = vmul.f32 %v2428, 1.442695
  %v2573 = vpow.pop %v2572
  %v2574 = vmul.f32 %v2429, 1.442695
  %v2575 = vpow.pop %v2574
  %v2576 = vmul.f32 %v2430, 1.442695
  %v2577 = vpow.pop %v2576
  %v2578 = vmul.f32 %v2431, 1.442695
  %v2579 = vpow.pop %v2578
  %v2580 = vmul.f32 %v2432, 1.442695
  %v2581 = vpow.pop %v2580
  %v2582 = vmul.f32 %v2433, 1.442695
  %v2583 = vpow.pop %v2582
  %v2584 = vmul.f32 %v2434, 1.442695
  %v2585 = vpow.pop %v2584
  %v2586 = vmul.f32 %v2435, 1.442695
  %v2587 = vpow.pop %v2586
  %v2588 = vmul.f32 %v2436, 1.442695
  %v2589 = vpow.pop %v2588
  %v2590 = vmul.f32 %v2437, 1.442695
  %v2591 = vpow.pop %v2590
  %v2592 = vmul.f32 %v2438, 1.442695
  %v2593 = vpow.pop %v2592
  %v2594 = vmul.f32 %v2439, 1.442695
  %v2595 = vpow.pop %v2594
  %v2596 = vmul.f32 %v2440, 1.442695
  %v2597 = vpow.pop %v2596
  %v2598 = vmul.f32 %v2441, 1.442695
  %v2599 = vpow.pop %v2598
  %v2600 = vmul.f32 %v2442, 1.442695
  %v2601 = vpow.pop %v2600
  %v2602 = vmul.f32 %v2443, 1.442695
  %v2603 = vpow.pop %v2602
  %v2604 = vadd.f32 %v2445, 1.0
  %v2605 = vlog2.pop %v2604
  %v2606 = vmul.f32 %v2605, 0.6931472
  %v2607 = vmul.f32 -0.5, %v2445
  %v2608 = vadd.f32 %v2607, 1.0
  %v2609 = vmul.f32 %v2608, %v2445
  %v2610 = vand.u32 2147483647, %v2445
  %vm2611 = vcmp.lt.f32.partialorder %v2610, 0.0004427343
  %v2612 = vsel %vm2611, %v2609, %v2606
  %v2613 = vadd.f32 %v2447, 1.0
  %v2614 = vlog2.pop %v2613
  %v2615 = vmul.f32 %v2614, 0.6931472
  %v2616 = vmul.f32 -0.5, %v2447
  %v2617 = vadd.f32 %v2616, 1.0
  %v2618 = vmul.f32 %v2617, %v2447
  %v2619 = vand.u32 2147483647, %v2447
  %vm2620 = vcmp.lt.f32.partialorder %v2619, 0.0004427343
  %v2621 = vsel %vm2620, %v2618, %v2615
  %v2622 = vadd.f32 %v2449, 1.0
  %v2623 = vlog2.pop %v2622
  %v2624 = vmul.f32 %v2623, 0.6931472
  %v2625 = vmul.f32 -0.5, %v2449
  %v2626 = vadd.f32 %v2625, 1.0
  %v2627 = vmul.f32 %v2626, %v2449
  %v2628 = vand.u32 2147483647, %v2449
  %vm2629 = vcmp.lt.f32.partialorder %v2628, 0.0004427343
  %v2630 = vsel %vm2629, %v2627, %v2624
  %v2631 = vadd.f32 %v2451, 1.0
  %v2632 = vlog2.pop %v2631
  %v2633 = vmul.f32 %v2632, 0.6931472
  %v2634 = vmul.f32 -0.5, %v2451
  %v2635 = vadd.f32 %v2634, 1.0
  %v2636 = vmul.f32 %v2635, %v2451
  %v2637 = vand.u32 2147483647, %v2451
  %vm2638 = vcmp.lt.f32.partialorder %v2637, 0.0004427343
  %v2639 = vsel %vm2638, %v2636, %v2633
  %v2640 = vadd.f32 %v2453, 1.0
  %v2641 = vlog2.pop %v2640
  %v2642 = vmul.f32 %v2641, 0.6931472
  %v2643 = vmul.f32 -0.5, %v2453
  %v2644 = vadd.f32 %v2643, 1.0
  %v2645 = vmul.f32 %v2644, %v2453
  %v2646 = vand.u32 2147483647, %v2453
  %vm2647 = vcmp.lt.f32.partialorder %v2646, 0.0004427343
  %v2648 = vsel %vm2647, %v2645, %v2642
  %v2649 = vadd.f32 %v2455, 1.0
  %v2650 = vlog2.pop %v2649
  %v2651 = vmul.f32 %v2650, 0.6931472
  %v2652 = vmul.f32 -0.5, %v2455
  %v2653 = vadd.f32 %v2652, 1.0
  %v2654 = vmul.f32 %v2653, %v2455
  %v2655 = vand.u32 2147483647, %v2455
  %vm2656 = vcmp.lt.f32.partialorder %v2655, 0.0004427343
  %v2657 = vsel %vm2656, %v2654, %v2651
  %v2658 = vadd.f32 %v2457, 1.0
  %v2659 = vlog2.pop %v2658
  %v2660 = vmul.f32 %v2659, 0.6931472
  %v2661 = vmul.f32 -0.5, %v2457
  %v2662 = vadd.f32 %v2661, 1.0
  %v2663 = vmul.f32 %v2662, %v2457
  %v2664 = vand.u32 2147483647, %v2457
  %vm2665 = vcmp.lt.f32.partialorder %v2664, 0.0004427343
  %v2666 = vsel %vm2665, %v2663, %v2660
  %v2667 = vadd.f32 %v2459, 1.0
  %v2668 = vlog2.pop %v2667
  %v2669 = vmul.f32 %v2668, 0.6931472
  %v2670 = vmul.f32 -0.5, %v2459
  %v2671 = vadd.f32 %v2670, 1.0
  %v2672 = vmul.f32 %v2671, %v2459
  %v2673 = vand.u32 2147483647, %v2459
  %vm2674 = vcmp.lt.f32.partialorder %v2673, 0.0004427343
  %v2675 = vsel %vm2674, %v2672, %v2669
  %v2676 = vadd.f32 %v2461, 1.0
  %v2677 = vlog2.pop %v2676
  %v2678 = vmul.f32 %v2677, 0.6931472
  %v2679 = vmul.f32 -0.5, %v2461
  %v2680 = vadd.f32 %v2679, 1.0
  %v2681 = vmul.f32 %v2680, %v2461
  %v2682 = vand.u32 2147483647, %v2461
  %vm2683 = vcmp.lt.f32.partialorder %v2682, 0.0004427343
  %v2684 = vsel %vm2683, %v2681, %v2678
  %v2685 = vadd.f32 %v2463, 1.0
  %v2686 = vlog2.pop %v2685
  %v2687 = vmul.f32 %v2686, 0.6931472
  %v2688 = vmul.f32 -0.5, %v2463
  %v2689 = vadd.f32 %v2688, 1.0
  %v2690 = vmul.f32 %v2689, %v2463
  %v2691 = vand.u32 2147483647, %v2463
  %vm2692 = vcmp.lt.f32.partialorder %v2691, 0.0004427343
  %v2693 = vsel %vm2692, %v2690, %v2687
  %v2694 = vadd.f32 %v2465, 1.0
  %v2695 = vlog2.pop %v2694
  %v2696 = vmul.f32 %v2695, 0.6931472
  %v2697 = vmul.f32 -0.5, %v2465
  %v2698 = vadd.f32 %v2697, 1.0
  %v2699 = vmul.f32 %v2698, %v2465
  %v2700 = vand.u32 2147483647, %v2465
  %vm2701 = vcmp.lt.f32.partialorder %v2700, 0.0004427343
  %v2702 = vsel %vm2701, %v2699, %v2696
  %v2703 = vadd.f32 %v2467, 1.0
  %v2704 = vlog2.pop %v2703
  %v2705 = vmul.f32 %v2704, 0.6931472
  %v2706 = vmul.f32 -0.5, %v2467
  %v2707 = vadd.f32 %v2706, 1.0
  %v2708 = vmul.f32 %v2707, %v2467
  %v2709 = vand.u32 2147483647, %v2467
  %vm2710 = vcmp.lt.f32.partialorder %v2709, 0.0004427343
  %v2711 = vsel %vm2710, %v2708, %v2705
  %v2712 = vadd.f32 %v2469, 1.0
  %v2713 = vlog2.pop %v2712
  %v2714 = vmul.f32 %v2713, 0.6931472
  %v2715 = vmul.f32 -0.5, %v2469
  %v2716 = vadd.f32 %v2715, 1.0
  %v2717 = vmul.f32 %v2716, %v2469
  %v2718 = vand.u32 2147483647, %v2469
  %vm2719 = vcmp.lt.f32.partialorder %v2718, 0.0004427343
  %v2720 = vsel %vm2719, %v2717, %v2714
  %v2721 = vadd.f32 %v2471, 1.0
  %v2722 = vlog2.pop %v2721
  %v2723 = vmul.f32 %v2722, 0.6931472
  %v2724 = vmul.f32 -0.5, %v2471
  %v2725 = vadd.f32 %v2724, 1.0
  %v2726 = vmul.f32 %v2725, %v2471
  %v2727 = vand.u32 2147483647, %v2471
  %vm2728 = vcmp.lt.f32.partialorder %v2727, 0.0004427343
  %v2729 = vsel %vm2728, %v2726, %v2723
  %v2730 = vadd.f32 %v2473, 1.0
  %v2731 = vlog2.pop %v2730
  %v2732 = vmul.f32 %v2731, 0.6931472
  %v2733 = vmul.f32 -0.5, %v2473
  %v2734 = vadd.f32 %v2733, 1.0
  %v2735 = vmul.f32 %v2734, %v2473
  %v2736 = vand.u32 2147483647, %v2473
  %vm2737 = vcmp.lt.f32.partialorder %v2736, 0.0004427343
  %v2738 = vsel %vm2737, %v2735, %v2732
  %v2739 = vadd.f32 %v2475, 1.0
  %v2740 = vlog2.pop %v2739
  %v2741 = vmul.f32 %v2740, 0.6931472
  %v2742 = vmul.f32 -0.5, %v2475
  %v2743 = vadd.f32 %v2742, 1.0
  %v2744 = vmul.f32 %v2743, %v2475
  %v2745 = vand.u32 2147483647, %v2475
  %vm2746 = vcmp.lt.f32.partialorder %v2745, 0.0004427343
  %v2747 = vsel %vm2746, %v2744, %v2741
  %v2748 = vadd.f32 %v2477, 1.0
  %v2749 = vlog2.pop %v2748
  %v2750 = vmul.f32 %v2749, 0.6931472
  %v2751 = vmul.f32 -0.5, %v2477
  %v2752 = vadd.f32 %v2751, 1.0
  %v2753 = vmul.f32 %v2752, %v2477
  %v2754 = vand.u32 2147483647, %v2477
  %vm2755 = vcmp.lt.f32.partialorder %v2754, 0.0004427343
  %v2756 = vsel %vm2755, %v2753, %v2750
  %v2757 = vadd.f32 %v2479, 1.0
  %v2758 = vlog2.pop %v2757
  %v2759 = vmul.f32 %v2758, 0.6931472
  %v2760 = vmul.f32 -0.5, %v2479
  %v2761 = vadd.f32 %v2760, 1.0
  %v2762 = vmul.f32 %v2761, %v2479
  %v2763 = vand.u32 2147483647, %v2479
  %vm2764 = vcmp.lt.f32.partialorder %v2763, 0.0004427343
  %v2765 = vsel %vm2764, %v2762, %v2759
  %v2766 = vadd.f32 %v2481, 1.0
  %v2767 = vlog2.pop %v2766
  %v2768 = vmul.f32 %v2767, 0.6931472
  %v2769 = vmul.f32 -0.5, %v2481
  %v2770 = vadd.f32 %v2769, 1.0
  %v2771 = vmul.f32 %v2770, %v2481
  %v2772 = vand.u32 2147483647, %v2481
  %vm2773 = vcmp.lt.f32.partialorder %v2772, 0.0004427343
  %v2774 = vsel %vm2773, %v2771, %v2768
  %v2775 = vadd.f32 %v2483, 1.0
  %v2776 = vlog2.pop %v2775
  %v2777 = vmul.f32 %v2776, 0.6931472
  %v2778 = vmul.f32 -0.5, %v2483
  %v2779 = vadd.f32 %v2778, 1.0
  %v2780 = vmul.f32 %v2779, %v2483
  %v2781 = vand.u32 2147483647, %v2483
  %vm2782 = vcmp.lt.f32.partialorder %v2781, 0.0004427343
  %v2783 = vsel %vm2782, %v2780, %v2777
  %v2784 = vadd.f32 %v2485, 1.0
  %v2785 = vlog2.pop %v2784
  %v2786 = vmul.f32 %v2785, 0.6931472
  %v2787 = vmul.f32 -0.5, %v2485
  %v2788 = vadd.f32 %v2787, 1.0
  %v2789 = vmul.f32 %v2788, %v2485
  %v2790 = vand.u32 2147483647, %v2485
  %vm2791 = vcmp.lt.f32.partialorder %v2790, 0.0004427343
  %v2792 = vsel %vm2791, %v2789, %v2786
  %v2793 = vadd.f32 %v2487, 1.0
  %v2794 = vlog2.pop %v2793
  %v2795 = vmul.f32 %v2794, 0.6931472
  %v2796 = vmul.f32 -0.5, %v2487
  %v2797 = vadd.f32 %v2796, 1.0
  %v2798 = vmul.f32 %v2797, %v2487
  %v2799 = vand.u32 2147483647, %v2487
  %vm2800 = vcmp.lt.f32.partialorder %v2799, 0.0004427343
  %v2801 = vsel %vm2800, %v2798, %v2795
  %v2802 = vadd.f32 %v2489, 1.0
  %v2803 = vlog2.pop %v2802
  %v2804 = vmul.f32 %v2803, 0.6931472
  %v2805 = vmul.f32 -0.5, %v2489
  %v2806 = vadd.f32 %v2805, 1.0
  %v2807 = vmul.f32 %v2806, %v2489
  %v2808 = vand.u32 2147483647, %v2489
  %vm2809 = vcmp.lt.f32.partialorder %v2808, 0.0004427343
  %v2810 = vsel %vm2809, %v2807, %v2804
  %v2811 = vadd.f32 %v2491, 1.0
  %v2812 = vlog2.pop %v2811
  %v2813 = vmul.f32 %v2812, 0.6931472
  %v2814 = vmul.f32 -0.5, %v2491
  %v2815 = vadd.f32 %v2814, 1.0
  %v2816 = vmul.f32 %v2815, %v2491
  %v2817 = vand.u32 2147483647, %v2491
  %vm2818 = vcmp.lt.f32.partialorder %v2817, 0.0004427343
  %v2819 = vsel %vm2818, %v2816, %v2813
  %v2820 = vadd.f32 %v2493, 1.0
  %v2821 = vlog2.pop %v2820
  %v2822 = vmul.f32 %v2821, 0.6931472
  %v2823 = vmul.f32 -0.5, %v2493
  %v2824 = vadd.f32 %v2823, 1.0
  %v2825 = vmul.f32 %v2824, %v2493
  %v2826 = vand.u32 2147483647, %v2493
  %vm2827 = vcmp.lt.f32.partialorder %v2826, 0.0004427343
  %v2828 = vsel %vm2827, %v2825, %v2822
  %v2829 = vadd.f32 %v2495, 1.0
  %v2830 = vlog2.pop %v2829
  %v2831 = vmul.f32 %v2830, 0.6931472
  %v2832 = vmul.f32 -0.5, %v2495
  %v2833 = vadd.f32 %v2832, 1.0
  %v2834 = vmul.f32 %v2833, %v2495
  %v2835 = vand.u32 2147483647, %v2495
  %vm2836 = vcmp.lt.f32.partialorder %v2835, 0.0004427343
  %v2837 = vsel %vm2836, %v2834, %v2831
  %v2838 = vadd.f32 %v2497, 1.0
  %v2839 = vlog2.pop %v2838
  %v2840 = vmul.f32 %v2839, 0.6931472
  %v2841 = vmul.f32 -0.5, %v2497
  %v2842 = vadd.f32 %v2841, 1.0
  %v2843 = vmul.f32 %v2842, %v2497
  %v2844 = vand.u32 2147483647, %v2497
  %vm2845 = vcmp.lt.f32.partialorder %v2844, 0.0004427343
  %v2846 = vsel %vm2845, %v2843, %v2840
  %v2847 = vadd.f32 %v2499, 1.0
  %v2848 = vlog2.pop %v2847
  %v2849 = vmul.f32 %v2848, 0.6931472
  %v2850 = vmul.f32 -0.5, %v2499
  %v2851 = vadd.f32 %v2850, 1.0
  %v2852 = vmul.f32 %v2851, %v2499
  %v2853 = vand.u32 2147483647, %v2499
  %vm2854 = vcmp.lt.f32.partialorder %v2853, 0.0004427343
  %v2855 = vsel %vm2854, %v2852, %v2849
  %v2856 = vadd.f32 %v2501, 1.0
  %v2857 = vlog2.pop %v2856
  %v2858 = vmul.f32 %v2857, 0.6931472
  %v2859 = vmul.f32 -0.5, %v2501
  %v2860 = vadd.f32 %v2859, 1.0
  %v2861 = vmul.f32 %v2860, %v2501
  %v2862 = vand.u32 2147483647, %v2501
  %vm2863 = vcmp.lt.f32.partialorder %v2862, 0.0004427343
  %v2864 = vsel %vm2863, %v2861, %v2858
  %v2865 = vadd.f32 %v2503, 1.0
  %v2866 = vlog2.pop %v2865
  %v2867 = vmul.f32 %v2866, 0.6931472
  %v2868 = vmul.f32 -0.5, %v2503
  %v2869 = vadd.f32 %v2868, 1.0
  %v2870 = vmul.f32 %v2869, %v2503
  %v2871 = vand.u32 2147483647, %v2503
  %vm2872 = vcmp.lt.f32.partialorder %v2871, 0.0004427343
  %v2873 = vsel %vm2872, %v2870, %v2867
  %v2874 = vadd.f32 %v2505, 1.0
  %v2875 = vlog2.pop %v2874
  %v2876 = vmul.f32 %v2875, 0.6931472
  %v2877 = vmul.f32 -0.5, %v2505
  %v2878 = vadd.f32 %v2877, 1.0
  %v2879 = vmul.f32 %v2878, %v2505
  %v2880 = vand.u32 2147483647, %v2505
  %vm2881 = vcmp.lt.f32.partialorder %v2880, 0.0004427343
  %v2882 = vsel %vm2881, %v2879, %v2876
  %v2883 = vadd.f32 %v2507, 1.0
  %v2884 = vlog2.pop %v2883
  %v2885 = vmul.f32 %v2884, 0.6931472
  %v2886 = vmul.f32 -0.5, %v2507
  %v2887 = vadd.f32 %v2886, 1.0
  %v2888 = vmul.f32 %v2887, %v2507
  %v2889 = vand.u32 2147483647, %v2507
  %vm2890 = vcmp.lt.f32.partialorder %v2889, 0.0004427343
  %v2891 = vsel %vm2890, %v2888, %v2885
  %v2892 = vadd.f32 %v2509, 1.0
  %v2893 = vlog2.pop %v2892
  %v2894 = vmul.f32 %v2893, 0.6931472
  %v2895 = vmul.f32 -0.5, %v2509
  %v2896 = vadd.f32 %v2895, 1.0
  %v2897 = vmul.f32 %v2896, %v2509
  %v2898 = vand.u32 2147483647, %v2509
  %vm2899 = vcmp.lt.f32.partialorder %v2898, 0.0004427343
  %v2900 = vsel %vm2899, %v2897, %v2894
  %v2901 = vadd.f32 %v2511, 1.0
  %v2902 = vlog2.pop %v2901
  %v2903 = vmul.f32 %v2902, 0.6931472
  %v2904 = vmul.f32 -0.5, %v2511
  %v2905 = vadd.f32 %v2904, 1.0
  %v2906 = vmul.f32 %v2905, %v2511
  %v2907 = vand.u32 2147483647, %v2511
  %vm2908 = vcmp.lt.f32.partialorder %v2907, 0.0004427343
  %v2909 = vsel %vm2908, %v2906, %v2903
  %v2910 = vadd.f32 %v2513, 1.0
  %v2911 = vlog2.pop %v2910
  %v2912 = vmul.f32 %v2911, 0.6931472
  %v2913 = vmul.f32 -0.5, %v2513
  %v2914 = vadd.f32 %v2913, 1.0
  %v2915 = vmul.f32 %v2914, %v2513
  %v2916 = vand.u32 2147483647, %v2513
  %vm2917 = vcmp.lt.f32.partialorder %v2916, 0.0004427343
  %v2918 = vsel %vm2917, %v2915, %v2912
  %v2919 = vadd.f32 %v2515, 1.0
  %v2920 = vlog2.pop %v2919
  %v2921 = vmul.f32 %v2920, 0.6931472
  %v2922 = vmul.f32 -0.5, %v2515
  %v2923 = vadd.f32 %v2922, 1.0
  %v2924 = vmul.f32 %v2923, %v2515
  %v2925 = vand.u32 2147483647, %v2515
  %vm2926 = vcmp.lt.f32.partialorder %v2925, 0.0004427343
  %v2927 = vsel %vm2926, %v2924, %v2921
  %v2928 = vadd.f32 %v2517, 1.0
  %v2929 = vlog2.pop %v2928
  %v2930 = vmul.f32 %v2929, 0.6931472
  %v2931 = vmul.f32 -0.5, %v2517
  %v2932 = vadd.f32 %v2931, 1.0
  %v2933 = vmul.f32 %v2932, %v2517
  %v2934 = vand.u32 2147483647, %v2517
  %vm2935 = vcmp.lt.f32.partialorder %v2934, 0.0004427343
  %v2936 = vsel %vm2935, %v2933, %v2930
  %v2937 = vadd.f32 %v2519, 1.0
  %v2938 = vlog2.pop %v2937
  %v2939 = vmul.f32 %v2938, 0.6931472
  %v2940 = vmul.f32 -0.5, %v2519
  %v2941 = vadd.f32 %v2940, 1.0
  %v2942 = vmul.f32 %v2941, %v2519
  %v2943 = vand.u32 2147483647, %v2519
  %vm2944 = vcmp.lt.f32.partialorder %v2943, 0.0004427343
  %v2945 = vsel %vm2944, %v2942, %v2939
  %v2946 = vadd.f32 %v2521, 1.0
  %v2947 = vlog2.pop %v2946
  %v2948 = vmul.f32 %v2947, 0.6931472
  %v2949 = vmul.f32 -0.5, %v2521
  %v2950 = vadd.f32 %v2949, 1.0
  %v2951 = vmul.f32 %v2950, %v2521
  %v2952 = vand.u32 2147483647, %v2521
  %vm2953 = vcmp.lt.f32.partialorder %v2952, 0.0004427343
  %v2954 = vsel %vm2953, %v2951, %v2948
  %v2955 = vadd.f32 %v2523, 1.0
  %v2956 = vlog2.pop %v2955
  %v2957 = vmul.f32 %v2956, 0.6931472
  %v2958 = vmul.f32 -0.5, %v2523
  %v2959 = vadd.f32 %v2958, 1.0
  %v2960 = vmul.f32 %v2959, %v2523
  %v2961 = vand.u32 2147483647, %v2523
  %vm2962 = vcmp.lt.f32.partialorder %v2961, 0.0004427343
  %v2963 = vsel %vm2962, %v2960, %v2957
  %v2964 = vadd.f32 %v2525, 1.0
  %v2965 = vlog2.pop %v2964
  %v2966 = vmul.f32 %v2965, 0.6931472
  %v2967 = vmul.f32 -0.5, %v2525
  %v2968 = vadd.f32 %v2967, 1.0
  %v2969 = vmul.f32 %v2968, %v2525
  %v2970 = vand.u32 2147483647, %v2525
  %vm2971 = vcmp.lt.f32.partialorder %v2970, 0.0004427343
  %v2972 = vsel %vm2971, %v2969, %v2966
  %v2973 = vadd.f32 %v2527, 1.0
  %v2974 = vlog2.pop %v2973
  %v2975 = vmul.f32 %v2974, 0.6931472
  %v2976 = vmul.f32 -0.5, %v2527
  %v2977 = vadd.f32 %v2976, 1.0
  %v2978 = vmul.f32 %v2977, %v2527
  %v2979 = vand.u32 2147483647, %v2527
  %vm2980 = vcmp.lt.f32.partialorder %v2979, 0.0004427343
  %v2981 = vsel %vm2980, %v2978, %v2975
  %v2982 = vadd.f32 %v2529, 1.0
  %v2983 = vlog2.pop %v2982
  %v2984 = vmul.f32 %v2983, 0.6931472
  %v2985 = vmul.f32 -0.5, %v2529
  %v2986 = vadd.f32 %v2985, 1.0
  %v2987 = vmul.f32 %v2986, %v2529
  %v2988 = vand.u32 2147483647, %v2529
  %vm2989 = vcmp.lt.f32.partialorder %v2988, 0.0004427343
  %v2990 = vsel %vm2989, %v2987, %v2984
  %v2991 = vadd.f32 %v2531, 1.0
  %v2992 = vlog2.pop %v2991
  %v2993 = vmul.f32 %v2992, 0.6931472
  %v2994 = vmul.f32 -0.5, %v2531
  %v2995 = vadd.f32 %v2994, 1.0
  %v2996 = vmul.f32 %v2995, %v2531
  %v2997 = vand.u32 2147483647, %v2531
  %vm2998 = vcmp.lt.f32.partialorder %v2997, 0.0004427343
  %v2999 = vsel %vm2998, %v2996, %v2993
  %v3000 = vadd.f32 %v2533, 1.0
  %v3001 = vlog2.pop %v3000
  %v3002 = vmul.f32 %v3001, 0.6931472
  %v3003 = vmul.f32 -0.5, %v2533
  %v3004 = vadd.f32 %v3003, 1.0
  %v3005 = vmul.f32 %v3004, %v2533
  %v3006 = vand.u32 2147483647, %v2533
  %vm3007 = vcmp.lt.f32.partialorder %v3006, 0.0004427343
  %v3008 = vsel %vm3007, %v3005, %v3002
  %v3009 = vadd.f32 %v2535, 1.0
  %v3010 = vlog2.pop %v3009
  %v3011 = vmul.f32 %v3010, 0.6931472
  %v3012 = vmul.f32 -0.5, %v2535
  %v3013 = vadd.f32 %v3012, 1.0
  %v3014 = vmul.f32 %v3013, %v2535
  %v3015 = vand.u32 2147483647, %v2535
  %vm3016 = vcmp.lt.f32.partialorder %v3015, 0.0004427343
  %v3017 = vsel %vm3016, %v3014, %v3011
  %v3018 = vadd.f32 %v2537, 1.0
  %v3019 = vlog2.pop %v3018
  %v3020 = vmul.f32 %v3019, 0.6931472
  %v3021 = vmul.f32 -0.5, %v2537
  %v3022 = vadd.f32 %v3021, 1.0
  %v3023 = vmul.f32 %v3022, %v2537
  %v3024 = vand.u32 2147483647, %v2537
  %vm3025 = vcmp.lt.f32.partialorder %v3024, 0.0004427343
  %v3026 = vsel %vm3025, %v3023, %v3020
  %v3027 = vadd.f32 %v2539, 1.0
  %v3028 = vlog2.pop %v3027
  %v3029 = vmul.f32 %v3028, 0.6931472
  %v3030 = vmul.f32 -0.5, %v2539
  %v3031 = vadd.f32 %v3030, 1.0
  %v3032 = vmul.f32 %v3031, %v2539
  %v3033 = vand.u32 2147483647, %v2539
  %vm3034 = vcmp.lt.f32.partialorder %v3033, 0.0004427343
  %v3035 = vsel %vm3034, %v3032, %v3029
  %v3036 = vadd.f32 %v2541, 1.0
  %v3037 = vlog2.pop %v3036
  %v3038 = vmul.f32 %v3037, 0.6931472
  %v3039 = vmul.f32 -0.5, %v2541
  %v3040 = vadd.f32 %v3039, 1.0
  %v3041 = vmul.f32 %v3040, %v2541
  %v3042 = vand.u32 2147483647, %v2541
  %vm3043 = vcmp.lt.f32.partialorder %v3042, 0.0004427343
  %v3044 = vsel %vm3043, %v3041, %v3038
  %v3045 = vadd.f32 %v2543, 1.0
  %v3046 = vlog2.pop %v3045
  %v3047 = vmul.f32 %v3046, 0.6931472
  %v3048 = vmul.f32 -0.5, %v2543
  %v3049 = vadd.f32 %v3048, 1.0
  %v3050 = vmul.f32 %v3049, %v2543
  %v3051 = vand.u32 2147483647, %v2543
  %vm3052 = vcmp.lt.f32.partialorder %v3051, 0.0004427343
  %v3053 = vsel %vm3052, %v3050, %v3047
  %v3054 = vadd.f32 %v2545, 1.0
  %v3055 = vlog2.pop %v3054
  %v3056 = vmul.f32 %v3055, 0.6931472
  %v3057 = vmul.f32 -0.5, %v2545
  %v3058 = vadd.f32 %v3057, 1.0
  %v3059 = vmul.f32 %v3058, %v2545
  %v3060 = vand.u32 2147483647, %v2545
  %vm3061 = vcmp.lt.f32.partialorder %v3060, 0.0004427343
  %v3062 = vsel %vm3061, %v3059, %v3056
  %v3063 = vadd.f32 %v2547, 1.0
  %v3064 = vlog2.pop %v3063
  %v3065 = vmul.f32 %v3064, 0.6931472
  %v3066 = vmul.f32 -0.5, %v2547
  %v3067 = vadd.f32 %v3066, 1.0
  %v3068 = vmul.f32 %v3067, %v2547
  %v3069 = vand.u32 2147483647, %v2547
  %vm3070 = vcmp.lt.f32.partialorder %v3069, 0.0004427343
  %v3071 = vsel %vm3070, %v3068, %v3065
  %v3072 = vadd.f32 %v2549, 1.0
  %v3073 = vlog2.pop %v3072
  %v3074 = vmul.f32 %v3073, 0.6931472
  %v3075 = vmul.f32 -0.5, %v2549
  %v3076 = vadd.f32 %v3075, 1.0
  %v3077 = vmul.f32 %v3076, %v2549
  %v3078 = vand.u32 2147483647, %v2549
  %vm3079 = vcmp.lt.f32.partialorder %v3078, 0.0004427343
  %v3080 = vsel %vm3079, %v3077, %v3074
  %v3081 = vadd.f32 %v2551, 1.0
  %v3082 = vlog2.pop %v3081
  %v3083 = vmul.f32 %v3082, 0.6931472
  %v3084 = vmul.f32 -0.5, %v2551
  %v3085 = vadd.f32 %v3084, 1.0
  %v3086 = vmul.f32 %v3085, %v2551
  %v3087 = vand.u32 2147483647, %v2551
  %vm3088 = vcmp.lt.f32.partialorder %v3087, 0.0004427343
  %v3089 = vsel %vm3088, %v3086, %v3083
  %v3090 = vadd.f32 %v2553, 1.0
  %v3091 = vlog2.pop %v3090
  %v3092 = vmul.f32 %v3091, 0.6931472
  %v3093 = vmul.f32 -0.5, %v2553
  %v3094 = vadd.f32 %v3093, 1.0
  %v3095 = vmul.f32 %v3094, %v2553
  %v3096 = vand.u32 2147483647, %v2553
  %vm3097 = vcmp.lt.f32.partialorder %v3096, 0.0004427343
  %v3098 = vsel %vm3097, %v3095, %v3092
  %v3099 = vadd.f32 %v2555, 1.0
  %v3100 = vlog2.pop %v3099
  %v3101 = vmul.f32 %v3100, 0.6931472
  %v3102 = vmul.f32 -0.5, %v2555
  %v3103 = vadd.f32 %v3102, 1.0
  %v3104 = vmul.f32 %v3103, %v2555
  %v3105 = vand.u32 2147483647, %v2555
  %vm3106 = vcmp.lt.f32.partialorder %v3105, 0.0004427343
  %v3107 = vsel %vm3106, %v3104, %v3101
  %v3108 = vadd.f32 %v2557, 1.0
  %v3109 = vlog2.pop %v3108
  %v3110 = vmul.f32 %v3109, 0.6931472
  %v3111 = vmul.f32 -0.5, %v2557
  %v3112 = vadd.f32 %v3111, 1.0
  %v3113 = vmul.f32 %v3112, %v2557
  %v3114 = vand.u32 2147483647, %v2557
  %vm3115 = vcmp.lt.f32.partialorder %v3114, 0.0004427343
  %v3116 = vsel %vm3115, %v3113, %v3110
  %v3117 = vadd.f32 %v2559, 1.0
  %v3118 = vlog2.pop %v3117
  %v3119 = vmul.f32 %v3118, 0.6931472
  %v3120 = vmul.f32 -0.5, %v2559
  %v3121 = vadd.f32 %v3120, 1.0
  %v3122 = vmul.f32 %v3121, %v2559
  %v3123 = vand.u32 2147483647, %v2559
  %vm3124 = vcmp.lt.f32.partialorder %v3123, 0.0004427343
  %v3125 = vsel %vm3124, %v3122, %v3119
  %v3126 = vadd.f32 %v2561, 1.0
  %v3127 = vlog2.pop %v3126
  %v3128 = vmul.f32 %v3127, 0.6931472
  %v3129 = vmul.f32 -0.5, %v2561
  %v3130 = vadd.f32 %v3129, 1.0
  %v3131 = vmul.f32 %v3130, %v2561
  %v3132 = vand.u32 2147483647, %v2561
  %vm3133 = vcmp.lt.f32.partialorder %v3132, 0.0004427343
  %v3134 = vsel %vm3133, %v3131, %v3128
  %v3135 = vadd.f32 %v2563, 1.0
  %v3136 = vlog2.pop %v3135
  %v3137 = vmul.f32 %v3136, 0.6931472
  %v3138 = vmul.f32 -0.5, %v2563
  %v3139 = vadd.f32 %v3138, 1.0
  %v3140 = vmul.f32 %v3139, %v2563
  %v3141 = vand.u32 2147483647, %v2563
  %vm3142 = vcmp.lt.f32.partialorder %v3141, 0.0004427343
  %v3143 = vsel %vm3142, %v3140, %v3137
  %v3144 = vadd.f32 %v2565, 1.0
  %v3145 = vlog2.pop %v3144
  %v3146 = vmul.f32 %v3145, 0.6931472
  %v3147 = vmul.f32 -0.5, %v2565
  %v3148 = vadd.f32 %v3147, 1.0
  %v3149 = vmul.f32 %v3148, %v2565
  %v3150 = vand.u32 2147483647, %v2565
  %vm3151 = vcmp.lt.f32.partialorder %v3150, 0.0004427343
  %v3152 = vsel %vm3151, %v3149, %v3146
  %v3153 = vadd.f32 %v2567, 1.0
  %v3154 = vlog2.pop %v3153
  %v3155 = vmul.f32 %v3154, 0.6931472
  %v3156 = vmul.f32 -0.5, %v2567
  %v3157 = vadd.f32 %v3156, 1.0
  %v3158 = vmul.f32 %v3157, %v2567
  %v3159 = vand.u32 2147483647, %v2567
  %vm3160 = vcmp.lt.f32.partialorder %v3159, 0.0004427343
  %v3161 = vsel %vm3160, %v3158, %v3155
  %v3162 = vadd.f32 %v2569, 1.0
  %v3163 = vlog2.pop %v3162
  %v3164 = vmul.f32 %v3163, 0.6931472
  %v3165 = vmul.f32 -0.5, %v2569
  %v3166 = vadd.f32 %v3165, 1.0
  %v3167 = vmul.f32 %v3166, %v2569
  %v3168 = vand.u32 2147483647, %v2569
  %vm3169 = vcmp.lt.f32.partialorder %v3168, 0.0004427343
  %v3170 = vsel %vm3169, %v3167, %v3164
  %v3171 = vadd.f32 %v2571, 1.0
  %v3172 = vlog2.pop %v3171
  %v3173 = vmul.f32 %v3172, 0.6931472
  %v3174 = vmul.f32 -0.5, %v2571
  %v3175 = vadd.f32 %v3174, 1.0
  %v3176 = vmul.f32 %v3175, %v2571
  %v3177 = vand.u32 2147483647, %v2571
  %vm3178 = vcmp.lt.f32.partialorder %v3177, 0.0004427343
  %v3179 = vsel %vm3178, %v3176, %v3173
  %v3180 = vadd.f32 %v2573, 1.0
  %v3181 = vlog2.pop %v3180
  %v3182 = vmul.f32 %v3181, 0.6931472
  %v3183 = vmul.f32 -0.5, %v2573
  %v3184 = vadd.f32 %v3183, 1.0
  %v3185 = vmul.f32 %v3184, %v2573
  %v3186 = vand.u32 2147483647, %v2573
  %vm3187 = vcmp.lt.f32.partialorder %v3186, 0.0004427343
  %v3188 = vsel %vm3187, %v3185, %v3182
  %v3189 = vadd.f32 %v2575, 1.0
  %v3190 = vlog2.pop %v3189
  %v3191 = vmul.f32 %v3190, 0.6931472
  %v3192 = vmul.f32 -0.5, %v2575
  %v3193 = vadd.f32 %v3192, 1.0
  %v3194 = vmul.f32 %v3193, %v2575
  %v3195 = vand.u32 2147483647, %v2575
  %vm3196 = vcmp.lt.f32.partialorder %v3195, 0.0004427343
  %v3197 = vsel %vm3196, %v3194, %v3191
  %v3198 = vadd.f32 %v2577, 1.0
  %v3199 = vlog2.pop %v3198
  %v3200 = vmul.f32 %v3199, 0.6931472
  %v3201 = vmul.f32 -0.5, %v2577
  %v3202 = vadd.f32 %v3201, 1.0
  %v3203 = vmul.f32 %v3202, %v2577
  %v3204 = vand.u32 2147483647, %v2577
  %vm3205 = vcmp.lt.f32.partialorder %v3204, 0.0004427343
  %v3206 = vsel %vm3205, %v3203, %v3200
  %v3207 = vadd.f32 %v2579, 1.0
  %v3208 = vlog2.pop %v3207
  %v3209 = vmul.f32 %v3208, 0.6931472
  %v3210 = vmul.f32 -0.5, %v2579
  %v3211 = vadd.f32 %v3210, 1.0
  %v3212 = vmul.f32 %v3211, %v2579
  %v3213 = vand.u32 2147483647, %v2579
  %vm3214 = vcmp.lt.f32.partialorder %v3213, 0.0004427343
  %v3215 = vsel %vm3214, %v3212, %v3209
  %v3216 = vadd.f32 %v2581, 1.0
  %v3217 = vlog2.pop %v3216
  %v3218 = vmul.f32 %v3217, 0.6931472
  %v3219 = vmul.f32 -0.5, %v2581
  %v3220 = vadd.f32 %v3219, 1.0
  %v3221 = vmul.f32 %v3220, %v2581
  %v3222 = vand.u32 2147483647, %v2581
  %vm3223 = vcmp.lt.f32.partialorder %v3222, 0.0004427343
  %v3224 = vsel %vm3223, %v3221, %v3218
  %v3225 = vadd.f32 %v2583, 1.0
  %v3226 = vlog2.pop %v3225
  %v3227 = vmul.f32 %v3226, 0.6931472
  %v3228 = vmul.f32 -0.5, %v2583
  %v3229 = vadd.f32 %v3228, 1.0
  %v3230 = vmul.f32 %v3229, %v2583
  %v3231 = vand.u32 2147483647, %v2583
  %vm3232 = vcmp.lt.f32.partialorder %v3231, 0.0004427343
  %v3233 = vsel %vm3232, %v3230, %v3227
  %v3234 = vadd.f32 %v2585, 1.0
  %v3235 = vlog2.pop %v3234
  %v3236 = vmul.f32 %v3235, 0.6931472
  %v3237 = vmul.f32 -0.5, %v2585
  %v3238 = vadd.f32 %v3237, 1.0
  %v3239 = vmul.f32 %v3238, %v2585
  %v3240 = vand.u32 2147483647, %v2585
  %vm3241 = vcmp.lt.f32.partialorder %v3240, 0.0004427343
  %v3242 = vsel %vm3241, %v3239, %v3236
  %v3243 = vadd.f32 %v2587, 1.0
  %v3244 = vlog2.pop %v3243
  %v3245 = vmul.f32 %v3244, 0.6931472
  %v3246 = vmul.f32 -0.5, %v2587
  %v3247 = vadd.f32 %v3246, 1.0
  %v3248 = vmul.f32 %v3247, %v2587
  %v3249 = vand.u32 2147483647, %v2587
  %vm3250 = vcmp.lt.f32.partialorder %v3249, 0.0004427343
  %v3251 = vsel %vm3250, %v3248, %v3245
  %v3252 = vadd.f32 %v2589, 1.0
  %v3253 = vlog2.pop %v3252
  %v3254 = vmul.f32 %v3253, 0.6931472
  %v3255 = vmul.f32 -0.5, %v2589
  %v3256 = vadd.f32 %v3255, 1.0
  %v3257 = vmul.f32 %v3256, %v2589
  %v3258 = vand.u32 2147483647, %v2589
  %vm3259 = vcmp.lt.f32.partialorder %v3258, 0.0004427343
  %v3260 = vsel %vm3259, %v3257, %v3254
  %v3261 = vadd.f32 %v2591, 1.0
  %v3262 = vlog2.pop %v3261
  %v3263 = vmul.f32 %v3262, 0.6931472
  %v3264 = vmul.f32 -0.5, %v2591
  %v3265 = vadd.f32 %v3264, 1.0
  %v3266 = vmul.f32 %v3265, %v2591
  %v3267 = vand.u32 2147483647, %v2591
  %vm3268 = vcmp.lt.f32.partialorder %v3267, 0.0004427343
  %v3269 = vsel %vm3268, %v3266, %v3263
  %v3270 = vadd.f32 %v2593, 1.0
  %v3271 = vlog2.pop %v3270
  %v3272 = vmul.f32 %v3271, 0.6931472
  %v3273 = vmul.f32 -0.5, %v2593
  %v3274 = vadd.f32 %v3273, 1.0
  %v3275 = vmul.f32 %v3274, %v2593
  %v3276 = vand.u32 2147483647, %v2593
  %vm3277 = vcmp.lt.f32.partialorder %v3276, 0.0004427343
  %v3278 = vsel %vm3277, %v3275, %v3272
  %v3279 = vadd.f32 %v2595, 1.0
  %v3280 = vlog2.pop %v3279
  %v3281 = vmul.f32 %v3280, 0.6931472
  %v3282 = vmul.f32 -0.5, %v2595
  %v3283 = vadd.f32 %v3282, 1.0
  %v3284 = vmul.f32 %v3283, %v2595
  %v3285 = vand.u32 2147483647, %v2595
  %vm3286 = vcmp.lt.f32.partialorder %v3285, 0.0004427343
  %v3287 = vsel %vm3286, %v3284, %v3281
  %v3288 = vadd.f32 %v2597, 1.0
  %v3289 = vlog2.pop %v3288
  %v3290 = vmul.f32 %v3289, 0.6931472
  %v3291 = vmul.f32 -0.5, %v2597
  %v3292 = vadd.f32 %v3291, 1.0
  %v3293 = vmul.f32 %v3292, %v2597
  %v3294 = vand.u32 2147483647, %v2597
  %vm3295 = vcmp.lt.f32.partialorder %v3294, 0.0004427343
  %v3296 = vsel %vm3295, %v3293, %v3290
  %v3297 = vadd.f32 %v2599, 1.0
  %v3298 = vlog2.pop %v3297
  %v3299 = vmul.f32 %v3298, 0.6931472
  %v3300 = vmul.f32 -0.5, %v2599
  %v3301 = vadd.f32 %v3300, 1.0
  %v3302 = vmul.f32 %v3301, %v2599
  %v3303 = vand.u32 2147483647, %v2599
  %vm3304 = vcmp.lt.f32.partialorder %v3303, 0.0004427343
  %v3305 = vsel %vm3304, %v3302, %v3299
  %v3306 = vadd.f32 %v2601, 1.0
  %v3307 = vlog2.pop %v3306
  %v3308 = vmul.f32 %v3307, 0.6931472
  %v3309 = vmul.f32 -0.5, %v2601
  %v3310 = vadd.f32 %v3309, 1.0
  %v3311 = vmul.f32 %v3310, %v2601
  %v3312 = vand.u32 2147483647, %v2601
  %vm3313 = vcmp.lt.f32.partialorder %v3312, 0.0004427343
  %v3314 = vsel %vm3313, %v3311, %v3308
  %v3315 = vadd.f32 %v2603, 1.0
  %v3316 = vlog2.pop %v3315
  %v3317 = vmul.f32 %v3316, 0.6931472
  %v3318 = vmul.f32 -0.5, %v2603
  %v3319 = vadd.f32 %v3318, 1.0
  %v3320 = vmul.f32 %v3319, %v2603
  %v3321 = vand.u32 2147483647, %v2603
  %vm3322 = vcmp.lt.f32.partialorder %v3321, 0.0004427343
  %v3323 = vsel %vm3322, %v3320, %v3317
  %v3324 = vadd.f32 %v2204, %v2612
  %v3325 = vadd.f32 %v2205, %v2621
  %v3326 = vadd.f32 %v2206, %v2630
  %v3327 = vadd.f32 %v2207, %v2639
  %v3328 = vadd.f32 %v2208, %v2648
  %v3329 = vadd.f32 %v2209, %v2657
  %v3330 = vadd.f32 %v2210, %v2666
  %v3331 = vadd.f32 %v2211, %v2675
  %v3332 = vadd.f32 %v2212, %v2684
  %v3333 = vadd.f32 %v2213, %v2693
  %v3334 = vadd.f32 %v2214, %v2702
  %v3335 = vadd.f32 %v2215, %v2711
  %v3336 = vadd.f32 %v2216, %v2720
  %v3337 = vadd.f32 %v2217, %v2729
  %v3338 = vadd.f32 %v2218, %v2738
  %v3339 = vadd.f32 %v2219, %v2747
  %v3340 = vadd.f32 %v2220, %v2756
  %v3341 = vadd.f32 %v2221, %v2765
  %v3342 = vadd.f32 %v2222, %v2774
  %v3343 = vadd.f32 %v2223, %v2783
  %v3344 = vadd.f32 %v2224, %v2792
  %v3345 = vadd.f32 %v2225, %v2801
  %v3346 = vadd.f32 %v2226, %v2810
  %v3347 = vadd.f32 %v2227, %v2819
  %v3348 = vadd.f32 %v2228, %v2828
  %v3349 = vadd.f32 %v2229, %v2837
  %v3350 = vadd.f32 %v2230, %v2846
  %v3351 = vadd.f32 %v2231, %v2855
  %v3352 = vadd.f32 %v2232, %v2864
  %v3353 = vadd.f32 %v2233, %v2873
  %v3354 = vadd.f32 %v2234, %v2882
  %v3355 = vadd.f32 %v2235, %v2891
  %v3356 = vadd.f32 %v2236, %v2900
  %v3357 = vadd.f32 %v2237, %v2909
  %v3358 = vadd.f32 %v2238, %v2918
  %v3359 = vadd.f32 %v2239, %v2927
  %v3360 = vadd.f32 %v2240, %v2936
  %v3361 = vadd.f32 %v2241, %v2945
  %v3362 = vadd.f32 %v2242, %v2954
  %v3363 = vadd.f32 %v2243, %v2963
  %v3364 = vadd.f32 %v2244, %v2972
  %v3365 = vadd.f32 %v2245, %v2981
  %v3366 = vadd.f32 %v2246, %v2990
  %v3367 = vadd.f32 %v2247, %v2999
  %v3368 = vadd.f32 %v2248, %v3008
  %v3369 = vadd.f32 %v2249, %v3017
  %v3370 = vadd.f32 %v2250, %v3026
  %v3371 = vadd.f32 %v2251, %v3035
  %v3372 = vadd.f32 %v2252, %v3044
  %v3373 = vadd.f32 %v2253, %v3053
  %v3374 = vadd.f32 %v2254, %v3062
  %v3375 = vadd.f32 %v2255, %v3071
  %v3376 = vadd.f32 %v2256, %v3080
  %v3377 = vadd.f32 %v2257, %v3089
  %v3378 = vadd.f32 %v2258, %v3098
  %v3379 = vadd.f32 %v2259, %v3107
  %v3380 = vadd.f32 %v2260, %v3116
  %v3381 = vadd.f32 %v2261, %v3125
  %v3382 = vadd.f32 %v2262, %v3134
  %v3383 = vadd.f32 %v2263, %v3143
  %v3384 = vadd.f32 %v2264, %v3152
  %v3385 = vadd.f32 %v2265, %v3161
  %v3386 = vadd.f32 %v2266, %v3170
  %v3387 = vadd.f32 %v2267, %v3179
  %v3388 = vadd.f32 %v2268, %v3188
  %v3389 = vadd.f32 %v2269, %v3197
  %v3390 = vadd.f32 %v2270, %v3206
  %v3391 = vadd.f32 %v2271, %v3215
  %v3392 = vadd.f32 %v2272, %v3224
  %v3393 = vadd.f32 %v2273, %v3233
  %v3394 = vadd.f32 %v2274, %v3242
  %v3395 = vadd.f32 %v2275, %v3251
  %v3396 = vadd.f32 %v2276, %v3260
  %v3397 = vadd.f32 %v2277, %v3269
  %v3398 = vadd.f32 %v2278, %v3278
  %v3399 = vadd.f32 %v2279, %v3287
  %v3400 = vadd.f32 %v2280, %v3296
  %v3401 = vadd.f32 %v2281, %v3305
  %v3402 = vadd.f32 %v2282, %v3314
  %v3403 = vadd.f32 %v2283, %v3323
  %v3404 = vmul.f32 %v3324, %v2121
  %v3405 = vmul.f32 %v3325, %v2122
  %v3406 = vmul.f32 %v3326, %v2123
  %v3407 = vmul.f32 %v3327, %v2124
  %v3408 = vmul.f32 %v3328, %v2125
  %v3409 = vmul.f32 %v3329, %v2126
  %v3410 = vmul.f32 %v3330, %v2127
  %v3411 = vmul.f32 %v3331, %v2128
  %v3412 = vmul.f32 %v3332, %v2129
  %v3413 = vmul.f32 %v3333, %v2130
  %v3414 = vmul.f32 %v3334, %v2131
  %v3415 = vmul.f32 %v3335, %v2132
  %v3416 = vmul.f32 %v3336, %v2133
  %v3417 = vmul.f32 %v3337, %v2134
  %v3418 = vmul.f32 %v3338, %v2135
  %v3419 = vmul.f32 %v3339, %v2136
  %v3420 = vmul.f32 %v3340, %v2137
  %v3421 = vmul.f32 %v3341, %v2138
  %v3422 = vmul.f32 %v3342, %v2139
  %v3423 = vmul.f32 %v3343, %v2140
  %v3424 = vmul.f32 %v3344, %v2141
  %v3425 = vmul.f32 %v3345, %v2142
  %v3426 = vmul.f32 %v3346, %v2143
  %v3427 = vmul.f32 %v3347, %v2144
  %v3428 = vmul.f32 %v3348, %v2145
  %v3429 = vmul.f32 %v3349, %v2146
  %v3430 = vmul.f32 %v3350, %v2147
  %v3431 = vmul.f32 %v3351, %v2148
  %v3432 = vmul.f32 %v3352, %v2149
  %v3433 = vmul.f32 %v3353, %v2150
  %v3434 = vmul.f32 %v3354, %v2151
  %v3435 = vmul.f32 %v3355, %v2152
  %v3436 = vmul.f32 %v3356, %v2153
  %v3437 = vmul.f32 %v3357, %v2154
  %v3438 = vmul.f32 %v3358, %v2155
  %v3439 = vmul.f32 %v3359, %v2156
  %v3440 = vmul.f32 %v3360, %v2157
  %v3441 = vmul.f32 %v3361, %v2158
  %v3442 = vmul.f32 %v3362, %v2159
  %v3443 = vmul.f32 %v3363, %v2160
  %v3444 = vmul.f32 %v3364, %v2161
  %v3445 = vmul.f32 %v3365, %v2162
  %v3446 = vmul.f32 %v3366, %v2163
  %v3447 = vmul.f32 %v3367, %v2164
  %v3448 = vmul.f32 %v3368, %v2165
  %v3449 = vmul.f32 %v3369, %v2166
  %v3450 = vmul.f32 %v3370, %v2167
  %v3451 = vmul.f32 %v3371, %v2168
  %v3452 = vmul.f32 %v3372, %v2169
  %v3453 = vmul.f32 %v3373, %v2170
  %v3454 = vmul.f32 %v3374, %v2171
  %v3455 = vmul.f32 %v3375, %v2172
  %v3456 = vmul.f32 %v3376, %v2173
  %v3457 = vmul.f32 %v3377, %v2174
  %v3458 = vmul.f32 %v3378, %v2175
  %v3459 = vmul.f32 %v3379, %v2176
  %v3460 = vmul.f32 %v3380, %v2177
  %v3461 = vmul.f32 %v3381, %v2178
  %v3462 = vmul.f32 %v3382, %v2179
  %v3463 = vmul.f32 %v3383, %v2180
  %v3464 = vmul.f32 %v3384, %v2181
  %v3465 = vmul.f32 %v3385, %v2182
  %v3466 = vmul.f32 %v3386, %v2183
  %v3467 = vmul.f32 %v3387, %v2184
  %v3468 = vmul.f32 %v3388, %v2185
  %v3469 = vmul.f32 %v3389, %v2186
  %v3470 = vmul.f32 %v3390, %v2187
  %v3471 = vmul.f32 %v3391, %v2188
  %v3472 = vmul.f32 %v3392, %v2189
  %v3473 = vmul.f32 %v3393, %v2190
  %v3474 = vmul.f32 %v3394, %v2191
  %v3475 = vmul.f32 %v3395, %v2192
  %v3476 = vmul.f32 %v3396, %v2193
  %v3477 = vmul.f32 %v3397, %v2194
  %v3478 = vmul.f32 %v3398, %v2195
  %v3479 = vmul.f32 %v3399, %v2196
  %v3480 = vmul.f32 %v3400, %v2197
  %v3481 = vmul.f32 %v3401, %v2198
  %v3482 = vmul.f32 %v3402, %v2199
  %v3483 = vmul.f32 %v3403, %v2200
  %v3484 = vadd.f32 %v1961, %v3404
  %v3485 = vadd.f32 %v1962, %v3405
  %v3486 = vadd.f32 %v1963, %v3406
  %v3487 = vadd.f32 %v1964, %v3407
  %v3488 = vadd.f32 %v1965, %v3408
  %v3489 = vadd.f32 %v1966, %v3409
  %v3490 = vadd.f32 %v1967, %v3410
  %v3491 = vadd.f32 %v1968, %v3411
  %v3492 = vadd.f32 %v1969, %v3412
  %v3493 = vadd.f32 %v1970, %v3413
  %v3494 = vadd.f32 %v1971, %v3414
  %v3495 = vadd.f32 %v1972, %v3415
  %v3496 = vadd.f32 %v1973, %v3416
  %v3497 = vadd.f32 %v1974, %v3417
  %v3498 = vadd.f32 %v1975, %v3418
  %v3499 = vadd.f32 %v1976, %v3419
  %v3500 = vadd.f32 %v1977, %v3420
  %v3501 = vadd.f32 %v1978, %v3421
  %v3502 = vadd.f32 %v1979, %v3422
  %v3503 = vadd.f32 %v1980, %v3423
  %v3504 = vadd.f32 %v1981, %v3424
  %v3505 = vadd.f32 %v1982, %v3425
  %v3506 = vadd.f32 %v1983, %v3426
  %v3507 = vadd.f32 %v1984, %v3427
  %v3508 = vadd.f32 %v1985, %v3428
  %v3509 = vadd.f32 %v1986, %v3429
  %v3510 = vadd.f32 %v1987, %v3430
  %v3511 = vadd.f32 %v1988, %v3431
  %v3512 = vadd.f32 %v1989, %v3432
  %v3513 = vadd.f32 %v1990, %v3433
  %v3514 = vadd.f32 %v1991, %v3434
  %v3515 = vadd.f32 %v1992, %v3435
  %v3516 = vadd.f32 %v1993, %v3436
  %v3517 = vadd.f32 %v1994, %v3437
  %v3518 = vadd.f32 %v1995, %v3438
  %v3519 = vadd.f32 %v1996, %v3439
  %v3520 = vadd.f32 %v1997, %v3440
  %v3521 = vadd.f32 %v1998, %v3441
  %v3522 = vadd.f32 %v1999, %v3442
  %v3523 = vadd.f32 %v2000, %v3443
  %v3524 = vadd.f32 %v2001, %v3444
  %v3525 = vadd.f32 %v2002, %v3445
  %v3526 = vadd.f32 %v2003, %v3446
  %v3527 = vadd.f32 %v2004, %v3447
  %v3528 = vadd.f32 %v2005, %v3448
  %v3529 = vadd.f32 %v2006, %v3449
  %v3530 = vadd.f32 %v2007, %v3450
  %v3531 = vadd.f32 %v2008, %v3451
  %v3532 = vadd.f32 %v2009, %v3452
  %v3533 = vadd.f32 %v2010, %v3453
  %v3534 = vadd.f32 %v2011, %v3454
  %v3535 = vadd.f32 %v2012, %v3455
  %v3536 = vadd.f32 %v2013, %v3456
  %v3537 = vadd.f32 %v2014, %v3457
  %v3538 = vadd.f32 %v2015, %v3458
  %v3539 = vadd.f32 %v2016, %v3459
  %v3540 = vadd.f32 %v2017, %v3460
  %v3541 = vadd.f32 %v2018, %v3461
  %v3542 = vadd.f32 %v2019, %v3462
  %v3543 = vadd.f32 %v2020, %v3463
  %v3544 = vadd.f32 %v2021, %v3464
  %v3545 = vadd.f32 %v2022, %v3465
  %v3546 = vadd.f32 %v2023, %v3466
  %v3547 = vadd.f32 %v2024, %v3467
  %v3548 = vadd.f32 %v2025, %v3468
  %v3549 = vadd.f32 %v2026, %v3469
  %v3550 = vadd.f32 %v2027, %v3470
  %v3551 = vadd.f32 %v2028, %v3471
  %v3552 = vadd.f32 %v2029, %v3472
  %v3553 = vadd.f32 %v2030, %v3473
  %v3554 = vadd.f32 %v2031, %v3474
  %v3555 = vadd.f32 %v2032, %v3475
  %v3556 = vadd.f32 %v2033, %v3476
  %v3557 = vadd.f32 %v2034, %v3477
  %v3558 = vadd.f32 %v2035, %v3478
  %v3559 = vadd.f32 %v2036, %v3479
  %v3560 = vadd.f32 %v2037, %v3480
  %v3561 = vadd.f32 %v2038, %v3481
  %v3562 = vadd.f32 %v2039, %v3482
  %v3563 = vadd.f32 %v2040, %v3483
  %v3564 = vmax.f32 %v2202, 0.0
  %v3565 = vand.u32 2147483647, %v2202
  %v3566 = vsub.f32 0.0, %v3565
  %v3567 = vmul.f32 %v3566, 1.442695
  %v3568 = vpow.pop %v3567
  %v3569 = vadd.f32 %v3568, 1.0
  %v3570 = vlog2.pop %v3569
  %v3571 = vmul.f32 %v3570, 0.6931472
  %v3572 = vmul.f32 -0.5, %v3568
  %v3573 = vadd.f32 %v3572, 1.0
  %v3574 = vmul.f32 %v3573, %v3568
  %v3575 = vand.u32 2147483647, %v3568
  %vm3576 = vcmp.lt.f32.partialorder %v3575, 0.0004427343
  %v3577 = vsel %vm3576, %v3574, %v3571
  %v3578 = vadd.f32 %v3564, %v3577
  %v3579 = vmul.f32 %v3578, %v2203
  %v3580 = vadd.f32 %v2201, %v3579
  %3581 = vmatprep.subr.mxu0 0.0
  %3582 = vmatpush1.msra.mxu0 %v3484
  %3583 = vmatprep.subr.mxu0 0.0
  %3584 = vmatpush1.msra.mxu0 %v3485
  %3585 = vmatprep.subr.mxu0 0.0
  %3586 = vmatpush1.msra.mxu0 %v3486
  %3587 = vmatprep.subr.mxu0 0.0
  %3588 = vmatpush1.msra.mxu0 %v3487
  %3589 = vmatprep.subr.mxu0 0.0
  %3590 = vmatpush1.msra.mxu0 %v3488
  %3591 = vmatprep.subr.mxu0 0.0
  %3592 = vmatpush1.msra.mxu0 %v3489
  %3593 = vmatprep.subr.mxu0 0.0
  %3594 = vmatpush1.msra.mxu0 %v3490
  %3595 = vmatprep.subr.mxu0 0.0
  %3596 = vmatpush1.msra.mxu0 %v3491
  %3597 = vmatprep.subr.mxu0 0.0
  %3598 = vmatpush1.msra.mxu0 %v3492
  %3599 = vmatprep.subr.mxu0 0.0
  %3600 = vmatpush1.msra.mxu0 %v3493
  %3601 = vmatprep.subr.mxu0 0.0
  %3602 = vmatpush1.msra.mxu0 %v3494
  %3603 = vmatprep.subr.mxu0 0.0
  %3604 = vmatpush1.msra.mxu0 %v3495
  %3605 = vmatprep.subr.mxu0 0.0
  %3606 = vmatpush1.msra.mxu0 %v3496
  %3607 = vmatprep.subr.mxu0 0.0
  %3608 = vmatpush1.msra.mxu0 %v3497
  %3609 = vmatprep.subr.mxu0 0.0
  %3610 = vmatpush1.msra.mxu0 %v3498
  %3611 = vmatprep.subr.mxu0 0.0
  %3612 = vmatpush1.msra.mxu0 %v3499
  %3613 = vmatprep.subr.mxu0 0.0
  %3614 = vmatpush1.msra.mxu0 %v3500
  %3615 = vmatprep.subr.mxu0 0.0
  %3616 = vmatpush1.msra.mxu0 %v3501
  %3617 = vmatprep.subr.mxu0 0.0
  %3618 = vmatpush1.msra.mxu0 %v3502
  %3619 = vmatprep.subr.mxu0 0.0
  %3620 = vmatpush1.msra.mxu0 %v3503
  %3621 = vmatprep.subr.mxu0 0.0
  %3622 = vmatpush1.msra.mxu0 %v3504
  %3623 = vmatprep.subr.mxu0 0.0
  %3624 = vmatpush1.msra.mxu0 %v3505
  %3625 = vmatprep.subr.mxu0 0.0
  %3626 = vmatpush1.msra.mxu0 %v3506
  %3627 = vmatprep.subr.mxu0 0.0
  %3628 = vmatpush1.msra.mxu0 %v3507
  %3629 = vmatprep.subr.mxu0 0.0
  %3630 = vmatpush1.msra.mxu0 %v3508
  %3631 = vmatprep.subr.mxu0 0.0
  %3632 = vmatpush1.msra.mxu0 %v3509
  %3633 = vmatprep.subr.mxu0 0.0
  %3634 = vmatpush1.msra.mxu0 %v3510
  %3635 = vmatprep.subr.mxu0 0.0
  %3636 = vmatpush1.msra.mxu0 %v3511
  %3637 = vmatprep.subr.mxu0 0.0
  %3638 = vmatpush1.msra.mxu0 %v3512
  %3639 = vmatprep.subr.mxu0 0.0
  %3640 = vmatpush1.msra.mxu0 %v3513
  %3641 = vmatprep.subr.mxu0 0.0
  %3642 = vmatpush1.msra.mxu0 %v3514
  %3643 = vmatprep.subr.mxu0 0.0
  %3644 = vmatpush1.msra.mxu0 %v3515
  %3645 = vmatprep.mubr.f32.mxu0 %v1950
  %3646 = vmatmul.mubr.f32.gmra.mrb[0].mxu0 %v1949
  %v3647 = vpop.f32.mrb[0].mxu0
  %v3648 = vadd.f32 %v3580, %v3647
  %v3649 = vpop.f32.mrb[0].mxu0
  %3650 = vdwg.mxu0
  %3651 = vmatprep.subr.mxu0 0.0
  %3652 = vmatpush1.msra.mxu0 %v3516
  %3653 = vmatprep.subr.mxu0 0.0
  %3654 = vmatpush1.msra.mxu0 %v3517
  %3655 = vmatprep.subr.mxu0 0.0
  %3656 = vmatpush1.msra.mxu0 %v3518
  %3657 = vmatprep.subr.mxu0 0.0
  %3658 = vmatpush1.msra.mxu0 %v3519
  %3659 = vmatprep.subr.mxu0 0.0
  %3660 = vmatpush1.msra.mxu0 %v3520
  %3661 = vmatprep.subr.mxu0 0.0
  %3662 = vmatpush1.msra.mxu0 %v3521
  %3663 = vmatprep.subr.mxu0 0.0
  %3664 = vmatpush1.msra.mxu0 %v3522
  %3665 = vmatprep.subr.mxu0 0.0
  %3666 = vmatpush1.msra.mxu0 %v3523
  %3667 = vmatprep.subr.mxu0 0.0
  %3668 = vmatpush1.msra.mxu0 %v3524
  %3669 = vmatprep.subr.mxu0 0.0
  %3670 = vmatpush1.msra.mxu0 %v3525
  %3671 = vmatprep.subr.mxu0 0.0
  %3672 = vmatpush1.msra.mxu0 %v3526
  %3673 = vmatprep.subr.mxu0 0.0
  %3674 = vmatpush1.msra.mxu0 %v3527
  %3675 = vmatprep.subr.mxu0 0.0
  %3676 = vmatpush1.msra.mxu0 %v3528
  %3677 = vmatprep.subr.mxu0 0.0
  %3678 = vmatpush1.msra.mxu0 %v3529
  %3679 = vmatprep.subr.mxu0 0.0
  %3680 = vmatpush1.msra.mxu0 %v3530
  %3681 = vmatprep.subr.mxu0 0.0
  %3682 = vmatpush1.msra.mxu0 %v3531
  %3683 = vmatprep.subr.mxu0 0.0
  %3684 = vmatpush1.msra.mxu0 %v3532
  %3685 = vmatprep.subr.mxu0 0.0
  %3686 = vmatpush1.msra.mxu0 %v3533
  %3687 = vmatprep.subr.mxu0 0.0
  %3688 = vmatpush1.msra.mxu0 %v3534
  %3689 = vmatprep.subr.mxu0 0.0
  %3690 = vmatpush1.msra.mxu0 %v3535
  %3691 = vmatprep.subr.mxu0 0.0
  %3692 = vmatpush1.msra.mxu0 %v3536
  %3693 = vmatprep.subr.mxu0 0.0
  %3694 = vmatpush1.msra.mxu0 %v3537
  %3695 = vmatprep.subr.mxu0 0.0
  %3696 = vmatpush1.msra.mxu0 %v3538
  %3697 = vmatprep.subr.mxu0 0.0
  %3698 = vmatpush1.msra.mxu0 %v3539
  %3699 = vmatprep.subr.mxu0 0.0
  %3700 = vmatpush1.msra.mxu0 %v3540
  %3701 = vmatprep.subr.mxu0 0.0
  %3702 = vmatpush1.msra.mxu0 %v3541
  %3703 = vmatprep.subr.mxu0 0.0
  %3704 = vmatpush1.msra.mxu0 %v3542
  %3705 = vmatprep.subr.mxu0 0.0
  %3706 = vmatpush1.msra.mxu0 %v3543
  %3707 = vmatprep.subr.mxu0 0.0
  %3708 = vmatpush1.msra.mxu0 %v3544
  %3709 = vmatprep.subr.mxu0 0.0
  %3710 = vmatpush1.msra.mxu0 %v3545
  %3711 = vmatprep.subr.mxu0 0.0
  %3712 = vmatpush1.msra.mxu0 %v3546
  %3713 = vmatprep.subr.mxu0 0.0
  %3714 = vmatpush1.msra.mxu0 %v3547
  %3715 = vmatprep.mubr.f32.mxu0 %v1952
  %3716 = vmatmul.mubr.f32.gmra.mrb[0].mxu0 %v1951
  %v3717 = vpop.f32.mrb[0].mxu0
  %v3718 = vadd.f32 %v3648, %v3717
  %v3719 = vpop.f32.mrb[0].mxu0
  %3720 = vdwg.mxu0
  %3721 = vmatprep.subr.mxu0 0.0
  %3722 = vmatpush1.msra.mxu0 %v3548
  %3723 = vmatprep.subr.mxu0 0.0
  %3724 = vmatpush1.msra.mxu0 %v3549
  %3725 = vmatprep.subr.mxu0 0.0
  %3726 = vmatpush1.msra.mxu0 %v3550
  %3727 = vmatprep.subr.mxu0 0.0
  %3728 = vmatpush1.msra.mxu0 %v3551
  %3729 = vmatprep.subr.mxu0 0.0
  %3730 = vmatpush1.msra.mxu0 %v3552
  %3731 = vmatprep.subr.mxu0 0.0
  %3732 = vmatpush1.msra.mxu0 %v3553
  %3733 = vmatprep.subr.mxu0 0.0
  %3734 = vmatpush1.msra.mxu0 %v3554
  %3735 = vmatprep.subr.mxu0 0.0
  %3736 = vmatpush1.msra.mxu0 %v3555
  %3737 = vmatprep.subr.mxu0 0.0
  %3738 = vmatpush1.msra.mxu0 %v3556
  %3739 = vmatprep.subr.mxu0 0.0
  %3740 = vmatpush1.msra.mxu0 %v3557
  %3741 = vmatprep.subr.mxu0 0.0
  %3742 = vmatpush1.msra.mxu0 %v3558
  %3743 = vmatprep.subr.mxu0 0.0
  %3744 = vmatpush1.msra.mxu0 %v3559
  %3745 = vmatprep.subr.mxu0 0.0
  %3746 = vmatpush1.msra.mxu0 %v3560
  %3747 = vmatprep.subr.mxu0 0.0
  %3748 = vmatpush1.msra.mxu0 %v3561
  %3749 = vmatprep.subr.mxu0 0.0
  %3750 = vmatpush1.msra.mxu0 %v3562
  %3751 = vmatprep.subr.mxu0 0.0
  %3752 = vmatpush1.msra.mxu0 %v3563
  %3753 = vmatprep.subr.mxu0 0.0
  %3754 = vmatpush1.msra.mxu0 0.0
  %3755 = vmatprep.subr.mxu0 0.0
  %3756 = vmatpush1.msra.mxu0 0.0
  %3757 = vmatprep.subr.mxu0 0.0
  %3758 = vmatpush1.msra.mxu0 0.0
  %3759 = vmatprep.subr.mxu0 0.0
  %3760 = vmatpush1.msra.mxu0 0.0
  %3761 = vmatprep.subr.mxu0 0.0
  %3762 = vmatpush1.msra.mxu0 0.0
  %3763 = vmatprep.subr.mxu0 0.0
  %3764 = vmatpush1.msra.mxu0 0.0
  %3765 = vmatprep.subr.mxu0 0.0
  %3766 = vmatpush1.msra.mxu0 0.0
  %3767 = vmatprep.subr.mxu0 0.0
  %3768 = vmatpush1.msra.mxu0 0.0
  %3769 = vmatprep.subr.mxu0 0.0
  %3770 = vmatpush1.msra.mxu0 0.0
  %3771 = vmatprep.subr.mxu0 0.0
  %3772 = vmatpush1.msra.mxu0 0.0
  %3773 = vmatprep.subr.mxu0 0.0
  %3774 = vmatpush1.msra.mxu0 0.0
  %3775 = vmatprep.subr.mxu0 0.0
  %3776 = vmatpush1.msra.mxu0 0.0
  %3777 = vmatprep.subr.mxu0 0.0
  %3778 = vmatpush1.msra.mxu0 0.0
  %3779 = vmatprep.subr.mxu0 0.0
  %3780 = vmatpush1.msra.mxu0 0.0
  %3781 = vmatprep.subr.mxu0 0.0
  %3782 = vmatpush1.msra.mxu0 0.0
  %3783 = vmatprep.subr.mxu0 0.0
  %3784 = vmatpush1.msra.mxu0 0.0
  %3785 = vmatprep.mubr.f32.mxu0 0.0
  %3786 = vmatmul.mubr.f32.gmra.mrb[0].mxu0 %v1953
  %v3787 = vpop.f32.mrb[0].mxu0
  %v3788 = vadd.f32 %v3718, %v3787
  %v3789 = vpop.f32.mrb[0].mxu0
  %3790 = vdwg.mxu0
  %v3791 = vmax.f32 %v3788, 0.0
  %s3792 = smul.u32 120, 1
  %s3793 = sshll.u32 %s3792, 4
  %3794 = dma.done %s634, %s3793
  %s3795 = sshll.u32 %s3792, 4
  %3796 = dma.done %s705, %s3795
  %s3797 = sshll.u32 %s3792, 4
  %3798 = dma.done %s776, %s3797
  %v3799 = vld [vmem:[#allocation5] sm:$0xff]
  %v3800 = vld [vmem:[#allocation5 + $0x8] sm:$0xff]
  %v3801 = vld [vmem:[#allocation5 + $0x10] sm:$0xff]
  %v3802 = vld [vmem:[#allocation5 + $0x18] sm:$0xff]
  %v3803 = vld [vmem:[#allocation5 + $0x20] sm:$0xff]
  %v3804 = vld [vmem:[#allocation5 + $0x28] sm:$0xff]
  %v3805 = vld [vmem:[#allocation5 + $0x30] sm:$0xff]
  %v3806 = vld [vmem:[#allocation5 + $0x38] sm:$0xff]
  %v3807 = vld [vmem:[#allocation5 + $0x40] sm:$0xff]
  %v3808 = vld [vmem:[#allocation5 + $0x48] sm:$0xff]
  %v3809 = vld [vmem:[#allocation5 + $0x50] sm:$0xff]
  %v3810 = vld [vmem:[#allocation5 + $0x58] sm:$0xff]
  %v3811 = vld [vmem:[#allocation5 + $0x60] sm:$0xff]
  %v3812 = vld [vmem:[#allocation5 + $0x68] sm:$0xff]
  %v3813 = vld [vmem:[#allocation5 + $0x70] sm:$0xff]
  %v3814 = vld [vmem:[#allocation6] sm:$0xff]
  %v3815 = vld [vmem:[#allocation6 + $0x8] sm:$0xff]
  %v3816 = vld [vmem:[#allocation6 + $0x10] sm:$0xff]
  %v3817 = vld [vmem:[#allocation6 + $0x18] sm:$0xff]
  %v3818 = vld [vmem:[#allocation6 + $0x20] sm:$0xff]
  %v3819 = vld [vmem:[#allocation6 + $0x28] sm:$0xff]
  %v3820 = vld [vmem:[#allocation6 + $0x30] sm:$0xff]
  %v3821 = vld [vmem:[#allocation6 + $0x38] sm:$0xff]
  %v3822 = vld [vmem:[#allocation6 + $0x40] sm:$0xff]
  %v3823 = vld [vmem:[#allocation6 + $0x48] sm:$0xff]
  %v3824 = vld [vmem:[#allocation6 + $0x50] sm:$0xff]
  %v3825 = vld [vmem:[#allocation6 + $0x58] sm:$0xff]
  %v3826 = vld [vmem:[#allocation6 + $0x60] sm:$0xff]
  %v3827 = vld [vmem:[#allocation6 + $0x68] sm:$0xff]
  %v3828 = vld [vmem:[#allocation6 + $0x70] sm:$0xff]
  %v3829 = vld [vmem:[#allocation7] sm:$0xff]
  %v3830 = vld [vmem:[#allocation7 + $0x8] sm:$0xff]
  %v3831 = vld [vmem:[#allocation7 + $0x10] sm:$0xff]
  %v3832 = vld [vmem:[#allocation7 + $0x18] sm:$0xff]
  %v3833 = vld [vmem:[#allocation7 + $0x20] sm:$0xff]
  %v3834 = vld [vmem:[#allocation7 + $0x28] sm:$0xff]
  %v3835 = vld [vmem:[#allocation7 + $0x30] sm:$0xff]
  %v3836 = vld [vmem:[#allocation7 + $0x38] sm:$0xff]
  %v3837 = vld [vmem:[#allocation7 + $0x40] sm:$0xff]
  %v3838 = vld [vmem:[#allocation7 + $0x48] sm:$0xff]
  %v3839 = vld [vmem:[#allocation7 + $0x50] sm:$0xff]
  %v3840 = vld [vmem:[#allocation7 + $0x58] sm:$0xff]
  %v3841 = vld [vmem:[#allocation7 + $0x60] sm:$0xff]
  %v3842 = vld [vmem:[#allocation7 + $0x68] sm:$0xff]
  %v3843 = vld [vmem:[#allocation7 + $0x70] sm:$0xff]
  %v3844 = vld [vmem:[%s3 + $0x5] ss:$0 sm:$0xff]
  %v3845 = vld [vmem:[%s3 + $0x6] ss:$0 sm:$0xff]
  %v3846 = vld [vmem:[%s3 + $0x7] ss:$0 sm:$0xff]
  %v3847 = vmax.f32 %v3814, 0.0
  %v3848 = vmax.f32 %v3815, 0.0
  %v3849 = vmax.f32 %v3816, 0.0
  %v3850 = vmax.f32 %v3817, 0.0
  %v3851 = vmax.f32 %v3818, 0.0
  %v3852 = vmax.f32 %v3819, 0.0
  %v3853 = vmax.f32 %v3820, 0.0
  %v3854 = vmax.f32 %v3821, 0.0
  %v3855 = vmax.f32 %v3822, 0.0
  %v3856 = vmax.f32 %v3823, 0.0
  %v3857 = vmax.f32 %v3824, 0.0
  %v3858 = vmax.f32 %v3825, 0.0
  %v3859 = vmax.f32 %v3826, 0.0
  %v3860 = vmax.f32 %v3827, 0.0
  %v3861 = vmax.f32 %v3828, 0.0
  %v3862 = vand.u32 2147483647, %v3814
  %v3863 = vand.u32 2147483647, %v3815
  %v3864 = vand.u32 2147483647, %v3816
  %v3865 = vand.u32 2147483647, %v3817
  %v3866 = vand.u32 2147483647, %v3818
  %v3867 = vand.u32 2147483647, %v3819
  %v3868 = vand.u32 2147483647, %v3820
  %v3869 = vand.u32 2147483647, %v3821
  %v3870 = vand.u32 2147483647, %v3822
  %v3871 = vand.u32 2147483647, %v3823
  %v3872 = vand.u32 2147483647, %v3824
  %v3873 = vand.u32 2147483647, %v3825
  %v3874 = vand.u32 2147483647, %v3826
  %v3875 = vand.u32 2147483647, %v3827
  %v3876 = vand.u32 2147483647, %v3828
  %v3877 = vsub.f32 0.0, %v3862
  %v3878 = vsub.f32 0.0, %v3863
  %v3879 = vsub.f32 0.0, %v3864
  %v3880 = vsub.f32 0.0, %v3865
  %v3881 = vsub.f32 0.0, %v3866
  %v3882 = vsub.f32 0.0, %v3867
  %v3883 = vsub.f32 0.0, %v3868
  %v3884 = vsub.f32 0.0, %v3869
  %v3885 = vsub.f32 0.0, %v3870
  %v3886 = vsub.f32 0.0, %v3871
  %v3887 = vsub.f32 0.0, %v3872
  %v3888 = vsub.f32 0.0, %v3873
  %v3889 = vsub.f32 0.0, %v3874
  %v3890 = vsub.f32 0.0, %v3875
  %v3891 = vsub.f32 0.0, %v3876
  %v3892 = vmul.f32 %v3877, 1.442695
  %v3893 = vpow.pop %v3892
  %v3894 = vmul.f32 %v3878, 1.442695
  %v3895 = vpow.pop %v3894
  %v3896 = vmul.f32 %v3879, 1.442695
  %v3897 = vpow.pop %v3896
  %v3898 = vmul.f32 %v3880, 1.442695
  %v3899 = vpow.pop %v3898
  %v3900 = vmul.f32 %v3881, 1.442695
  %v3901 = vpow.pop %v3900
  %v3902 = vmul.f32 %v3882, 1.442695
  %v3903 = vpow.pop %v3902
  %v3904 = vmul.f32 %v3883, 1.442695
  %v3905 = vpow.pop %v3904
  %v3906 = vmul.f32 %v3884, 1.442695
  %v3907 = vpow.pop %v3906
  %v3908 = vmul.f32 %v3885, 1.442695
  %v3909 = vpow.pop %v3908
  %v3910 = vmul.f32 %v3886, 1.442695
  %v3911 = vpow.pop %v3910
  %v3912 = vmul.f32 %v3887, 1.442695
  %v3913 = vpow.pop %v3912
  %v3914 = vmul.f32 %v3888, 1.442695
  %v3915 = vpow.pop %v3914
  %v3916 = vmul.f32 %v3889, 1.442695
  %v3917 = vpow.pop %v3916
  %v3918 = vmul.f32 %v3890, 1.442695
  %v3919 = vpow.pop %v3918
  %v3920 = vmul.f32 %v3891, 1.442695
  %v3921 = vpow.pop %v3920
  %v3922 = vadd.f32 %v3893, 1.0
  %v3923 = vlog2.pop %v3922
  %v3924 = vmul.f32 %v3923, 0.6931472
  %v3925 = vmul.f32 -0.5, %v3893
  %v3926 = vadd.f32 %v3925, 1.0
  %v3927 = vmul.f32 %v3926, %v3893
  %v3928 = vand.u32 2147483647, %v3893
  %vm3929 = vcmp.lt.f32.partialorder %v3928, 0.0004427343
  %v3930 = vsel %vm3929, %v3927, %v3924
  %v3931 = vadd.f32 %v3895, 1.0
  %v3932 = vlog2.pop %v3931
  %v3933 = vmul.f32 %v3932, 0.6931472
  %v3934 = vmul.f32 -0.5, %v3895
  %v3935 = vadd.f32 %v3934, 1.0
  %v3936 = vmul.f32 %v3935, %v3895
  %v3937 = vand.u32 2147483647, %v3895
  %vm3938 = vcmp.lt.f32.partialorder %v3937, 0.0004427343
  %v3939 = vsel %vm3938, %v3936, %v3933
  %v3940 = vadd.f32 %v3897, 1.0
  %v3941 = vlog2.pop %v3940
  %v3942 = vmul.f32 %v3941, 0.6931472
  %v3943 = vmul.f32 -0.5, %v3897
  %v3944 = vadd.f32 %v3943, 1.0
  %v3945 = vmul.f32 %v3944, %v3897
  %v3946 = vand.u32 2147483647, %v3897
  %vm3947 = vcmp.lt.f32.partialorder %v3946, 0.0004427343
  %v3948 = vsel %vm3947, %v3945, %v3942
  %v3949 = vadd.f32 %v3899, 1.0
  %v3950 = vlog2.pop %v3949
  %v3951 = vmul.f32 %v3950, 0.6931472
  %v3952 = vmul.f32 -0.5, %v3899
  %v3953 = vadd.f32 %v3952, 1.0
  %v3954 = vmul.f32 %v3953, %v3899
  %v3955 = vand.u32 2147483647, %v3899
  %vm3956 = vcmp.lt.f32.partialorder %v3955, 0.0004427343
  %v3957 = vsel %vm3956, %v3954, %v3951
  %v3958 = vadd.f32 %v3901, 1.0
  %v3959 = vlog2.pop %v3958
  %v3960 = vmul.f32 %v3959, 0.6931472
  %v3961 = vmul.f32 -0.5, %v3901
  %v3962 = vadd.f32 %v3961, 1.0
  %v3963 = vmul.f32 %v3962, %v3901
  %v3964 = vand.u32 2147483647, %v3901
  %vm3965 = vcmp.lt.f32.partialorder %v3964, 0.0004427343
  %v3966 = vsel %vm3965, %v3963, %v3960
  %v3967 = vadd.f32 %v3903, 1.0
  %v3968 = vlog2.pop %v3967
  %v3969 = vmul.f32 %v3968, 0.6931472
  %v3970 = vmul.f32 -0.5, %v3903
  %v3971 = vadd.f32 %v3970, 1.0
  %v3972 = vmul.f32 %v3971, %v3903
  %v3973 = vand.u32 2147483647, %v3903
  %vm3974 = vcmp.lt.f32.partialorder %v3973, 0.0004427343
  %v3975 = vsel %vm3974, %v3972, %v3969
  %v3976 = vadd.f32 %v3905, 1.0
  %v3977 = vlog2.pop %v3976
  %v3978 = vmul.f32 %v3977, 0.6931472
  %v3979 = vmul.f32 -0.5, %v3905
  %v3980 = vadd.f32 %v3979, 1.0
  %v3981 = vmul.f32 %v3980, %v3905
  %v3982 = vand.u32 2147483647, %v3905
  %vm3983 = vcmp.lt.f32.partialorder %v3982, 0.0004427343
  %v3984 = vsel %vm3983, %v3981, %v3978
  %v3985 = vadd.f32 %v3907, 1.0
  %v3986 = vlog2.pop %v3985
  %v3987 = vmul.f32 %v3986, 0.6931472
  %v3988 = vmul.f32 -0.5, %v3907
  %v3989 = vadd.f32 %v3988, 1.0
  %v3990 = vmul.f32 %v3989, %v3907
  %v3991 = vand.u32 2147483647, %v3907
  %vm3992 = vcmp.lt.f32.partialorder %v3991, 0.0004427343
  %v3993 = vsel %vm3992, %v3990, %v3987
  %v3994 = vadd.f32 %v3909, 1.0
  %v3995 = vlog2.pop %v3994
  %v3996 = vmul.f32 %v3995, 0.6931472
  %v3997 = vmul.f32 -0.5, %v3909
  %v3998 = vadd.f32 %v3997, 1.0
  %v3999 = vmul.f32 %v3998, %v3909
  %v4000 = vand.u32 2147483647, %v3909
  %vm4001 = vcmp.lt.f32.partialorder %v4000, 0.0004427343
  %v4002 = vsel %vm4001, %v3999, %v3996
  %v4003 = vadd.f32 %v3911, 1.0
  %v4004 = vlog2.pop %v4003
  %v4005 = vmul.f32 %v4004, 0.6931472
  %v4006 = vmul.f32 -0.5, %v3911
  %v4007 = vadd.f32 %v4006, 1.0
  %v4008 = vmul.f32 %v4007, %v3911
  %v4009 = vand.u32 2147483647, %v3911
  %vm4010 = vcmp.lt.f32.partialorder %v4009, 0.0004427343
  %v4011 = vsel %vm4010, %v4008, %v4005
  %v4012 = vadd.f32 %v3913, 1.0
  %v4013 = vlog2.pop %v4012
  %v4014 = vmul.f32 %v4013, 0.6931472
  %v4015 = vmul.f32 -0.5, %v3913
  %v4016 = vadd.f32 %v4015, 1.0
  %v4017 = vmul.f32 %v4016, %v3913
  %v4018 = vand.u32 2147483647, %v3913
  %vm4019 = vcmp.lt.f32.partialorder %v4018, 0.0004427343
  %v4020 = vsel %vm4019, %v4017, %v4014
  %v4021 = vadd.f32 %v3915, 1.0
  %v4022 = vlog2.pop %v4021
  %v4023 = vmul.f32 %v4022, 0.6931472
  %v4024 = vmul.f32 -0.5, %v3915
  %v4025 = vadd.f32 %v4024, 1.0
  %v4026 = vmul.f32 %v4025, %v3915
  %v4027 = vand.u32 2147483647, %v3915
  %vm4028 = vcmp.lt.f32.partialorder %v4027, 0.0004427343
  %v4029 = vsel %vm4028, %v4026, %v4023
  %v4030 = vadd.f32 %v3917, 1.0
  %v4031 = vlog2.pop %v4030
  %v4032 = vmul.f32 %v4031, 0.6931472
  %v4033 = vmul.f32 -0.5, %v3917
  %v4034 = vadd.f32 %v4033, 1.0
  %v4035 = vmul.f32 %v4034, %v3917
  %v4036 = vand.u32 2147483647, %v3917
  %vm4037 = vcmp.lt.f32.partialorder %v4036, 0.0004427343
  %v4038 = vsel %vm4037, %v4035, %v4032
  %v4039 = vadd.f32 %v3919, 1.0
  %v4040 = vlog2.pop %v4039
  %v4041 = vmul.f32 %v4040, 0.6931472
  %v4042 = vmul.f32 -0.5, %v3919
  %v4043 = vadd.f32 %v4042, 1.0
  %v4044 = vmul.f32 %v4043, %v3919
  %v4045 = vand.u32 2147483647, %v3919
  %vm4046 = vcmp.lt.f32.partialorder %v4045, 0.0004427343
  %v4047 = vsel %vm4046, %v4044, %v4041
  %v4048 = vadd.f32 %v3921, 1.0
  %v4049 = vlog2.pop %v4048
  %v4050 = vmul.f32 %v4049, 0.6931472
  %v4051 = vmul.f32 -0.5, %v3921
  %v4052 = vadd.f32 %v4051, 1.0
  %v4053 = vmul.f32 %v4052, %v3921
  %v4054 = vand.u32 2147483647, %v3921
  %vm4055 = vcmp.lt.f32.partialorder %v4054, 0.0004427343
  %v4056 = vsel %vm4055, %v4053, %v4050
  %v4057 = vadd.f32 %v3847, %v3930
  %v4058 = vadd.f32 %v3848, %v3939
  %v4059 = vadd.f32 %v3849, %v3948
  %v4060 = vadd.f32 %v3850, %v3957
  %v4061 = vadd.f32 %v3851, %v3966
  %v4062 = vadd.f32 %v3852, %v3975
  %v4063 = vadd.f32 %v3853, %v3984
  %v4064 = vadd.f32 %v3854, %v3993
  %v4065 = vadd.f32 %v3855, %v4002
  %v4066 = vadd.f32 %v3856, %v4011
  %v4067 = vadd.f32 %v3857, %v4020
  %v4068 = vadd.f32 %v3858, %v4029
  %v4069 = vadd.f32 %v3859, %v4038
  %v4070 = vadd.f32 %v3860, %v4047
  %v4071 = vadd.f32 %v3861, %v4056
  %v4072 = vmul.f32 %v4057, %v3829
  %v4073 = vmul.f32 %v4058, %v3830
  %v4074 = vmul.f32 %v4059, %v3831
  %v4075 = vmul.f32 %v4060, %v3832
  %v4076 = vmul.f32 %v4061, %v3833
  %v4077 = vmul.f32 %v4062, %v3834
  %v4078 = vmul.f32 %v4063, %v3835
  %v4079 = vmul.f32 %v4064, %v3836
  %v4080 = vmul.f32 %v4065, %v3837
  %v4081 = vmul.f32 %v4066, %v3838
  %v4082 = vmul.f32 %v4067, %v3839
  %v4083 = vmul.f32 %v4068, %v3840
  %v4084 = vmul.f32 %v4069, %v3841
  %v4085 = vmul.f32 %v4070, %v3842
  %v4086 = vmul.f32 %v4071, %v3843
  %v4087 = vadd.f32 %v3799, %v4072
  %v4088 = vadd.f32 %v3800, %v4073
  %v4089 = vadd.f32 %v3801, %v4074
  %v4090 = vadd.f32 %v3802, %v4075
  %v4091 = vadd.f32 %v3803, %v4076
  %v4092 = vadd.f32 %v3804, %v4077
  %v4093 = vadd.f32 %v3805, %v4078
  %v4094 = vadd.f32 %v3806, %v4079
  %v4095 = vadd.f32 %v3807, %v4080
  %v4096 = vadd.f32 %v3808, %v4081
  %v4097 = vadd.f32 %v3809, %v4082
  %v4098 = vadd.f32 %v3810, %v4083
  %v4099 = vadd.f32 %v3811, %v4084
  %v4100 = vadd.f32 %v3812, %v4085
  %v4101 = vadd.f32 %v3813, %v4086
  %v4102 = vmax.f32 %v3845, 0.0
  %v4103 = vand.u32 2147483647, %v3845
  %v4104 = vsub.f32 0.0, %v4103
  %v4105 = vmul.f32 %v4104, 1.442695
  %v4106 = vpow.pop %v4105
  %v4107 = vadd.f32 %v4106, 1.0
  %v4108 = vlog2.pop %v4107
  %v4109 = vmul.f32 %v4108, 0.6931472
  %v4110 = vmul.f32 -0.5, %v4106
  %v4111 = vadd.f32 %v4110, 1.0
  %v4112 = vmul.f32 %v4111, %v4106
  %v4113 = vand.u32 2147483647, %v4106
  %vm4114 = vcmp.lt.f32.partialorder %v4113, 0.0004427343
  %v4115 = vsel %vm4114, %v4112, %v4109
  %v4116 = vadd.f32 %v4102, %v4115
  %v4117 = vmul.f32 %v4116, %v3846
  %v4118 = vadd.f32 %v3844, %v4117
  %vm4119 = vcmask 982016
  %v4121 = vsel %vm4119, %v3791, 0
  %4123 = vmatprep.subr.mxu0 0.0
  %4124 = vmatpush1.msra.mxu0 %v4087
  %4125 = vmatprep.subr.mxu0 0.0
  %4126 = vmatpush1.msra.mxu0 %v4088
  %4127 = vmatprep.subr.mxu0 0.0
  %4128 = vmatpush1.msra.mxu0 %v4089
  %4129 = vmatprep.subr.mxu0 0.0
  %4130 = vmatpush1.msra.mxu0 %v4090
  %4131 = vmatprep.subr.mxu0 0.0
  %4132 = vmatpush1.msra.mxu0 %v4091
  %4133 = vmatprep.subr.mxu0 0.0
  %4134 = vmatpush1.msra.mxu0 %v4092
  %4135 = vmatprep.subr.mxu0 0.0
  %4136 = vmatpush1.msra.mxu0 %v4093
  %4137 = vmatprep.subr.mxu0 0.0
  %4138 = vmatpush1.msra.mxu0 %v4094
  %4139 = vmatprep.subr.mxu0 0.0
  %4140 = vmatpush1.msra.mxu0 %v4095
  %4141 = vmatprep.subr.mxu0 0.0
  %4142 = vmatpush1.msra.mxu0 %v4096
  %4143 = vmatprep.subr.mxu0 0.0
  %4144 = vmatpush1.msra.mxu0 %v4097
  %4145 = vmatprep.subr.mxu0 0.0
  %4146 = vmatpush1.msra.mxu0 %v4098
  %4147 = vmatprep.subr.mxu0 0.0
  %4148 = vmatpush1.msra.mxu0 %v4099
  %4149 = vmatprep.subr.mxu0 0.0
  %4150 = vmatpush1.msra.mxu0 %v4100
  %4151 = vmatprep.subr.mxu0 0.0
  %4152 = vmatpush1.msra.mxu0 %v4101
  %4153 = vmatprep.subr.mxu0 0.0
  %4154 = vmatpush1.msra.mxu0 0.0
  %4155 = vmatprep.subr.mxu0 0.0
  %4156 = vmatpush1.msra.mxu0 0.0
  %4157 = vmatprep.subr.mxu0 0.0
  %4158 = vmatpush1.msra.mxu0 0.0
  %4159 = vmatprep.subr.mxu0 0.0
  %4160 = vmatpush1.msra.mxu0 0.0
  %4161 = vmatprep.subr.mxu0 0.0
  %4162 = vmatpush1.msra.mxu0 0.0
  %4163 = vmatprep.subr.mxu0 0.0
  %4164 = vmatpush1.msra.mxu0 0.0
  %4165 = vmatprep.subr.mxu0 0.0
  %4166 = vmatpush1.msra.mxu0 0.0
  %4167 = vmatprep.subr.mxu0 0.0
  %4168 = vmatpush1.msra.mxu0 0.0
  %4169 = vmatprep.subr.mxu0 0.0
  %4170 = vmatpush1.msra.mxu0 0.0
  %4171 = vmatprep.subr.mxu0 0.0
  %4172 = vmatpush1.msra.mxu0 0.0
  %4173 = vmatprep.subr.mxu0 0.0
  %4174 = vmatpush1.msra.mxu0 0.0
  %4175 = vmatprep.subr.mxu0 0.0
  %4176 = vmatpush1.msra.mxu0 0.0
  %4177 = vmatprep.subr.mxu0 0.0
  %4178 = vmatpush1.msra.mxu0 0.0
  %4179 = vmatprep.subr.mxu0 0.0
  %4180 = vmatpush1.msra.mxu0 0.0
  %4181 = vmatprep.subr.mxu0 0.0
  %4182 = vmatpush1.msra.mxu0 0.0
  %4183 = vmatprep.subr.mxu0 0.0
  %4184 = vmatpush1.msra.mxu0 0.0
  %4185 = vmatprep.subr.mxu0 0.0
  %4186 = vmatpush1.msra.mxu0 0.0
  %4187 = vmatprep.mubr.f32.mxu0 0.0
  %4188 = vmatmul.mubr.f32.gmra.mrb[0].mxu0 %v4121
  %v4189 = vpop.f32.mrb[0].mxu0
  %v4190 = vadd.f32 %v4118, %v4189
  %v4191 = vpop.f32.mrb[0].mxu0
  %4192 = vdwg.mxu0
  %v4193 = vmax.f32 %v4190, 0.0
  %v4194 = vld [vmem:[%s4] sm:$0xff]
  %v4195 = vld [vmem:[%s4 + $0x8] sm:$0xff]
  %v4196 = vld [vmem:[%s4 + $0x10] sm:$0xff]
  %v4197 = vld [vmem:[%s4 + $0x18] sm:$0xff]
  %v4198 = vld [vmem:[%s4 + $0x20] sm:$0xff]
  %v4199 = vld [vmem:[%s4 + $0x28] sm:$0xff]
  %v4200 = vld [vmem:[%s4 + $0x30] sm:$0xff]
  %v4201 = vld [vmem:[%s4 + $0x38] sm:$0xff]
  %v4202 = vld [vmem:[%s4 + $0x40] sm:$0xff]
  %v4203 = vld [vmem:[%s4 + $0x48] sm:$0xff]
  %v4204 = vld [vmem:[%s4 + $0x50] sm:$0xf]
  %v4205 = vld [vmem:[%s5] sm:$0xff]
  %v4206 = vld [vmem:[%s5 + $0x8] sm:$0xff]
  %v4207 = vld [vmem:[%s5 + $0x10] sm:$0xff]
  %v4208 = vld [vmem:[%s5 + $0x18] sm:$0xff]
  %v4209 = vld [vmem:[%s5 + $0x20] sm:$0xff]
  %v4210 = vld [vmem:[%s5 + $0x28] sm:$0xff]
  %v4211 = vld [vmem:[%s5 + $0x30] sm:$0xff]
  %v4212 = vld [vmem:[%s5 + $0x38] sm:$0xff]
  %v4213 = vld [vmem:[%s5 + $0x40] sm:$0xff]
  %v4214 = vld [vmem:[%s5 + $0x48] sm:$0xff]
  %v4215 = vld [vmem:[%s5 + $0x50] sm:$0xf]
  %v4216 = vld [vmem:[%s6] sm:$0xff]
  %v4217 = vld [vmem:[%s6 + $0x8] sm:$0xff]
  %v4218 = vld [vmem:[%s6 + $0x10] sm:$0xff]
  %v4219 = vld [vmem:[%s6 + $0x18] sm:$0xff]
  %v4220 = vld [vmem:[%s6 + $0x20] sm:$0xff]
  %v4221 = vld [vmem:[%s6 + $0x28] sm:$0xff]
  %v4222 = vld [vmem:[%s6 + $0x30] sm:$0xff]
  %v4223 = vld [vmem:[%s6 + $0x38] sm:$0xff]
  %v4224 = vld [vmem:[%s6 + $0x40] sm:$0xff]
  %v4225 = vld [vmem:[%s6 + $0x48] sm:$0xff]
  %v4226 = vld [vmem:[%s6 + $0x50] sm:$0xf]
  %v4227 = vld [vmem:[%s3 + $0x10] ss:$0 sm:$0xff]
  %v4228 = vld [vmem:[%s3 + $0x11] ss:$0 sm:$0xff]
  %v4229 = vld [vmem:[%s3 + $0x12] ss:$0 sm:$0xff]
  %v4230 = vmax.f32 %v4205, 0.0
  %v4231 = vmax.f32 %v4206, 0.0
  %v4232 = vmax.f32 %v4207, 0.0
  %v4233 = vmax.f32 %v4208, 0.0
  %v4234 = vmax.f32 %v4209, 0.0
  %v4235 = vmax.f32 %v4210, 0.0
  %v4236 = vmax.f32 %v4211, 0.0
  %v4237 = vmax.f32 %v4212, 0.0
  %v4238 = vmax.f32 %v4213, 0.0
  %v4239 = vmax.f32 %v4214, 0.0
  %v4240 = vmax.f32 %v4215, 0.0
  %v4241 = vand.u32 2147483647, %v4205
  %v4242 = vand.u32 2147483647, %v4206
  %v4243 = vand.u32 2147483647, %v4207
  %v4244 = vand.u32 2147483647, %v4208
  %v4245 = vand.u32 2147483647, %v4209
  %v4246 = vand.u32 2147483647, %v4210
  %v4247 = vand.u32 2147483647, %v4211
  %v4248 = vand.u32 2147483647, %v4212
  %v4249 = vand.u32 2147483647, %v4213
  %v4250 = vand.u32 2147483647, %v4214
  %v4251 = vand.u32 2147483647, %v4215
  %v4252 = vsub.f32 0.0, %v4241
  %v4253 = vsub.f32 0.0, %v4242
  %v4254 = vsub.f32 0.0, %v4243
  %v4255 = vsub.f32 0.0, %v4244
  %v4256 = vsub.f32 0.0, %v4245
  %v4257 = vsub.f32 0.0, %v4246
  %v4258 = vsub.f32 0.0, %v4247
  %v4259 = vsub.f32 0.0, %v4248
  %v4260 = vsub.f32 0.0, %v4249
  %v4261 = vsub.f32 0.0, %v4250
  %v4262 = vsub.f32 0.0, %v4251
  %v4263 = vmul.f32 %v4252, 1.442695
  %v4264 = vpow.pop %v4263
  %v4265 = vmul.f32 %v4253, 1.442695
  %v4266 = vpow.pop %v4265
  %v4267 = vmul.f32 %v4254, 1.442695
  %v4268 = vpow.pop %v4267
  %v4269 = vmul.f32 %v4255, 1.442695
  %v4270 = vpow.pop %v4269
  %v4271 = vmul.f32 %v4256, 1.442695
  %v4272 = vpow.pop %v4271
  %v4273 = vmul.f32 %v4257, 1.442695
  %v4274 = vpow.pop %v4273
  %v4275 = vmul.f32 %v4258, 1.442695
  %v4276 = vpow.pop %v4275
  %v4277 = vmul.f32 %v4259, 1.442695
  %v4278 = vpow.pop %v4277
  %v4279 = vmul.f32 %v4260, 1.442695
  %v4280 = vpow.pop %v4279
  %v4281 = vmul.f32 %v4261, 1.442695
  %v4282 = vpow.pop %v4281
  %v4283 = vmul.f32 %v4262, 1.442695
  %v4284 = vpow.pop %v4283
  %v4285 = vadd.f32 %v4264, 1.0
  %v4286 = vlog2.pop %v4285
  %v4287 = vmul.f32 %v4286, 0.6931472
  %v4288 = vmul.f32 -0.5, %v4264
  %v4289 = vadd.f32 %v4288, 1.0
  %v4290 = vmul.f32 %v4289, %v4264
  %v4291 = vand.u32 2147483647, %v4264
  %vm4292 = vcmp.lt.f32.partialorder %v4291, 0.0004427343
  %v4293 = vsel %vm4292, %v4290, %v4287
  %v4294 = vadd.f32 %v4266, 1.0
  %v4295 = vlog2.pop %v4294
  %v4296 = vmul.f32 %v4295, 0.6931472
  %v4297 = vmul.f32 -0.5, %v4266
  %v4298 = vadd.f32 %v4297, 1.0
  %v4299 = vmul.f32 %v4298, %v4266
  %v4300 = vand.u32 2147483647, %v4266
  %vm4301 = vcmp.lt.f32.partialorder %v4300, 0.0004427343
  %v4302 = vsel %vm4301, %v4299, %v4296
  %v4303 = vadd.f32 %v4268, 1.0
  %v4304 = vlog2.pop %v4303
  %v4305 = vmul.f32 %v4304, 0.6931472
  %v4306 = vmul.f32 -0.5, %v4268
  %v4307 = vadd.f32 %v4306, 1.0
  %v4308 = vmul.f32 %v4307, %v4268
  %v4309 = vand.u32 2147483647, %v4268
  %vm4310 = vcmp.lt.f32.partialorder %v4309, 0.0004427343
  %v4311 = vsel %vm4310, %v4308, %v4305
  %v4312 = vadd.f32 %v4270, 1.0
  %v4313 = vlog2.pop %v4312
  %v4314 = vmul.f32 %v4313, 0.6931472
  %v4315 = vmul.f32 -0.5, %v4270
  %v4316 = vadd.f32 %v4315, 1.0
  %v4317 = vmul.f32 %v4316, %v4270
  %v4318 = vand.u32 2147483647, %v4270
  %vm4319 = vcmp.lt.f32.partialorder %v4318, 0.0004427343
  %v4320 = vsel %vm4319, %v4317, %v4314
  %v4321 = vadd.f32 %v4272, 1.0
  %v4322 = vlog2.pop %v4321
  %v4323 = vmul.f32 %v4322, 0.6931472
  %v4324 = vmul.f32 -0.5, %v4272
  %v4325 = vadd.f32 %v4324, 1.0
  %v4326 = vmul.f32 %v4325, %v4272
  %v4327 = vand.u32 2147483647, %v4272
  %vm4328 = vcmp.lt.f32.partialorder %v4327, 0.0004427343
  %v4329 = vsel %vm4328, %v4326, %v4323
  %v4330 = vadd.f32 %v4274, 1.0
  %v4331 = vlog2.pop %v4330
  %v4332 = vmul.f32 %v4331, 0.6931472
  %v4333 = vmul.f32 -0.5, %v4274
  %v4334 = vadd.f32 %v4333, 1.0
  %v4335 = vmul.f32 %v4334, %v4274
  %v4336 = vand.u32 2147483647, %v4274
  %vm4337 = vcmp.lt.f32.partialorder %v4336, 0.0004427343
  %v4338 = vsel %vm4337, %v4335, %v4332
  %v4339 = vadd.f32 %v4276, 1.0
  %v4340 = vlog2.pop %v4339
  %v4341 = vmul.f32 %v4340, 0.6931472
  %v4342 = vmul.f32 -0.5, %v4276
  %v4343 = vadd.f32 %v4342, 1.0
  %v4344 = vmul.f32 %v4343, %v4276
  %v4345 = vand.u32 2147483647, %v4276
  %vm4346 = vcmp.lt.f32.partialorder %v4345, 0.0004427343
  %v4347 = vsel %vm4346, %v4344, %v4341
  %v4348 = vadd.f32 %v4278, 1.0
  %v4349 = vlog2.pop %v4348
  %v4350 = vmul.f32 %v4349, 0.6931472
  %v4351 = vmul.f32 -0.5, %v4278
  %v4352 = vadd.f32 %v4351, 1.0
  %v4353 = vmul.f32 %v4352, %v4278
  %v4354 = vand.u32 2147483647, %v4278
  %vm4355 = vcmp.lt.f32.partialorder %v4354, 0.0004427343
  %v4356 = vsel %vm4355, %v4353, %v4350
  %v4357 = vadd.f32 %v4280, 1.0
  %v4358 = vlog2.pop %v4357
  %v4359 = vmul.f32 %v4358, 0.6931472
  %v4360 = vmul.f32 -0.5, %v4280
  %v4361 = vadd.f32 %v4360, 1.0
  %v4362 = vmul.f32 %v4361, %v4280
  %v4363 = vand.u32 2147483647, %v4280
  %vm4364 = vcmp.lt.f32.partialorder %v4363, 0.0004427343
  %v4365 = vsel %vm4364, %v4362, %v4359
  %v4366 = vadd.f32 %v4282, 1.0
  %v4367 = vlog2.pop %v4366
  %v4368 = vmul.f32 %v4367, 0.6931472
  %v4369 = vmul.f32 -0.5, %v4282
  %v4370 = vadd.f32 %v4369, 1.0
  %v4371 = vmul.f32 %v4370, %v4282
  %v4372 = vand.u32 2147483647, %v4282
  %vm4373 = vcmp.lt.f32.partialorder %v4372, 0.0004427343
  %v4374 = vsel %vm4373, %v4371, %v4368
  %v4375 = vadd.f32 %v4284, 1.0
  %v4376 = vlog2.pop %v4375
  %v4377 = vmul.f32 %v4376, 0.6931472
  %v4378 = vmul.f32 -0.5, %v4284
  %v4379 = vadd.f32 %v4378, 1.0
  %v4380 = vmul.f32 %v4379, %v4284
  %v4381 = vand.u32 2147483647, %v4284
  %vm4382 = vcmp.lt.f32.partialorder %v4381, 0.0004427343
  %v4383 = vsel %vm4382, %v4380, %v4377
  %v4384 = vadd.f32 %v4230, %v4293
  %v4385 = vadd.f32 %v4231, %v4302
  %v4386 = vadd.f32 %v4232, %v4311
  %v4387 = vadd.f32 %v4233, %v4320
  %v4388 = vadd.f32 %v4234, %v4329
  %v4389 = vadd.f32 %v4235, %v4338
  %v4390 = vadd.f32 %v4236, %v4347
  %v4391 = vadd.f32 %v4237, %v4356
  %v4392 = vadd.f32 %v4238, %v4365
  %v4393 = vadd.f32 %v4239, %v4374
  %v4394 = vadd.f32 %v4240, %v4383
  %v4395 = vmul.f32 %v4384, %v4216
  %v4396 = vmul.f32 %v4385, %v4217
  %v4397 = vmul.f32 %v4386, %v4218
  %v4398 = vmul.f32 %v4387, %v4219
  %v4399 = vmul.f32 %v4388, %v4220
  %v4400 = vmul.f32 %v4389, %v4221
  %v4401 = vmul.f32 %v4390, %v4222
  %v4402 = vmul.f32 %v4391, %v4223
  %v4403 = vmul.f32 %v4392, %v4224
  %v4404 = vmul.f32 %v4393, %v4225
  %v4405 = vmul.f32 %v4394, %v4226
  %v4406 = vadd.f32 %v4194, %v4395
  %v4407 = vadd.f32 %v4195, %v4396
  %v4408 = vadd.f32 %v4196, %v4397
  %v4409 = vadd.f32 %v4197, %v4398
  %v4410 = vadd.f32 %v4198, %v4399
  %v4411 = vadd.f32 %v4199, %v4400
  %v4412 = vadd.f32 %v4200, %v4401
  %v4413 = vadd.f32 %v4201, %v4402
  %v4414 = vadd.f32 %v4202, %v4403
  %v4415 = vadd.f32 %v4203, %v4404
  %v4416 = vadd.f32 %v4204, %v4405
  %v4417 = vmax.f32 %v4228, 0.0
  %v4418 = vand.u32 2147483647, %v4228
  %v4419 = vsub.f32 0.0, %v4418
  %v4420 = vmul.f32 %v4419, 1.442695
  %v4421 = vpow.pop %v4420
  %v4422 = vadd.f32 %v4421, 1.0
  %v4423 = vlog2.pop %v4422
  %v4424 = vmul.f32 %v4423, 0.6931472
  %v4425 = vmul.f32 -0.5, %v4421
  %v4426 = vadd.f32 %v4425, 1.0
  %v4427 = vmul.f32 %v4426, %v4421
  %v4428 = vand.u32 2147483647, %v4421
  %vm4429 = vcmp.lt.f32.partialorder %v4428, 0.0004427343
  %v4430 = vsel %vm4429, %v4427, %v4424
  %v4431 = vadd.f32 %v4417, %v4430
  %v4432 = vmul.f32 %v4431, %v4229
  %v4433 = vadd.f32 %v4227, %v4432
  %vm4434 = vcmask 687104
  %v4436 = vsel %vm4434, %v4193, 0
  %vm4438 = vcmask 1043456
  %v4440 = vsel %vm4438, %v4416, 0
  %4442 = vmatprep.subr.mxu0 0.0
  %4443 = vmatpush1.msra.mxu0 %v4406
  %4444 = vmatprep.subr.mxu0 0.0
  %4445 = vmatpush1.msra.mxu0 %v4407
  %4446 = vmatprep.subr.mxu0 0.0
  %4447 = vmatpush1.msra.mxu0 %v4408
  %4448 = vmatprep.subr.mxu0 0.0
  %4449 = vmatpush1.msra.mxu0 %v4409
  %4450 = vmatprep.subr.mxu0 0.0
  %4451 = vmatpush1.msra.mxu0 %v4410
  %4452 = vmatprep.subr.mxu0 0.0
  %4453 = vmatpush1.msra.mxu0 %v4411
  %4454 = vmatprep.subr.mxu0 0.0
  %4455 = vmatpush1.msra.mxu0 %v4412
  %4456 = vmatprep.subr.mxu0 0.0
  %4457 = vmatpush1.msra.mxu0 %v4413
  %4458 = vmatprep.subr.mxu0 0.0
  %4459 = vmatpush1.msra.mxu0 %v4414
  %4460 = vmatprep.subr.mxu0 0.0
  %4461 = vmatpush1.msra.mxu0 %v4415
  %4462 = vmatprep.subr.mxu0 0.0
  %4463 = vmatpush1.msra.mxu0 %v4440
  %4464 = vmatprep.subr.mxu0 0.0
  %4465 = vmatpush1.msra.mxu0 0.0
  %4466 = vmatprep.subr.mxu0 0.0
  %4467 = vmatpush1.msra.mxu0 0.0
  %4468 = vmatprep.subr.mxu0 0.0
  %4469 = vmatpush1.msra.mxu0 0.0
  %4470 = vmatprep.subr.mxu0 0.0
  %4471 = vmatpush1.msra.mxu0 0.0
  %4472 = vmatprep.subr.mxu0 0.0
  %4473 = vmatpush1.msra.mxu0 0.0
  %4474 = vmatprep.subr.mxu0 0.0
  %4475 = vmatpush1.msra.mxu0 0.0
  %4476 = vmatprep.subr.mxu0 0.0
  %4477 = vmatpush1.msra.mxu0 0.0
  %4478 = vmatprep.subr.mxu0 0.0
  %4479 = vmatpush1.msra.mxu0 0.0
  %4480 = vmatprep.subr.mxu0 0.0
  %4481 = vmatpush1.msra.mxu0 0.0
  %4482 = vmatprep.subr.mxu0 0.0
  %4483 = vmatpush1.msra.mxu0 0.0
  %4484 = vmatprep.subr.mxu0 0.0
  %4485 = vmatpush1.msra.mxu0 0.0
  %4486 = vmatprep.subr.mxu0 0.0
  %4487 = vmatpush1.msra.mxu0 0.0
  %4488 = vmatprep.subr.mxu0 0.0
  %4489 = vmatpush1.msra.mxu0 0.0
  %4490 = vmatprep.subr.mxu0 0.0
  %4491 = vmatpush1.msra.mxu0 0.0
  %4492 = vmatprep.subr.mxu0 0.0
  %4493 = vmatpush1.msra.mxu0 0.0
  %4494 = vmatprep.subr.mxu0 0.0
  %4495 = vmatpush1.msra.mxu0 0.0
  %4496 = vmatprep.subr.mxu0 0.0
  %4497 = vmatpush1.msra.mxu0 0.0
  %4498 = vmatprep.subr.mxu0 0.0
  %4499 = vmatpush1.msra.mxu0 0.0
  %4500 = vmatprep.subr.mxu0 0.0
  %4501 = vmatpush1.msra.mxu0 0.0
  %4502 = vmatprep.subr.mxu0 0.0
  %4503 = vmatpush1.msra.mxu0 0.0
  %4504 = vmatprep.subr.mxu0 0.0
  %4505 = vmatpush1.msra.mxu0 0.0
  %4506 = vmatprep.mubr.f32.mxu0 0.0
  %4507 = vmatmul.mubr.f32.gmra.mrb[0].mxu0 %v4436
  %v4508 = vpop.f32.mrb[0].mxu0
  %v4509 = vadd.f32 %v4433, %v4508
  %v4510 = vpop.f32.mrb[0].mxu0
  %4511 = vdwg.mxu0
  %4512 = vst [vmem:[%s13] sm:$0xff] %v4509
  // Predicated region
  $region234: #{bbp_mnist_forward.1} parent=0 // pred_check
    _
  $region235: #{bbp_mnist_forward.1} parent=0 // pred_check_branch
    %4514 = sbr.rel (0) target = $region237
  $region236: #{bbp_mnist_forward.1} parent=0 // pred_region
    _
  $region237: #{bbp_mnist_forward.1} parent=0 // pred_fallthru
    _
  // Predicated region
  $region238: #{bbp_mnist_forward.1} parent=0 // pred_check
    _
  $region239: #{bbp_mnist_forward.1} parent=0 // pred_check_branch
    %4516 = sbr.rel (0) target = $region241
  $region240: #{bbp_mnist_forward.1} parent=0 // pred_region
    _
  $region241: #{bbp_mnist_forward.1} parent=0 // pred_fallthru
    _
  %4517 = vsyncmov [#allocation8]
  %s4518 = vpop.sfrf %4517
  %p4519 = scmp.eq.s32.totalorder %s4518, 0
  %p4520 = pneg %p4519
  %4522 = shalt.err (%p4520)
  %s4523 = scalar_lea.sflag [#allocation8], 1
  %4524 = vsyncmov %s4523
  %s4525 = vpop.sfrf %4524
  %p4526 = scmp.eq.s32.totalorder %s4525, 0
  %p4527 = pneg %p4526
  %4529 = shalt.err (%p4527)
  %s4530 = scalar_lea.sflag [#allocation8], 2
  %4531 = vsyncmov %s4530
  %s4532 = vpop.sfrf %4531
  %p4533 = scmp.eq.s32.totalorder %s4532, 0
  %p4534 = pneg %p4533
  %4536 = shalt.err (%p4534)
  %s4537 = scalar_lea.sflag [#allocation8], 3
  %4538 = vsyncmov %s4537
  %s4539 = vpop.sfrf %4538
  %p4540 = scmp.eq.s32.totalorder %s4539, 0
  %p4541 = pneg %p4540
  %4543 = shalt.err (%p4541)
  %s4544 = scalar_lea.sflag [#allocation8], 4
  %4545 = vsyncmov %s4544
  %s4546 = vpop.sfrf %4545
  %p4547 = scmp.eq.s32.totalorder %s4546, 0
  %p4548 = pneg %p4547
  %4550 = shalt.err (%p4548)
  %s4551 = scalar_lea.sflag [#allocation8], 5
  %4552 = vsyncmov %s4551
  %s4553 = vpop.sfrf %4552
  %p4554 = scmp.eq.s32.totalorder %s4553, 0
  %p4555 = pneg %p4554
  %4557 = shalt.err (%p4555)

</llo_original>
